<compile_context>
chip_gen: v6e
topology: v6e:2x2x1
jax: 0.10.0
libtpu: 0.0.40
codegen_flags: <defaults>
</compile_context>

<pallas_src>
import jax
import jax.numpy as jnp
from jax import lax
from jax.experimental import pallas as pl
from jax.experimental.pallas import tpu as pltpu

LANE = 128
SUBLANE = 8


def _round_up(n, m):
    return ((n + m - 1) // m) * m


def make_lstm_kernel(num_layers, T, Bp, Hp):
    """All dims are padded: Bp multiple of 8 (sublanes), Hp multiple of 128 (lanes)."""
    G = 4 * Hp

    def kernel(*refs):
        x_ref = refs[0]                                   # (T, Bp, Dp)
        layer_refs = refs[1:1 + 3 * num_layers]           # (w_ih_t, w_hh_t, b) per layer
        fc_w_ref = refs[1 + 3 * num_layers]               # (Hp, Op)
        fc_b_ref = refs[2 + 3 * num_layers]               # (1, Op)
        out_ref = refs[3 + 3 * num_layers]                # (Bp, Op)
        seq_buf = refs[4 + 3 * num_layers]                # VMEM scratch (T, Bp, Hp)
        gates_buf = refs[5 + 3 * num_layers]              # VMEM scratch (T, Bp, 4*Hp)

        h_final = None
        for layer in range(num_layers):
            w_ih_ref, w_hh_ref, b_ref = layer_refs[3 * layer:3 * layer + 3]
            last_layer = (layer == num_layers - 1)

            # Layer input: x for layer 0, previous layer's hidden sequence otherwise.
            inp = x_ref[...] if layer == 0 else seq_buf[...]       # (T, Bp, d_in_p)
            d_in_p = inp.shape[-1]

            # Input-to-hidden projection for all timesteps at once (MXU).
            # Bp == 8 makes the (T,Bp,d)<->(T*Bp,d) reshapes layout no-ops.
            gx = jnp.dot(inp.reshape(T * Bp, d_in_p), w_ih_ref[...],
                         preferred_element_type=jnp.float32)
            gx = gx + b_ref[...]                                   # (T*Bp, 4Hp) + (1, 4Hp)
            gates_buf[...] = gx.reshape(T, Bp, G)

            w_hh = w_hh_ref[...]                                   # (Hp, 4Hp)

            def step(t, carry, _store=not last_layer):
                h, c = carry
                gates = gates_buf[t] + jnp.dot(
                    h, w_hh, preferred_element_type=jnp.float32)   # (Bp, 4Hp)
                # PyTorch gate ordering: [i | f | g | o]; Hp == 128 so every slice
                # below is a whole-vreg, lane-aligned slice (no lane shuffles).
                i = jax.nn.sigmoid(gates[:, 0:Hp])
                f = jax.nn.sigmoid(gates[:, Hp:2 * Hp])
                g = jnp.tanh(gates[:, 2 * Hp:3 * Hp])
                o = jax.nn.sigmoid(gates[:, 3 * Hp:4 * Hp])
                c = f * c + i * g
                h = o * jnp.tanh(c)
                if _store:                      # last layer: keep h in the carry only
                    seq_buf[t] = h
                return h, c

            h0 = jnp.zeros((Bp, Hp), jnp.float32)
            c0 = jnp.zeros((Bp, Hp), jnp.float32)
            # T is tiny and static: fully unroll so the scheduler overlaps
            # MXU / EUP / stores across steps of this latency-bound recurrence.
            h_fin, _ = lax.fori_loop(0, T, step, (h0, c0), unroll=True)
            if last_layer:
                h_final = h_fin

        # F.relu(out) then out[:, -1, :]  ==  relu(last hidden state of last layer)
        h_last = jnp.maximum(h_final, 0.0)                         # (Bp, Hp)
        logits = jnp.dot(h_last, fc_w_ref[...],
                         preferred_element_type=jnp.float32) + fc_b_ref[...]
        out_ref[...] = logits.astype(out_ref.dtype)                # lane-dense (Bp, Op)

    return kernel


def _pack_gate_weight(w, H, Hp, d_in, Dp):
    """PyTorch (4H, d_in) [i|f|g|o] -> padded transposed (Dp, 4*Hp), each gate
    occupying a lane-aligned column block k*Hp:(k+1)*Hp (zeros elsewhere)."""
    w4 = w.reshape(4, H, d_in)
    w4 = jnp.pad(w4, ((0, 0), (0, Hp - H), (0, Dp - d_in)))
    return jnp.transpose(w4, (2, 0, 1)).reshape(Dp, 4 * Hp)


def _pack_gate_bias(b_ih, b_hh, H, Hp):
    b = (b_ih + b_hh).reshape(4, H)
    b = jnp.pad(b, ((0, 0), (0, Hp - H)))
    return b.reshape(1, 4 * Hp)


def taxi_driver_classifier_forward(x, params):
    """x: (B, T, D_in) float32 -> logits (B, output_dim) float32."""
    B, T, D_in = x.shape
    lstm_layers = params["lstm"]
    num_layers = len(lstm_layers)
    H = lstm_layers[0]["w_hh"].shape[1]
    O = params["fc_w"].shape[0]

    Bp = _round_up(max(B, SUBLANE), SUBLANE)    # batch -> full sublane tile
    Hp = _round_up(max(H, LANE), LANE)          # hidden -> full lane tile (per gate)
    Dp = _round_up(max(D_in, LANE), LANE)
    Op = _round_up(max(O, LANE), LANE)          # lane-dense output store

    x_tm = jnp.transpose(x.astype(jnp.float32), (1, 0, 2))         # (T, B, D_in)
    x_tm = jnp.pad(x_tm, ((0, 0), (0, Bp - B), (0, Dp - D_in)))    # (T, Bp, Dp)

    flat_args = [x_tm]
    for l, lp in enumerate(lstm_layers):
        d_in = D_in if l == 0 else H
        d_in_p = Dp if l == 0 else Hp
        flat_args.append(_pack_gate_weight(lp["w_ih"], H, Hp, d_in, d_in_p))
        flat_args.append(_pack_gate_weight(lp["w_hh"], H, Hp, H, Hp))
        flat_args.append(_pack_gate_bias(lp["b_ih"], lp["b_hh"], H, Hp))
    fc_w_t = jnp.pad(params["fc_w"].T, ((0, Hp - H), (0, Op - O)))  # (Hp, Op)
    fc_b = jnp.pad(params["fc_b"], (0, Op - O))[None, :]            # (1, Op)
    flat_args += [fc_w_t, fc_b]

    kernel = make_lstm_kernel(num_layers, T, Bp, Hp)
    out_p = pl.pallas_call(
        kernel,
        out_shape=jax.ShapeDtypeStruct((Bp, Op), jnp.float32),
        in_specs=[pl.BlockSpec(memory_space=pltpu.MemorySpace.VMEM)] * len(flat_args),
        out_specs=pl.BlockSpec(memory_space=pltpu.MemorySpace.VMEM),
        scratch_shapes=[
            pltpu.VMEM((T, Bp, Hp), jnp.float32),        # per-layer hidden sequence
            pltpu.VMEM((T, Bp, 4 * Hp), jnp.float32),    # precomputed x-projected gates
        ],
    )(*flat_args)
    return out_p[:B, :O]


def init_params(key, input_dim, hidden_dim, output_dim, num_layers):
    """Deterministic synthetic parameters, PyTorch-style uniform(-1/sqrt(H), 1/sqrt(H))."""
    scale = 1.0 / float(hidden_dim) ** 0.5
    layers = []
    for l in range(num_layers):
        d_in = input_dim if l == 0 else hidden_dim
        key, k1, k2, k3, k4 = jax.random.split(key, 5)
        layers.append({
            "w_ih": jax.random.uniform(k1, (4 * hidden_dim, d_in), jnp.float32, -scale, scale),
            "w_hh": jax.random.uniform(k2, (4 * hidden_dim, hidden_dim), jnp.float32, -scale, scale),
            "b_ih": jax.random.uniform(k3, (4 * hidden_dim,), jnp.float32, -scale, scale),
            "b_hh": jax.random.uniform(k4, (4 * hidden_dim,), jnp.float32, -scale, scale),
        })
    key, k5, k6 = jax.random.split(key, 3)
    fc_w = jax.random.uniform(k5, (output_dim, hidden_dim), jnp.float32, -scale, scale)
    fc_b = jax.random.uniform(k6, (output_dim,), jnp.float32, -scale, scale)
    return {"lstm": layers, "fc_w": fc_w, "fc_b": fc_b}


def reference_forward(x, params):
    """Pure-JAX reference replicating the PyTorch forward semantics (f32)."""
    B, T, _ = x.shape
    seq = x.astype(jnp.float32)
    for lp in params["lstm"]:
        H = lp["w_hh"].shape[1]
        h = jnp.zeros((B, H), jnp.float32)
        c = jnp.zeros((B, H), jnp.float32)
        outs = []
        for t in range(T):
            gates = (seq[:, t, :] @ lp["w_ih"].T + h @ lp["w_hh"].T
                     + lp["b_ih"] + lp["b_hh"])
            i = jax.nn.sigmoid(gates[:, :H])
            f = jax.nn.sigmoid(gates[:, H:2 * H])
            g = jnp.tanh(gates[:, 2 * H:3 * H])
            o = jax.nn.sigmoid(gates[:, 3 * H:])
            c = f * c + i * g
            h = o * jnp.tanh(c)
            outs.append(h)
        seq = jnp.stack(outs, axis=1)
    out = jnp.maximum(seq, 0.0)[:, -1, :]
    return out @ params["fc_w"].T + params["fc_b"]


if __name__ == "__main__":
    INPUT_DIM, HIDDEN_DIM, OUTPUT_DIM, NUM_LAYERS = 4, 32, 5, 2
    # nn.Dropout is constructed in __init__ but never applied in forward(); no-op here.
    B, T = 2, 8

    key = jax.random.PRNGKey(0)
    key, xk = jax.random.split(key)
    x = jax.random.normal(xk, (B, T, INPUT_DIM), jnp.float32)
    params = init_params(key, INPUT_DIM, HIDDEN_DIM, OUTPUT_DIM, NUM_LAYERS)

    out = jax.block_until_ready(taxi_driver_classifier_forward(x, params))
    ref = reference_forward(x, params)

    assert out.shape == (B, OUTPUT_DIM)
    assert jnp.allclose(out, ref, atol=1e-3, rtol=1e-3), (out, ref)
    print("KERNEL_OK")
</pallas_src>

<mosaic_0001>
module attributes {stable_mosaic.version = 11 : i64} {
  func.func @kernel(%arg0: memref<8x8x128xf32, #tpu.memory_space<vmem>>, %arg1: memref<128x512xf32, #tpu.memory_space<vmem>>, %arg2: memref<128x512xf32, #tpu.memory_space<vmem>>, %arg3: memref<1x512xf32, #tpu.memory_space<vmem>>, %arg4: memref<128x512xf32, #tpu.memory_space<vmem>>, %arg5: memref<128x512xf32, #tpu.memory_space<vmem>>, %arg6: memref<1x512xf32, #tpu.memory_space<vmem>>, %arg7: memref<128x128xf32, #tpu.memory_space<vmem>>, %arg8: memref<1x128xf32, #tpu.memory_space<vmem>>, %arg9: memref<8x128xf32, #tpu.memory_space<vmem>>, %arg10: memref<8x8x128xf32, #tpu.memory_space<vmem>>, %arg11: memref<8x8x512xf32, #tpu.memory_space<vmem>>) attributes {dimension_semantics = [], scalar_prefetch = 0 : i64, scratch_operands = 2 : i64, tpu.core_type = #tpu.core_type<tc>} {
    %c0 = arith.constant 0 : index
    %c0_0 = arith.constant 0 : index
    %c0_1 = arith.constant 0 : index
    %0 = vector.load %arg0[%c0, %c0_0, %c0_1] : memref<8x8x128xf32, #tpu.memory_space<vmem>>, vector<8x8x128xf32>
    %1 = vector.shape_cast %0 : vector<8x8x128xf32> to vector<64x128xf32>
    %c0_2 = arith.constant 0 : index
    %c0_3 = arith.constant 0 : index
    %2 = vector.load %arg1[%c0_2, %c0_3] : memref<128x512xf32, #tpu.memory_space<vmem>>, vector<128x512xf32>
    %cst = arith.constant dense<0.000000e+00> : vector<64x512xf32>
    %3 = tpu.matmul %1, %2, %cst {dimension_numbers = #tpu.dot_dimension_numbers<[1], [0], [0], [1], [0, 0, 1, 1], [], []>} : vector<64x128xf32>, vector<128x512xf32>, vector<64x512xf32> -> vector<64x512xf32>
    %c0_4 = arith.constant 0 : index
    %c0_5 = arith.constant 0 : index
    %4 = vector.load %arg3[%c0_4, %c0_5] : memref<1x512xf32, #tpu.memory_space<vmem>>, vector<1x512xf32>
    %5 = vector.broadcast %4 : vector<1x512xf32> to vector<64x512xf32>
    %6 = arith.addf %3, %5 : vector<64x512xf32>
    %7 = vector.shape_cast %6 : vector<64x512xf32> to vector<8x8x512xf32>
    %c0_6 = arith.constant 0 : index
    %c0_7 = arith.constant 0 : index
    %c0_8 = arith.constant 0 : index
    %8 = vector.load %arg11[%c0_6, %c0_7, %c0_8] : memref<8x8x512xf32, #tpu.memory_space<vmem>>, vector<8x8x512xf32>
    tpu.vector_store %arg11[%c0_6, %c0_7, %c0_8], %7 {strides = array<i32>} : memref<8x8x512xf32, #tpu.memory_space<vmem>>, vector<8x8x512xf32>,
    %c0_9 = arith.constant 0 : index
    %c0_10 = arith.constant 0 : index
    %9 = vector.load %arg2[%c0_9, %c0_10] : memref<128x512xf32, #tpu.memory_space<vmem>>, vector<128x512xf32>
    %cst_11 = arith.constant 0.000000e+00 : f32
    %10 = vector.broadcast %cst_11 : f32 to vector<8x128xf32>
    %cst_12 = arith.constant 0.000000e+00 : f32
    %11 = vector.broadcast %cst_12 : f32 to vector<8x128xf32>
    %c0_i32 = arith.constant 0 : i32
    %12 = arith.index_cast %c0_i32 : i32 to index
    %c0_13 = arith.constant 0 : index
    %c0_14 = arith.constant 0 : index
    %13 = vector.load %arg11[%12, %c0_13, %c0_14] : memref<8x8x512xf32, #tpu.memory_space<vmem>>, vector<1x8x512xf32>
    %14 = vector.shape_cast %13 : vector<1x8x512xf32> to vector<8x512xf32>
    %cst_15 = arith.constant dense<0.000000e+00> : vector<8x512xf32>
    %15 = tpu.matmul %10, %9, %cst_15 {dimension_numbers = #tpu.dot_dimension_numbers<[1], [0], [0], [1], [0, 0, 1, 1], [], []>} : vector<8x128xf32>, vector<128x512xf32>, vector<8x512xf32> -> vector<8x512xf32>
    %16 = arith.addf %14, %15 : vector<8x512xf32>
    %17 = vector.extract_strided_slice %16 {offsets = [0, 0], sizes = [8, 128], strides = [1, 1]} : vector<8x512xf32> to vector<8x128xf32>
    %18 = arith.negf %17 : vector<8x128xf32>
    %19 = math.exp %18 : vector<8x128xf32>
    %cst_16 = arith.constant 1.000000e+00 : f32
    %20 = vector.broadcast %cst_16 : f32 to vector<8x128xf32>
    %21 = arith.addf %20, %19 : vector<8x128xf32>
    %22 = arith.divf %20, %21 : vector<8x128xf32>
    %23 = vector.extract_strided_slice %16 {offsets = [0, 128], sizes = [8, 128], strides = [1, 1]} : vector<8x512xf32> to vector<8x128xf32>
    %24 = arith.negf %23 : vector<8x128xf32>
    %25 = math.exp %24 : vector<8x128xf32>
    %cst_17 = arith.constant 1.000000e+00 : f32
    %26 = vector.broadcast %cst_17 : f32 to vector<8x128xf32>
    %27 = arith.addf %26, %25 : vector<8x128xf32>
    %28 = arith.divf %26, %27 : vector<8x128xf32>
    %29 = vector.extract_strided_slice %16 {offsets = [0, 256], sizes = [8, 128], strides = [1, 1]} : vector<8x512xf32> to vector<8x128xf32>
    %30 = math.tanh %29 : vector<8x128xf32>
    %31 = vector.extract_strided_slice %16 {offsets = [0, 384], sizes = [8, 128], strides = [1, 1]} : vector<8x512xf32> to vector<8x128xf32>
    %32 = arith.negf %31 : vector<8x128xf32>
    %33 = math.exp %32 : vector<8x128xf32>
    %cst_18 = arith.constant 1.000000e+00 : f32
    %34 = vector.broadcast %cst_18 : f32 to vector<8x128xf32>
    %35 = arith.addf %34, %33 : vector<8x128xf32>
    %36 = arith.divf %34, %35 : vector<8x128xf32>
    %37 = arith.mulf %28, %11 : vector<8x128xf32>
    %38 = arith.mulf %22, %30 : vector<8x128xf32>
    %39 = arith.addf %37, %38 : vector<8x128xf32>
    %40 = math.tanh %39 : vector<8x128xf32>
    %41 = arith.mulf %36, %40 : vector<8x128xf32>
    %42 = arith.index_cast %c0_i32 : i32 to index
    %c0_19 = arith.constant 0 : index
    %c0_20 = arith.constant 0 : index
    %43 = vector.load %arg10[%42, %c0_19, %c0_20] : memref<8x8x128xf32, #tpu.memory_space<vmem>>, vector<1x8x128xf32>
    %44 = vector.shape_cast %43 : vector<1x8x128xf32> to vector<8x128xf32>
    %45 = vector.shape_cast %41 : vector<8x128xf32> to vector<1x8x128xf32>
    tpu.vector_store %arg10[%42, %c0_19, %c0_20], %45 {strides = array<i32>} : memref<8x8x128xf32, #tpu.memory_space<vmem>>, vector<1x8x128xf32>,
    %c1_i32 = arith.constant 1 : i32
    %46 = arith.index_cast %c1_i32 : i32 to index
    %c0_21 = arith.constant 0 : index
    %c0_22 = arith.constant 0 : index
    %47 = vector.load %arg11[%46, %c0_21, %c0_22] : memref<8x8x512xf32, #tpu.memory_space<vmem>>, vector<1x8x512xf32>
    %48 = vector.shape_cast %47 : vector<1x8x512xf32> to vector<8x512xf32>
    %cst_23 = arith.constant dense<0.000000e+00> : vector<8x512xf32>
    %49 = tpu.matmul %41, %9, %cst_23 {dimension_numbers = #tpu.dot_dimension_numbers<[1], [0], [0], [1], [0, 0, 1, 1], [], []>} : vector<8x128xf32>, vector<128x512xf32>, vector<8x512xf32> -> vector<8x512xf32>
    %50 = arith.addf %48, %49 : vector<8x512xf32>
    %51 = vector.extract_strided_slice %50 {offsets = [0, 0], sizes = [8, 128], strides = [1, 1]} : vector<8x512xf32> to vector<8x128xf32>
    %52 = arith.negf %51 : vector<8x128xf32>
    %53 = math.exp %52 : vector<8x128xf32>
    %cst_24 = arith.constant 1.000000e+00 : f32
    %54 = vector.broadcast %cst_24 : f32 to vector<8x128xf32>
    %55 = arith.addf %54, %53 : vector<8x128xf32>
    %56 = arith.divf %54, %55 : vector<8x128xf32>
    %57 = vector.extract_strided_slice %50 {offsets = [0, 128], sizes = [8, 128], strides = [1, 1]} : vector<8x512xf32> to vector<8x128xf32>
    %58 = arith.negf %57 : vector<8x128xf32>
    %59 = math.exp %58 : vector<8x128xf32>
    %cst_25 = arith.constant 1.000000e+00 : f32
    %60 = vector.broadcast %cst_25 : f32 to vector<8x128xf32>
    %61 = arith.addf %60, %59 : vector<8x128xf32>
    %62 = arith.divf %60, %61 : vector<8x128xf32>
    %63 = vector.extract_strided_slice %50 {offsets = [0, 256], sizes = [8, 128], strides = [1, 1]} : vector<8x512xf32> to vector<8x128xf32>
    %64 = math.tanh %63 : vector<8x128xf32>
    %65 = vector.extract_strided_slice %50 {offsets = [0, 384], sizes = [8, 128], strides = [1, 1]} : vector<8x512xf32> to vector<8x128xf32>
    %66 = arith.negf %65 : vector<8x128xf32>
    %67 = math.exp %66 : vector<8x128xf32>
    %cst_26 = arith.constant 1.000000e+00 : f32
    %68 = vector.broadcast %cst_26 : f32 to vector<8x128xf32>
    %69 = arith.addf %68, %67 : vector<8x128xf32>
    %70 = arith.divf %68, %69 : vector<8x128xf32>
    %71 = arith.mulf %62, %39 : vector<8x128xf32>
    %72 = arith.mulf %56, %64 : vector<8x128xf32>
    %73 = arith.addf %71, %72 : vector<8x128xf32>
    %74 = math.tanh %73 : vector<8x128xf32>
    %75 = arith.mulf %70, %74 : vector<8x128xf32>
    %76 = arith.index_cast %c1_i32 : i32 to index
    %c0_27 = arith.constant 0 : index
    %c0_28 = arith.constant 0 : index
    %77 = vector.load %arg10[%76, %c0_27, %c0_28] : memref<8x8x128xf32, #tpu.memory_space<vmem>>, vector<1x8x128xf32>
    %78 = vector.shape_cast %77 : vector<1x8x128xf32> to vector<8x128xf32>
    %79 = vector.shape_cast %75 : vector<8x128xf32> to vector<1x8x128xf32>
    tpu.vector_store %arg10[%76, %c0_27, %c0_28], %79 {strides = array<i32>} : memref<8x8x128xf32, #tpu.memory_space<vmem>>, vector<1x8x128xf32>,
    %c2_i32 = arith.constant 2 : i32
    %80 = arith.index_cast %c2_i32 : i32 to index
    %c0_29 = arith.constant 0 : index
    %c0_30 = arith.constant 0 : index
    %81 = vector.load %arg11[%80, %c0_29, %c0_30] : memref<8x8x512xf32, #tpu.memory_space<vmem>>, vector<1x8x512xf32>
    %82 = vector.shape_cast %81 : vector<1x8x512xf32> to vector<8x512xf32>
    %cst_31 = arith.constant dense<0.000000e+00> : vector<8x512xf32>
    %83 = tpu.matmul %75, %9, %cst_31 {dimension_numbers = #tpu.dot_dimension_numbers<[1], [0], [0], [1], [0, 0, 1, 1], [], []>} : vector<8x128xf32>, vector<128x512xf32>, vector<8x512xf32> -> vector<8x512xf32>
    %84 = arith.addf %82, %83 : vector<8x512xf32>
    %85 = vector.extract_strided_slice %84 {offsets = [0, 0], sizes = [8, 128], strides = [1, 1]} : vector<8x512xf32> to vector<8x128xf32>
    %86 = arith.negf %85 : vector<8x128xf32>
    %87 = math.exp %86 : vector<8x128xf32>
    %cst_32 = arith.constant 1.000000e+00 : f32
    %88 = vector.broadcast %cst_32 : f32 to vector<8x128xf32>
    %89 = arith.addf %88, %87 : vector<8x128xf32>
    %90 = arith.divf %88, %89 : vector<8x128xf32>
    %91 = vector.extract_strided_slice %84 {offsets = [0, 128], sizes = [8, 128], strides = [1, 1]} : vector<8x512xf32> to vector<8x128xf32>
    %92 = arith.negf %91 : vector<8x128xf32>
    %93 = math.exp %92 : vector<8x128xf32>
    %cst_33 = arith.constant 1.000000e+00 : f32
    %94 = vector.broadcast %cst_33 : f32 to vector<8x128xf32>
    %95 = arith.addf %94, %93 : vector<8x128xf32>
    %96 = arith.divf %94, %95 : vector<8x128xf32>
    %97 = vector.extract_strided_slice %84 {offsets = [0, 256], sizes = [8, 128], strides = [1, 1]} : vector<8x512xf32> to vector<8x128xf32>
    %98 = math.tanh %97 : vector<8x128xf32>
    %99 = vector.extract_strided_slice %84 {offsets = [0, 384], sizes = [8, 128], strides = [1, 1]} : vector<8x512xf32> to vector<8x128xf32>
    %100 = arith.negf %99 : vector<8x128xf32>
    %101 = math.exp %100 : vector<8x128xf32>
    %cst_34 = arith.constant 1.000000e+00 : f32
    %102 = vector.broadcast %cst_34 : f32 to vector<8x128xf32>
    %103 = arith.addf %102, %101 : vector<8x128xf32>
    %104 = arith.divf %102, %103 : vector<8x128xf32>
    %105 = arith.mulf %96, %73 : vector<8x128xf32>
    %106 = arith.mulf %90, %98 : vector<8x128xf32>
    %107 = arith.addf %105, %106 : vector<8x128xf32>
    %108 = math.tanh %107 : vector<8x128xf32>
    %109 = arith.mulf %104, %108 : vector<8x128xf32>
    %110 = arith.index_cast %c2_i32 : i32 to index
    %c0_35 = arith.constant 0 : index
    %c0_36 = arith.constant 0 : index
    %111 = vector.load %arg10[%110, %c0_35, %c0_36] : memref<8x8x128xf32, #tpu.memory_space<vmem>>, vector<1x8x128xf32>
    %112 = vector.shape_cast %111 : vector<1x8x128xf32> to vector<8x128xf32>
    %113 = vector.shape_cast %109 : vector<8x128xf32> to vector<1x8x128xf32>
    tpu.vector_store %arg10[%110, %c0_35, %c0_36], %113 {strides = array<i32>} : memref<8x8x128xf32, #tpu.memory_space<vmem>>, vector<1x8x128xf32>,
    %c3_i32 = arith.constant 3 : i32
    %114 = arith.index_cast %c3_i32 : i32 to index
    %c0_37 = arith.constant 0 : index
    %c0_38 = arith.constant 0 : index
    %115 = vector.load %arg11[%114, %c0_37, %c0_38] : memref<8x8x512xf32, #tpu.memory_space<vmem>>, vector<1x8x512xf32>
    %116 = vector.shape_cast %115 : vector<1x8x512xf32> to vector<8x512xf32>
    %cst_39 = arith.constant dense<0.000000e+00> : vector<8x512xf32>
    %117 = tpu.matmul %109, %9, %cst_39 {dimension_numbers = #tpu.dot_dimension_numbers<[1], [0], [0], [1], [0, 0, 1, 1], [], []>} : vector<8x128xf32>, vector<128x512xf32>, vector<8x512xf32> -> vector<8x512xf32>
    %118 = arith.addf %116, %117 : vector<8x512xf32>
    %119 = vector.extract_strided_slice %118 {offsets = [0, 0], sizes = [8, 128], strides = [1, 1]} : vector<8x512xf32> to vector<8x128xf32>
    %120 = arith.negf %119 : vector<8x128xf32>
    %121 = math.exp %120 : vector<8x128xf32>
    %cst_40 = arith.constant 1.000000e+00 : f32
    %122 = vector.broadcast %cst_40 : f32 to vector<8x128xf32>
    %123 = arith.addf %122, %121 : vector<8x128xf32>
    %124 = arith.divf %122, %123 : vector<8x128xf32>
    %125 = vector.extract_strided_slice %118 {offsets = [0, 128], sizes = [8, 128], strides = [1, 1]} : vector<8x512xf32> to vector<8x128xf32>
    %126 = arith.negf %125 : vector<8x128xf32>
    %127 = math.exp %126 : vector<8x128xf32>
    %cst_41 = arith.constant 1.000000e+00 : f32
    %128 = vector.broadcast %cst_41 : f32 to vector<8x128xf32>
    %129 = arith.addf %128, %127 : vector<8x128xf32>
    %130 = arith.divf %128, %129 : vector<8x128xf32>
    %131 = vector.extract_strided_slice %118 {offsets = [0, 256], sizes = [8, 128], strides = [1, 1]} : vector<8x512xf32> to vector<8x128xf32>
    %132 = math.tanh %131 : vector<8x128xf32>
    %133 = vector.extract_strided_slice %118 {offsets = [0, 384], sizes = [8, 128], strides = [1, 1]} : vector<8x512xf32> to vector<8x128xf32>
    %134 = arith.negf %133 : vector<8x128xf32>
    %135 = math.exp %134 : vector<8x128xf32>
    %cst_42 = arith.constant 1.000000e+00 : f32
    %136 = vector.broadcast %cst_42 : f32 to vector<8x128xf32>
    %137 = arith.addf %136, %135 : vector<8x128xf32>
    %138 = arith.divf %136, %137 : vector<8x128xf32>
    %139 = arith.mulf %130, %107 : vector<8x128xf32>
    %140 = arith.mulf %124, %132 : vector<8x128xf32>
    %141 = arith.addf %139, %140 : vector<8x128xf32>
    %142 = math.tanh %141 : vector<8x128xf32>
    %143 = arith.mulf %138, %142 : vector<8x128xf32>
    %144 = arith.index_cast %c3_i32 : i32 to index
    %c0_43 = arith.constant 0 : index
    %c0_44 = arith.constant 0 : index
    %145 = vector.load %arg10[%144, %c0_43, %c0_44] : memref<8x8x128xf32, #tpu.memory_space<vmem>>, vector<1x8x128xf32>
    %146 = vector.shape_cast %145 : vector<1x8x128xf32> to vector<8x128xf32>
    %147 = vector.shape_cast %143 : vector<8x128xf32> to vector<1x8x128xf32>
    tpu.vector_store %arg10[%144, %c0_43, %c0_44], %147 {strides = array<i32>} : memref<8x8x128xf32, #tpu.memory_space<vmem>>, vector<1x8x128xf32>,
    %c4_i32 = arith.constant 4 : i32
    %148 = arith.index_cast %c4_i32 : i32 to index
    %c0_45 = arith.constant 0 : index
    %c0_46 = arith.constant 0 : index
    %149 = vector.load %arg11[%148, %c0_45, %c0_46] : memref<8x8x512xf32, #tpu.memory_space<vmem>>, vector<1x8x512xf32>
    %150 = vector.shape_cast %149 : vector<1x8x512xf32> to vector<8x512xf32>
    %cst_47 = arith.constant dense<0.000000e+00> : vector<8x512xf32>
    %151 = tpu.matmul %143, %9, %cst_47 {dimension_numbers = #tpu.dot_dimension_numbers<[1], [0], [0], [1], [0, 0, 1, 1], [], []>} : vector<8x128xf32>, vector<128x512xf32>, vector<8x512xf32> -> vector<8x512xf32>
    %152 = arith.addf %150, %151 : vector<8x512xf32>
    %153 = vector.extract_strided_slice %152 {offsets = [0, 0], sizes = [8, 128], strides = [1, 1]} : vector<8x512xf32> to vector<8x128xf32>
    %154 = arith.negf %153 : vector<8x128xf32>
    %155 = math.exp %154 : vector<8x128xf32>
    %cst_48 = arith.constant 1.000000e+00 : f32
    %156 = vector.broadcast %cst_48 : f32 to vector<8x128xf32>
    %157 = arith.addf %156, %155 : vector<8x128xf32>
    %158 = arith.divf %156, %157 : vector<8x128xf32>
    %159 = vector.extract_strided_slice %152 {offsets = [0, 128], sizes = [8, 128], strides = [1, 1]} : vector<8x512xf32> to vector<8x128xf32>
    %160 = arith.negf %159 : vector<8x128xf32>
    %161 = math.exp %160 : vector<8x128xf32>
    %cst_49 = arith.constant 1.000000e+00 : f32
    %162 = vector.broadcast %cst_49 : f32 to vector<8x128xf32>
    %163 = arith.addf %162, %161 : vector<8x128xf32>
    %164 = arith.divf %162, %163 : vector<8x128xf32>
    %165 = vector.extract_strided_slice %152 {offsets = [0, 256], sizes = [8, 128], strides = [1, 1]} : vector<8x512xf32> to vector<8x128xf32>
    %166 = math.tanh %165 : vector<8x128xf32>
    %167 = vector.extract_strided_slice %152 {offsets = [0, 384], sizes = [8, 128], strides = [1, 1]} : vector<8x512xf32> to vector<8x128xf32>
    %168 = arith.negf %167 : vector<8x128xf32>
    %169 = math.exp %168 : vector<8x128xf32>
    %cst_50 = arith.constant 1.000000e+00 : f32
    %170 = vector.broadcast %cst_50 : f32 to vector<8x128xf32>
    %171 = arith.addf %170, %169 : vector<8x128xf32>
    %172 = arith.divf %170, %171 : vector<8x128xf32>
    %173 = arith.mulf %164, %141 : vector<8x128xf32>
    %174 = arith.mulf %158, %166 : vector<8x128xf32>
    %175 = arith.addf %173, %174 : vector<8x128xf32>
    %176 = math.tanh %175 : vector<8x128xf32>
    %177 = arith.mulf %172, %176 : vector<8x128xf32>
    %178 = arith.index_cast %c4_i32 : i32 to index
    %c0_51 = arith.constant 0 : index
    %c0_52 = arith.constant 0 : index
    %179 = vector.load %arg10[%178, %c0_51, %c0_52] : memref<8x8x128xf32, #tpu.memory_space<vmem>>, vector<1x8x128xf32>
    %180 = vector.shape_cast %179 : vector<1x8x128xf32> to vector<8x128xf32>
    %181 = vector.shape_cast %177 : vector<8x128xf32> to vector<1x8x128xf32>
    tpu.vector_store %arg10[%178, %c0_51, %c0_52], %181 {strides = array<i32>} : memref<8x8x128xf32, #tpu.memory_space<vmem>>, vector<1x8x128xf32>,
    %c5_i32 = arith.constant 5 : i32
    %182 = arith.index_cast %c5_i32 : i32 to index
    %c0_53 = arith.constant 0 : index
    %c0_54 = arith.constant 0 : index
    %183 = vector.load %arg11[%182, %c0_53, %c0_54] : memref<8x8x512xf32, #tpu.memory_space<vmem>>, vector<1x8x512xf32>
    %184 = vector.shape_cast %183 : vector<1x8x512xf32> to vector<8x512xf32>
    %cst_55 = arith.constant dense<0.000000e+00> : vector<8x512xf32>
    %185 = tpu.matmul %177, %9, %cst_55 {dimension_numbers = #tpu.dot_dimension_numbers<[1], [0], [0], [1], [0, 0, 1, 1], [], []>} : vector<8x128xf32>, vector<128x512xf32>, vector<8x512xf32> -> vector<8x512xf32>
    %186 = arith.addf %184, %185 : vector<8x512xf32>
    %187 = vector.extract_strided_slice %186 {offsets = [0, 0], sizes = [8, 128], strides = [1, 1]} : vector<8x512xf32> to vector<8x128xf32>
    %188 = arith.negf %187 : vector<8x128xf32>
    %189 = math.exp %188 : vector<8x128xf32>
    %cst_56 = arith.constant 1.000000e+00 : f32
    %190 = vector.broadcast %cst_56 : f32 to vector<8x128xf32>
    %191 = arith.addf %190, %189 : vector<8x128xf32>
    %192 = arith.divf %190, %191 : vector<8x128xf32>
    %193 = vector.extract_strided_slice %186 {offsets = [0, 128], sizes = [8, 128], strides = [1, 1]} : vector<8x512xf32> to vector<8x128xf32>
    %194 = arith.negf %193 : vector<8x128xf32>
    %195 = math.exp %194 : vector<8x128xf32>
    %cst_57 = arith.constant 1.000000e+00 : f32
    %196 = vector.broadcast %cst_57 : f32 to vector<8x128xf32>
    %197 = arith.addf %196, %195 : vector<8x128xf32>
    %198 = arith.divf %196, %197 : vector<8x128xf32>
    %199 = vector.extract_strided_slice %186 {offsets = [0, 256], sizes = [8, 128], strides = [1, 1]} : vector<8x512xf32> to vector<8x128xf32>
    %200 = math.tanh %199 : vector<8x128xf32>
    %201 = vector.extract_strided_slice %186 {offsets = [0, 384], sizes = [8, 128], strides = [1, 1]} : vector<8x512xf32> to vector<8x128xf32>
    %202 = arith.negf %201 : vector<8x128xf32>
    %203 = math.exp %202 : vector<8x128xf32>
    %cst_58 = arith.constant 1.000000e+00 : f32
    %204 = vector.broadcast %cst_58 : f32 to vector<8x128xf32>
    %205 = arith.addf %204, %203 : vector<8x128xf32>
    %206 = arith.divf %204, %205 : vector<8x128xf32>
    %207 = arith.mulf %198, %175 : vector<8x128xf32>
    %208 = arith.mulf %192, %200 : vector<8x128xf32>
    %209 = arith.addf %207, %208 : vector<8x128xf32>
    %210 = math.tanh %209 : vector<8x128xf32>
    %211 = arith.mulf %206, %210 : vector<8x128xf32>
    %212 = arith.index_cast %c5_i32 : i32 to index
    %c0_59 = arith.constant 0 : index
    %c0_60 = arith.constant 0 : index
    %213 = vector.load %arg10[%212, %c0_59, %c0_60] : memref<8x8x128xf32, #tpu.memory_space<vmem>>, vector<1x8x128xf32>
    %214 = vector.shape_cast %213 : vector<1x8x128xf32> to vector<8x128xf32>
    %215 = vector.shape_cast %211 : vector<8x128xf32> to vector<1x8x128xf32>
    tpu.vector_store %arg10[%212, %c0_59, %c0_60], %215 {strides = array<i32>} : memref<8x8x128xf32, #tpu.memory_space<vmem>>, vector<1x8x128xf32>,
    %c6_i32 = arith.constant 6 : i32
    %216 = arith.index_cast %c6_i32 : i32 to index
    %c0_61 = arith.constant 0 : index
    %c0_62 = arith.constant 0 : index
    %217 = vector.load %arg11[%216, %c0_61, %c0_62] : memref<8x8x512xf32, #tpu.memory_space<vmem>>, vector<1x8x512xf32>
    %218 = vector.shape_cast %217 : vector<1x8x512xf32> to vector<8x512xf32>
    %cst_63 = arith.constant dense<0.000000e+00> : vector<8x512xf32>
    %219 = tpu.matmul %211, %9, %cst_63 {dimension_numbers = #tpu.dot_dimension_numbers<[1], [0], [0], [1], [0, 0, 1, 1], [], []>} : vector<8x128xf32>, vector<128x512xf32>, vector<8x512xf32> -> vector<8x512xf32>
    %220 = arith.addf %218, %219 : vector<8x512xf32>
    %221 = vector.extract_strided_slice %220 {offsets = [0, 0], sizes = [8, 128], strides = [1, 1]} : vector<8x512xf32> to vector<8x128xf32>
    %222 = arith.negf %221 : vector<8x128xf32>
    %223 = math.exp %222 : vector<8x128xf32>
    %cst_64 = arith.constant 1.000000e+00 : f32
    %224 = vector.broadcast %cst_64 : f32 to vector<8x128xf32>
    %225 = arith.addf %224, %223 : vector<8x128xf32>
    %226 = arith.divf %224, %225 : vector<8x128xf32>
    %227 = vector.extract_strided_slice %220 {offsets = [0, 128], sizes = [8, 128], strides = [1, 1]} : vector<8x512xf32> to vector<8x128xf32>
    %228 = arith.negf %227 : vector<8x128xf32>
    %229 = math.exp %228 : vector<8x128xf32>
    %cst_65 = arith.constant 1.000000e+00 : f32
    %230 = vector.broadcast %cst_65 : f32 to vector<8x128xf32>
    %231 = arith.addf %230, %229 : vector<8x128xf32>
    %232 = arith.divf %230, %231 : vector<8x128xf32>
    %233 = vector.extract_strided_slice %220 {offsets = [0, 256], sizes = [8, 128], strides = [1, 1]} : vector<8x512xf32> to vector<8x128xf32>
    %234 = math.tanh %233 : vector<8x128xf32>
    %235 = vector.extract_strided_slice %220 {offsets = [0, 384], sizes = [8, 128], strides = [1, 1]} : vector<8x512xf32> to vector<8x128xf32>
    %236 = arith.negf %235 : vector<8x128xf32>
    %237 = math.exp %236 : vector<8x128xf32>
    %cst_66 = arith.constant 1.000000e+00 : f32
    %238 = vector.broadcast %cst_66 : f32 to vector<8x128xf32>
    %239 = arith.addf %238, %237 : vector<8x128xf32>
    %240 = arith.divf %238, %239 : vector<8x128xf32>
    %241 = arith.mulf %232, %209 : vector<8x128xf32>
    %242 = arith.mulf %226, %234 : vector<8x128xf32>
    %243 = arith.addf %241, %242 : vector<8x128xf32>
    %244 = math.tanh %243 : vector<8x128xf32>
    %245 = arith.mulf %240, %244 : vector<8x128xf32>
    %246 = arith.index_cast %c6_i32 : i32 to index
    %c0_67 = arith.constant 0 : index
    %c0_68 = arith.constant 0 : index
    %247 = vector.load %arg10[%246, %c0_67, %c0_68] : memref<8x8x128xf32, #tpu.memory_space<vmem>>, vector<1x8x128xf32>
    %248 = vector.shape_cast %247 : vector<1x8x128xf32> to vector<8x128xf32>
    %249 = vector.shape_cast %245 : vector<8x128xf32> to vector<1x8x128xf32>
    tpu.vector_store %arg10[%246, %c0_67, %c0_68], %249 {strides = array<i32>} : memref<8x8x128xf32, #tpu.memory_space<vmem>>, vector<1x8x128xf32>,
    %c7_i32 = arith.constant 7 : i32
    %250 = arith.index_cast %c7_i32 : i32 to index
    %c0_69 = arith.constant 0 : index
    %c0_70 = arith.constant 0 : index
    %251 = vector.load %arg11[%250, %c0_69, %c0_70] : memref<8x8x512xf32, #tpu.memory_space<vmem>>, vector<1x8x512xf32>
    %252 = vector.shape_cast %251 : vector<1x8x512xf32> to vector<8x512xf32>
    %cst_71 = arith.constant dense<0.000000e+00> : vector<8x512xf32>
    %253 = tpu.matmul %245, %9, %cst_71 {dimension_numbers = #tpu.dot_dimension_numbers<[1], [0], [0], [1], [0, 0, 1, 1], [], []>} : vector<8x128xf32>, vector<128x512xf32>, vector<8x512xf32> -> vector<8x512xf32>
    %254 = arith.addf %252, %253 : vector<8x512xf32>
    %255 = vector.extract_strided_slice %254 {offsets = [0, 0], sizes = [8, 128], strides = [1, 1]} : vector<8x512xf32> to vector<8x128xf32>
    %256 = arith.negf %255 : vector<8x128xf32>
    %257 = math.exp %256 : vector<8x128xf32>
    %cst_72 = arith.constant 1.000000e+00 : f32
    %258 = vector.broadcast %cst_72 : f32 to vector<8x128xf32>
    %259 = arith.addf %258, %257 : vector<8x128xf32>
    %260 = arith.divf %258, %259 : vector<8x128xf32>
    %261 = vector.extract_strided_slice %254 {offsets = [0, 128], sizes = [8, 128], strides = [1, 1]} : vector<8x512xf32> to vector<8x128xf32>
    %262 = arith.negf %261 : vector<8x128xf32>
    %263 = math.exp %262 : vector<8x128xf32>
    %cst_73 = arith.constant 1.000000e+00 : f32
    %264 = vector.broadcast %cst_73 : f32 to vector<8x128xf32>
    %265 = arith.addf %264, %263 : vector<8x128xf32>
    %266 = arith.divf %264, %265 : vector<8x128xf32>
    %267 = vector.extract_strided_slice %254 {offsets = [0, 256], sizes = [8, 128], strides = [1, 1]} : vector<8x512xf32> to vector<8x128xf32>
    %268 = math.tanh %267 : vector<8x128xf32>
    %269 = vector.extract_strided_slice %254 {offsets = [0, 384], sizes = [8, 128], strides = [1, 1]} : vector<8x512xf32> to vector<8x128xf32>
    %270 = arith.negf %269 : vector<8x128xf32>
    %271 = math.exp %270 : vector<8x128xf32>
    %cst_74 = arith.constant 1.000000e+00 : f32
    %272 = vector.broadcast %cst_74 : f32 to vector<8x128xf32>
    %273 = arith.addf %272, %271 : vector<8x128xf32>
    %274 = arith.divf %272, %273 : vector<8x128xf32>
    %275 = arith.mulf %266, %243 : vector<8x128xf32>
    %276 = arith.mulf %260, %268 : vector<8x128xf32>
    %277 = arith.addf %275, %276 : vector<8x128xf32>
    %278 = math.tanh %277 : vector<8x128xf32>
    %279 = arith.mulf %274, %278 : vector<8x128xf32>
    %280 = arith.index_cast %c7_i32 : i32 to index
    %c0_75 = arith.constant 0 : index
    %c0_76 = arith.constant 0 : index
    %281 = vector.load %arg10[%280, %c0_75, %c0_76] : memref<8x8x128xf32, #tpu.memory_space<vmem>>, vector<1x8x128xf32>
    %282 = vector.shape_cast %281 : vector<1x8x128xf32> to vector<8x128xf32>
    %283 = vector.shape_cast %279 : vector<8x128xf32> to vector<1x8x128xf32>
    tpu.vector_store %arg10[%280, %c0_75, %c0_76], %283 {strides = array<i32>} : memref<8x8x128xf32, #tpu.memory_space<vmem>>, vector<1x8x128xf32>,
    %c8_i32 = arith.constant 8 : i32
    %c0_77 = arith.constant 0 : index
    %c0_78 = arith.constant 0 : index
    %c0_79 = arith.constant 0 : index
    %284 = vector.load %arg10[%c0_77, %c0_78, %c0_79] : memref<8x8x128xf32, #tpu.memory_space<vmem>>, vector<8x8x128xf32>
    %285 = vector.shape_cast %284 : vector<8x8x128xf32> to vector<64x128xf32>
    %c0_80 = arith.constant 0 : index
    %c0_81 = arith.constant 0 : index
    %286 = vector.load %arg4[%c0_80, %c0_81] : memref<128x512xf32, #tpu.memory_space<vmem>>, vector<128x512xf32>
    %cst_82 = arith.constant dense<0.000000e+00> : vector<64x512xf32>
    %287 = tpu.matmul %285, %286, %cst_82 {dimension_numbers = #tpu.dot_dimension_numbers<[1], [0], [0], [1], [0, 0, 1, 1], [], []>} : vector<64x128xf32>, vector<128x512xf32>, vector<64x512xf32> -> vector<64x512xf32>
    %c0_83 = arith.constant 0 : index
    %c0_84 = arith.constant 0 : index
    %288 = vector.load %arg6[%c0_83, %c0_84] : memref<1x512xf32, #tpu.memory_space<vmem>>, vector<1x512xf32>
    %289 = vector.broadcast %288 : vector<1x512xf32> to vector<64x512xf32>
    %290 = arith.addf %287, %289 : vector<64x512xf32>
    %291 = vector.shape_cast %290 : vector<64x512xf32> to vector<8x8x512xf32>
    %c0_85 = arith.constant 0 : index
    %c0_86 = arith.constant 0 : index
    %c0_87 = arith.constant 0 : index
    %292 = vector.load %arg11[%c0_85, %c0_86, %c0_87] : memref<8x8x512xf32, #tpu.memory_space<vmem>>, vector<8x8x512xf32>
    tpu.vector_store %arg11[%c0_85, %c0_86, %c0_87], %291 {strides = array<i32>} : memref<8x8x512xf32, #tpu.memory_space<vmem>>, vector<8x8x512xf32>,
    %c0_88 = arith.constant 0 : index
    %c0_89 = arith.constant 0 : index
    %293 = vector.load %arg5[%c0_88, %c0_89] : memref<128x512xf32, #tpu.memory_space<vmem>>, vector<128x512xf32>
    %cst_90 = arith.constant 0.000000e+00 : f32
    %294 = vector.broadcast %cst_90 : f32 to vector<8x128xf32>
    %cst_91 = arith.constant 0.000000e+00 : f32
    %295 = vector.broadcast %cst_91 : f32 to vector<8x128xf32>
    %c0_i32_92 = arith.constant 0 : i32
    %296 = arith.index_cast %c0_i32_92 : i32 to index
    %c0_93 = arith.constant 0 : index
    %c0_94 = arith.constant 0 : index
    %297 = vector.load %arg11[%296, %c0_93, %c0_94] : memref<8x8x512xf32, #tpu.memory_space<vmem>>, vector<1x8x512xf32>
    %298 = vector.shape_cast %297 : vector<1x8x512xf32> to vector<8x512xf32>
    %cst_95 = arith.constant dense<0.000000e+00> : vector<8x512xf32>
    %299 = tpu.matmul %294, %293, %cst_95 {dimension_numbers = #tpu.dot_dimension_numbers<[1], [0], [0], [1], [0, 0, 1, 1], [], []>} : vector<8x128xf32>, vector<128x512xf32>, vector<8x512xf32> -> vector<8x512xf32>
    %300 = arith.addf %298, %299 : vector<8x512xf32>
    %301 = vector.extract_strided_slice %300 {offsets = [0, 0], sizes = [8, 128], strides = [1, 1]} : vector<8x512xf32> to vector<8x128xf32>
    %302 = arith.negf %301 : vector<8x128xf32>
    %303 = math.exp %302 : vector<8x128xf32>
    %cst_96 = arith.constant 1.000000e+00 : f32
    %304 = vector.broadcast %cst_96 : f32 to vector<8x128xf32>
    %305 = arith.addf %304, %303 : vector<8x128xf32>
    %306 = arith.divf %304, %305 : vector<8x128xf32>
    %307 = vector.extract_strided_slice %300 {offsets = [0, 128], sizes = [8, 128], strides = [1, 1]} : vector<8x512xf32> to vector<8x128xf32>
    %308 = arith.negf %307 : vector<8x128xf32>
    %309 = math.exp %308 : vector<8x128xf32>
    %cst_97 = arith.constant 1.000000e+00 : f32
    %310 = vector.broadcast %cst_97 : f32 to vector<8x128xf32>
    %311 = arith.addf %310, %309 : vector<8x128xf32>
    %312 = arith.divf %310, %311 : vector<8x128xf32>
    %313 = vector.extract_strided_slice %300 {offsets = [0, 256], sizes = [8, 128], strides = [1, 1]} : vector<8x512xf32> to vector<8x128xf32>
    %314 = math.tanh %313 : vector<8x128xf32>
    %315 = vector.extract_strided_slice %300 {offsets = [0, 384], sizes = [8, 128], strides = [1, 1]} : vector<8x512xf32> to vector<8x128xf32>
    %316 = arith.negf %315 : vector<8x128xf32>
    %317 = math.exp %316 : vector<8x128xf32>
    %cst_98 = arith.constant 1.000000e+00 : f32
    %318 = vector.broadcast %cst_98 : f32 to vector<8x128xf32>
    %319 = arith.addf %318, %317 : vector<8x128xf32>
    %320 = arith.divf %318, %319 : vector<8x128xf32>
    %321 = arith.mulf %312, %295 : vector<8x128xf32>
    %322 = arith.mulf %306, %314 : vector<8x128xf32>
    %323 = arith.addf %321, %322 : vector<8x128xf32>
    %324 = math.tanh %323 : vector<8x128xf32>
    %325 = arith.mulf %320, %324 : vector<8x128xf32>
    %c1_i32_99 = arith.constant 1 : i32
    %326 = arith.index_cast %c1_i32_99 : i32 to index
    %c0_100 = arith.constant 0 : index
    %c0_101 = arith.constant 0 : index
    %327 = vector.load %arg11[%326, %c0_100, %c0_101] : memref<8x8x512xf32, #tpu.memory_space<vmem>>, vector<1x8x512xf32>
    %328 = vector.shape_cast %327 : vector<1x8x512xf32> to vector<8x512xf32>
    %cst_102 = arith.constant dense<0.000000e+00> : vector<8x512xf32>
    %329 = tpu.matmul %325, %293, %cst_102 {dimension_numbers = #tpu.dot_dimension_numbers<[1], [0], [0], [1], [0, 0, 1, 1], [], []>} : vector<8x128xf32>, vector<128x512xf32>, vector<8x512xf32> -> vector<8x512xf32>
    %330 = arith.addf %328, %329 : vector<8x512xf32>
    %331 = vector.extract_strided_slice %330 {offsets = [0, 0], sizes = [8, 128], strides = [1, 1]} : vector<8x512xf32> to vector<8x128xf32>
    %332 = arith.negf %331 : vector<8x128xf32>
    %333 = math.exp %332 : vector<8x128xf32>
    %cst_103 = arith.constant 1.000000e+00 : f32
    %334 = vector.broadcast %cst_103 : f32 to vector<8x128xf32>
    %335 = arith.addf %334, %333 : vector<8x128xf32>
    %336 = arith.divf %334, %335 : vector<8x128xf32>
    %337 = vector.extract_strided_slice %330 {offsets = [0, 128], sizes = [8, 128], strides = [1, 1]} : vector<8x512xf32> to vector<8x128xf32>
    %338 = arith.negf %337 : vector<8x128xf32>
    %339 = math.exp %338 : vector<8x128xf32>
    %cst_104 = arith.constant 1.000000e+00 : f32
    %340 = vector.broadcast %cst_104 : f32 to vector<8x128xf32>
    %341 = arith.addf %340, %339 : vector<8x128xf32>
    %342 = arith.divf %340, %341 : vector<8x128xf32>
    %343 = vector.extract_strided_slice %330 {offsets = [0, 256], sizes = [8, 128], strides = [1, 1]} : vector<8x512xf32> to vector<8x128xf32>
    %344 = math.tanh %343 : vector<8x128xf32>
    %345 = vector.extract_strided_slice %330 {offsets = [0, 384], sizes = [8, 128], strides = [1, 1]} : vector<8x512xf32> to vector<8x128xf32>
    %346 = arith.negf %345 : vector<8x128xf32>
    %347 = math.exp %346 : vector<8x128xf32>
    %cst_105 = arith.constant 1.000000e+00 : f32
    %348 = vector.broadcast %cst_105 : f32 to vector<8x128xf32>
    %349 = arith.addf %348, %347 : vector<8x128xf32>
    %350 = arith.divf %348, %349 : vector<8x128xf32>
    %351 = arith.mulf %342, %323 : vector<8x128xf32>
    %352 = arith.mulf %336, %344 : vector<8x128xf32>
    %353 = arith.addf %351, %352 : vector<8x128xf32>
    %354 = math.tanh %353 : vector<8x128xf32>
    %355 = arith.mulf %350, %354 : vector<8x128xf32>
    %c2_i32_106 = arith.constant 2 : i32
    %356 = arith.index_cast %c2_i32_106 : i32 to index
    %c0_107 = arith.constant 0 : index
    %c0_108 = arith.constant 0 : index
    %357 = vector.load %arg11[%356, %c0_107, %c0_108] : memref<8x8x512xf32, #tpu.memory_space<vmem>>, vector<1x8x512xf32>
    %358 = vector.shape_cast %357 : vector<1x8x512xf32> to vector<8x512xf32>
    %cst_109 = arith.constant dense<0.000000e+00> : vector<8x512xf32>
    %359 = tpu.matmul %355, %293, %cst_109 {dimension_numbers = #tpu.dot_dimension_numbers<[1], [0], [0], [1], [0, 0, 1, 1], [], []>} : vector<8x128xf32>, vector<128x512xf32>, vector<8x512xf32> -> vector<8x512xf32>
    %360 = arith.addf %358, %359 : vector<8x512xf32>
    %361 = vector.extract_strided_slice %360 {offsets = [0, 0], sizes = [8, 128], strides = [1, 1]} : vector<8x512xf32> to vector<8x128xf32>
    %362 = arith.negf %361 : vector<8x128xf32>
    %363 = math.exp %362 : vector<8x128xf32>
    %cst_110 = arith.constant 1.000000e+00 : f32
    %364 = vector.broadcast %cst_110 : f32 to vector<8x128xf32>
    %365 = arith.addf %364, %363 : vector<8x128xf32>
    %366 = arith.divf %364, %365 : vector<8x128xf32>
    %367 = vector.extract_strided_slice %360 {offsets = [0, 128], sizes = [8, 128], strides = [1, 1]} : vector<8x512xf32> to vector<8x128xf32>
    %368 = arith.negf %367 : vector<8x128xf32>
    %369 = math.exp %368 : vector<8x128xf32>
    %cst_111 = arith.constant 1.000000e+00 : f32
    %370 = vector.broadcast %cst_111 : f32 to vector<8x128xf32>
    %371 = arith.addf %370, %369 : vector<8x128xf32>
    %372 = arith.divf %370, %371 : vector<8x128xf32>
    %373 = vector.extract_strided_slice %360 {offsets = [0, 256], sizes = [8, 128], strides = [1, 1]} : vector<8x512xf32> to vector<8x128xf32>
    %374 = math.tanh %373 : vector<8x128xf32>
    %375 = vector.extract_strided_slice %360 {offsets = [0, 384], sizes = [8, 128], strides = [1, 1]} : vector<8x512xf32> to vector<8x128xf32>
    %376 = arith.negf %375 : vector<8x128xf32>
    %377 = math.exp %376 : vector<8x128xf32>
    %cst_112 = arith.constant 1.000000e+00 : f32
    %378 = vector.broadcast %cst_112 : f32 to vector<8x128xf32>
    %379 = arith.addf %378, %377 : vector<8x128xf32>
    %380 = arith.divf %378, %379 : vector<8x128xf32>
    %381 = arith.mulf %372, %353 : vector<8x128xf32>
    %382 = arith.mulf %366, %374 : vector<8x128xf32>
    %383 = arith.addf %381, %382 : vector<8x128xf32>
    %384 = math.tanh %383 : vector<8x128xf32>
    %385 = arith.mulf %380, %384 : vector<8x128xf32>
    %c3_i32_113 = arith.constant 3 : i32
    %386 = arith.index_cast %c3_i32_113 : i32 to index
    %c0_114 = arith.constant 0 : index
    %c0_115 = arith.constant 0 : index
    %387 = vector.load %arg11[%386, %c0_114, %c0_115] : memref<8x8x512xf32, #tpu.memory_space<vmem>>, vector<1x8x512xf32>
    %388 = vector.shape_cast %387 : vector<1x8x512xf32> to vector<8x512xf32>
    %cst_116 = arith.constant dense<0.000000e+00> : vector<8x512xf32>
    %389 = tpu.matmul %385, %293, %cst_116 {dimension_numbers = #tpu.dot_dimension_numbers<[1], [0], [0], [1], [0, 0, 1, 1], [], []>} : vector<8x128xf32>, vector<128x512xf32>, vector<8x512xf32> -> vector<8x512xf32>
    %390 = arith.addf %388, %389 : vector<8x512xf32>
    %391 = vector.extract_strided_slice %390 {offsets = [0, 0], sizes = [8, 128], strides = [1, 1]} : vector<8x512xf32> to vector<8x128xf32>
    %392 = arith.negf %391 : vector<8x128xf32>
    %393 = math.exp %392 : vector<8x128xf32>
    %cst_117 = arith.constant 1.000000e+00 : f32
    %394 = vector.broadcast %cst_117 : f32 to vector<8x128xf32>
    %395 = arith.addf %394, %393 : vector<8x128xf32>
    %396 = arith.divf %394, %395 : vector<8x128xf32>
    %397 = vector.extract_strided_slice %390 {offsets = [0, 128], sizes = [8, 128], strides = [1, 1]} : vector<8x512xf32> to vector<8x128xf32>
    %398 = arith.negf %397 : vector<8x128xf32>
    %399 = math.exp %398 : vector<8x128xf32>
    %cst_118 = arith.constant 1.000000e+00 : f32
    %400 = vector.broadcast %cst_118 : f32 to vector<8x128xf32>
    %401 = arith.addf %400, %399 : vector<8x128xf32>
    %402 = arith.divf %400, %401 : vector<8x128xf32>
    %403 = vector.extract_strided_slice %390 {offsets = [0, 256], sizes = [8, 128], strides = [1, 1]} : vector<8x512xf32> to vector<8x128xf32>
    %404 = math.tanh %403 : vector<8x128xf32>
    %405 = vector.extract_strided_slice %390 {offsets = [0, 384], sizes = [8, 128], strides = [1, 1]} : vector<8x512xf32> to vector<8x128xf32>
    %406 = arith.negf %405 : vector<8x128xf32>
    %407 = math.exp %406 : vector<8x128xf32>
    %cst_119 = arith.constant 1.000000e+00 : f32
    %408 = vector.broadcast %cst_119 : f32 to vector<8x128xf32>
    %409 = arith.addf %408, %407 : vector<8x128xf32>
    %410 = arith.divf %408, %409 : vector<8x128xf32>
    %411 = arith.mulf %402, %383 : vector<8x128xf32>
    %412 = arith.mulf %396, %404 : vector<8x128xf32>
    %413 = arith.addf %411, %412 : vector<8x128xf32>
    %414 = math.tanh %413 : vector<8x128xf32>
    %415 = arith.mulf %410, %414 : vector<8x128xf32>
    %c4_i32_120 = arith.constant 4 : i32
    %416 = arith.index_cast %c4_i32_120 : i32 to index
    %c0_121 = arith.constant 0 : index
    %c0_122 = arith.constant 0 : index
    %417 = vector.load %arg11[%416, %c0_121, %c0_122] : memref<8x8x512xf32, #tpu.memory_space<vmem>>, vector<1x8x512xf32>
    %418 = vector.shape_cast %417 : vector<1x8x512xf32> to vector<8x512xf32>
    %cst_123 = arith.constant dense<0.000000e+00> : vector<8x512xf32>
    %419 = tpu.matmul %415, %293, %cst_123 {dimension_numbers = #tpu.dot_dimension_numbers<[1], [0], [0], [1], [0, 0, 1, 1], [], []>} : vector<8x128xf32>, vector<128x512xf32>, vector<8x512xf32> -> vector<8x512xf32>
    %420 = arith.addf %418, %419 : vector<8x512xf32>
    %421 = vector.extract_strided_slice %420 {offsets = [0, 0], sizes = [8, 128], strides = [1, 1]} : vector<8x512xf32> to vector<8x128xf32>
    %422 = arith.negf %421 : vector<8x128xf32>
    %423 = math.exp %422 : vector<8x128xf32>
    %cst_124 = arith.constant 1.000000e+00 : f32
    %424 = vector.broadcast %cst_124 : f32 to vector<8x128xf32>
    %425 = arith.addf %424, %423 : vector<8x128xf32>
    %426 = arith.divf %424, %425 : vector<8x128xf32>
    %427 = vector.extract_strided_slice %420 {offsets = [0, 128], sizes = [8, 128], strides = [1, 1]} : vector<8x512xf32> to vector<8x128xf32>
    %428 = arith.negf %427 : vector<8x128xf32>
    %429 = math.exp %428 : vector<8x128xf32>
    %cst_125 = arith.constant 1.000000e+00 : f32
    %430 = vector.broadcast %cst_125 : f32 to vector<8x128xf32>
    %431 = arith.addf %430, %429 : vector<8x128xf32>
    %432 = arith.divf %430, %431 : vector<8x128xf32>
    %433 = vector.extract_strided_slice %420 {offsets = [0, 256], sizes = [8, 128], strides = [1, 1]} : vector<8x512xf32> to vector<8x128xf32>
    %434 = math.tanh %433 : vector<8x128xf32>
    %435 = vector.extract_strided_slice %420 {offsets = [0, 384], sizes = [8, 128], strides = [1, 1]} : vector<8x512xf32> to vector<8x128xf32>
    %436 = arith.negf %435 : vector<8x128xf32>
    %437 = math.exp %436 : vector<8x128xf32>
    %cst_126 = arith.constant 1.000000e+00 : f32
    %438 = vector.broadcast %cst_126 : f32 to vector<8x128xf32>
    %439 = arith.addf %438, %437 : vector<8x128xf32>
    %440 = arith.divf %438, %439 : vector<8x128xf32>
    %441 = arith.mulf %432, %413 : vector<8x128xf32>
    %442 = arith.mulf %426, %434 : vector<8x128xf32>
    %443 = arith.addf %441, %442 : vector<8x128xf32>
    %444 = math.tanh %443 : vector<8x128xf32>
    %445 = arith.mulf %440, %444 : vector<8x128xf32>
    %c5_i32_127 = arith.constant 5 : i32
    %446 = arith.index_cast %c5_i32_127 : i32 to index
    %c0_128 = arith.constant 0 : index
    %c0_129 = arith.constant 0 : index
    %447 = vector.load %arg11[%446, %c0_128, %c0_129] : memref<8x8x512xf32, #tpu.memory_space<vmem>>, vector<1x8x512xf32>
    %448 = vector.shape_cast %447 : vector<1x8x512xf32> to vector<8x512xf32>
    %cst_130 = arith.constant dense<0.000000e+00> : vector<8x512xf32>
    %449 = tpu.matmul %445, %293, %cst_130 {dimension_numbers = #tpu.dot_dimension_numbers<[1], [0], [0], [1], [0, 0, 1, 1], [], []>} : vector<8x128xf32>, vector<128x512xf32>, vector<8x512xf32> -> vector<8x512xf32>
    %450 = arith.addf %448, %449 : vector<8x512xf32>
    %451 = vector.extract_strided_slice %450 {offsets = [0, 0], sizes = [8, 128], strides = [1, 1]} : vector<8x512xf32> to vector<8x128xf32>
    %452 = arith.negf %451 : vector<8x128xf32>
    %453 = math.exp %452 : vector<8x128xf32>
    %cst_131 = arith.constant 1.000000e+00 : f32
    %454 = vector.broadcast %cst_131 : f32 to vector<8x128xf32>
    %455 = arith.addf %454, %453 : vector<8x128xf32>
    %456 = arith.divf %454, %455 : vector<8x128xf32>
    %457 = vector.extract_strided_slice %450 {offsets = [0, 128], sizes = [8, 128], strides = [1, 1]} : vector<8x512xf32> to vector<8x128xf32>
    %458 = arith.negf %457 : vector<8x128xf32>
    %459 = math.exp %458 : vector<8x128xf32>
    %cst_132 = arith.constant 1.000000e+00 : f32
    %460 = vector.broadcast %cst_132 : f32 to vector<8x128xf32>
    %461 = arith.addf %460, %459 : vector<8x128xf32>
    %462 = arith.divf %460, %461 : vector<8x128xf32>
    %463 = vector.extract_strided_slice %450 {offsets = [0, 256], sizes = [8, 128], strides = [1, 1]} : vector<8x512xf32> to vector<8x128xf32>
    %464 = math.tanh %463 : vector<8x128xf32>
    %465 = vector.extract_strided_slice %450 {offsets = [0, 384], sizes = [8, 128], strides = [1, 1]} : vector<8x512xf32> to vector<8x128xf32>
    %466 = arith.negf %465 : vector<8x128xf32>
    %467 = math.exp %466 : vector<8x128xf32>
    %cst_133 = arith.constant 1.000000e+00 : f32
    %468 = vector.broadcast %cst_133 : f32 to vector<8x128xf32>
    %469 = arith.addf %468, %467 : vector<8x128xf32>
    %470 = arith.divf %468, %469 : vector<8x128xf32>
    %471 = arith.mulf %462, %443 : vector<8x128xf32>
    %472 = arith.mulf %456, %464 : vector<8x128xf32>
    %473 = arith.addf %471, %472 : vector<8x128xf32>
    %474 = math.tanh %473 : vector<8x128xf32>
    %475 = arith.mulf %470, %474 : vector<8x128xf32>
    %c6_i32_134 = arith.constant 6 : i32
    %476 = arith.index_cast %c6_i32_134 : i32 to index
    %c0_135 = arith.constant 0 : index
    %c0_136 = arith.constant 0 : index
    %477 = vector.load %arg11[%476, %c0_135, %c0_136] : memref<8x8x512xf32, #tpu.memory_space<vmem>>, vector<1x8x512xf32>
    %478 = vector.shape_cast %477 : vector<1x8x512xf32> to vector<8x512xf32>
    %cst_137 = arith.constant dense<0.000000e+00> : vector<8x512xf32>
    %479 = tpu.matmul %475, %293, %cst_137 {dimension_numbers = #tpu.dot_dimension_numbers<[1], [0], [0], [1], [0, 0, 1, 1], [], []>} : vector<8x128xf32>, vector<128x512xf32>, vector<8x512xf32> -> vector<8x512xf32>
    %480 = arith.addf %478, %479 : vector<8x512xf32>
    %481 = vector.extract_strided_slice %480 {offsets = [0, 0], sizes = [8, 128], strides = [1, 1]} : vector<8x512xf32> to vector<8x128xf32>
    %482 = arith.negf %481 : vector<8x128xf32>
    %483 = math.exp %482 : vector<8x128xf32>
    %cst_138 = arith.constant 1.000000e+00 : f32
    %484 = vector.broadcast %cst_138 : f32 to vector<8x128xf32>
    %485 = arith.addf %484, %483 : vector<8x128xf32>
    %486 = arith.divf %484, %485 : vector<8x128xf32>
    %487 = vector.extract_strided_slice %480 {offsets = [0, 128], sizes = [8, 128], strides = [1, 1]} : vector<8x512xf32> to vector<8x128xf32>
    %488 = arith.negf %487 : vector<8x128xf32>
    %489 = math.exp %488 : vector<8x128xf32>
    %cst_139 = arith.constant 1.000000e+00 : f32
    %490 = vector.broadcast %cst_139 : f32 to vector<8x128xf32>
    %491 = arith.addf %490, %489 : vector<8x128xf32>
    %492 = arith.divf %490, %491 : vector<8x128xf32>
    %493 = vector.extract_strided_slice %480 {offsets = [0, 256], sizes = [8, 128], strides = [1, 1]} : vector<8x512xf32> to vector<8x128xf32>
    %494 = math.tanh %493 : vector<8x128xf32>
    %495 = vector.extract_strided_slice %480 {offsets = [0, 384], sizes = [8, 128], strides = [1, 1]} : vector<8x512xf32> to vector<8x128xf32>
    %496 = arith.negf %495 : vector<8x128xf32>
    %497 = math.exp %496 : vector<8x128xf32>
    %cst_140 = arith.constant 1.000000e+00 : f32
    %498 = vector.broadcast %cst_140 : f32 to vector<8x128xf32>
    %499 = arith.addf %498, %497 : vector<8x128xf32>
    %500 = arith.divf %498, %499 : vector<8x128xf32>
    %501 = arith.mulf %492, %473 : vector<8x128xf32>
    %502 = arith.mulf %486, %494 : vector<8x128xf32>
    %503 = arith.addf %501, %502 : vector<8x128xf32>
    %504 = math.tanh %503 : vector<8x128xf32>
    %505 = arith.mulf %500, %504 : vector<8x128xf32>
    %c7_i32_141 = arith.constant 7 : i32
    %506 = arith.index_cast %c7_i32_141 : i32 to index
    %c0_142 = arith.constant 0 : index
    %c0_143 = arith.constant 0 : index
    %507 = vector.load %arg11[%506, %c0_142, %c0_143] : memref<8x8x512xf32, #tpu.memory_space<vmem>>, vector<1x8x512xf32>
    %508 = vector.shape_cast %507 : vector<1x8x512xf32> to vector<8x512xf32>
    %cst_144 = arith.constant dense<0.000000e+00> : vector<8x512xf32>
    %509 = tpu.matmul %505, %293, %cst_144 {dimension_numbers = #tpu.dot_dimension_numbers<[1], [0], [0], [1], [0, 0, 1, 1], [], []>} : vector<8x128xf32>, vector<128x512xf32>, vector<8x512xf32> -> vector<8x512xf32>
    %510 = arith.addf %508, %509 : vector<8x512xf32>
    %511 = vector.extract_strided_slice %510 {offsets = [0, 0], sizes = [8, 128], strides = [1, 1]} : vector<8x512xf32> to vector<8x128xf32>
    %512 = arith.negf %511 : vector<8x128xf32>
    %513 = math.exp %512 : vector<8x128xf32>
    %cst_145 = arith.constant 1.000000e+00 : f32
    %514 = vector.broadcast %cst_145 : f32 to vector<8x128xf32>
    %515 = arith.addf %514, %513 : vector<8x128xf32>
    %516 = arith.divf %514, %515 : vector<8x128xf32>
    %517 = vector.extract_strided_slice %510 {offsets = [0, 128], sizes = [8, 128], strides = [1, 1]} : vector<8x512xf32> to vector<8x128xf32>
    %518 = arith.negf %517 : vector<8x128xf32>
    %519 = math.exp %518 : vector<8x128xf32>
    %cst_146 = arith.constant 1.000000e+00 : f32
    %520 = vector.broadcast %cst_146 : f32 to vector<8x128xf32>
    %521 = arith.addf %520, %519 : vector<8x128xf32>
    %522 = arith.divf %520, %521 : vector<8x128xf32>
    %523 = vector.extract_strided_slice %510 {offsets = [0, 256], sizes = [8, 128], strides = [1, 1]} : vector<8x512xf32> to vector<8x128xf32>
    %524 = math.tanh %523 : vector<8x128xf32>
    %525 = vector.extract_strided_slice %510 {offsets = [0, 384], sizes = [8, 128], strides = [1, 1]} : vector<8x512xf32> to vector<8x128xf32>
    %526 = arith.negf %525 : vector<8x128xf32>
    %527 = math.exp %526 : vector<8x128xf32>
    %cst_147 = arith.constant 1.000000e+00 : f32
    %528 = vector.broadcast %cst_147 : f32 to vector<8x128xf32>
    %529 = arith.addf %528, %527 : vector<8x128xf32>
    %530 = arith.divf %528, %529 : vector<8x128xf32>
    %531 = arith.mulf %522, %503 : vector<8x128xf32>
    %532 = arith.mulf %516, %524 : vector<8x128xf32>
    %533 = arith.addf %531, %532 : vector<8x128xf32>
    %534 = math.tanh %533 : vector<8x128xf32>
    %535 = arith.mulf %530, %534 : vector<8x128xf32>
    %c8_i32_148 = arith.constant 8 : i32
    %cst_149 = arith.constant 0.000000e+00 : f32
    %536 = vector.broadcast %cst_149 : f32 to vector<8x128xf32>
    %537 = arith.maximumf %535, %536 : vector<8x128xf32>
    %c0_150 = arith.constant 0 : index
    %c0_151 = arith.constant 0 : index
    %538 = vector.load %arg7[%c0_150, %c0_151] : memref<128x128xf32, #tpu.memory_space<vmem>>, vector<128x128xf32>
    %cst_152 = arith.constant dense<0.000000e+00> : vector<8x128xf32>
    %539 = tpu.matmul %537, %538, %cst_152 {dimension_numbers = #tpu.dot_dimension_numbers<[1], [0], [0], [1], [0, 0, 1, 1], [], []>} : vector<8x128xf32>, vector<128x128xf32>, vector<8x128xf32> -> vector<8x128xf32>
    %c0_153 = arith.constant 0 : index
    %c0_154 = arith.constant 0 : index
    %540 = vector.load %arg8[%c0_153, %c0_154] : memref<1x128xf32, #tpu.memory_space<vmem>>, vector<1x128xf32>
    %541 = vector.broadcast %540 : vector<1x128xf32> to vector<8x128xf32>
    %542 = arith.addf %539, %541 : vector<8x128xf32>
    %c0_155 = arith.constant 0 : index
    %c0_156 = arith.constant 0 : index
    %543 = vector.load %arg9[%c0_155, %c0_156] : memref<8x128xf32, #tpu.memory_space<vmem>>, vector<8x128xf32>
    tpu.vector_store %arg9[%c0_155, %c0_156], %542 {strides = array<i32>} : memref<8x128xf32, #tpu.memory_space<vmem>>, vector<8x128xf32>,
    return
  }
}

</mosaic_0001>

<llo_original>
// kernel: tpu_custom_call.1
$region0: #{tpu_custom_call.1}
  #allocation0 [shape = 'u32[]', space=smem, size = 0x4, offset = 0x4, fixed_abs, tag = 'smem constant byte address 0x4 - core index']
  #allocation1 [shape = 'u32[144,128]{1,0:T(1,128)}', space=vmem, size = 0x12000, scoped, tag = 'internal scratch']
  #allocation2 [shape = 'f32[8,8,128]{2,1,0:T(8,128)}', space=vmem, size = 0x8000, scoped, tag = 'scratch operand']
  #allocation3 [shape = 'f32[8,8,512]{2,1,0:T(8,128)}', space=vmem, size = 0x20000, scoped, tag = 'scratch operand']
  %s0 = inlined_call_operand.hbm [shape: f32[8,8,128], index: 0, kind: input, shape index: {}]
  %s1 = inlined_call_operand.hbm [shape: f32[128,512], index: 1, kind: input, shape index: {}]
  %s2 = inlined_call_operand.hbm [shape: f32[128,512], index: 2, kind: input, shape index: {}]
  %s3 = inlined_call_operand.vmem [shape: f32[1,512], index: 3, kind: input, shape index: {}]
  %s4 = inlined_call_operand.hbm [shape: f32[128,512], index: 4, kind: input, shape index: {}]
  %s5 = inlined_call_operand.hbm [shape: f32[128,512], index: 5, kind: input, shape index: {}]
  %s6 = inlined_call_operand.vmem [shape: f32[1,512], index: 6, kind: input, shape index: {}]
  %s7 = inlined_call_operand.hbm [shape: f32[128,128], index: 7, kind: input, shape index: {}]
  %s8 = inlined_call_operand.vmem [shape: f32[1,128], index: 8, kind: input, shape index: {}]
  %s9 = inlined_call_operand.hbm [shape: f32[8,128], index: 9, kind: output, shape index: {}]
  %s10 = sld [smem:[#allocation0]]
  $region70: #{tpu_custom_call.1} parent=0
    _
  %s12 = ssub.s32 1, %s10
  %s13 = scalar_select 0, %s12, %s10
  $region1: #{tpu_custom_call.1} parent=0
    #allocation4 [shape = 'u8[32768]{0}', space=vmem, size = 0x8000, scoped, tag = 'input window, operand 0, single buffered']
    #allocation5 [shape = 's32[1]{0}', space=sflag, size = 0x4, scoped, tag = 'scoped memory for tpu_custom_call.1']
    #allocation6 [shape = 's32[1]{0}', space=sflag, size = 0x4, scoped, tag = 'scoped memory for tpu_custom_call.1']
    #allocation7 [shape = 'u8[262144]{0}', space=vmem, size = 0x40000, scoped, tag = 'input window, operand 1, single buffered']
    #allocation8 [shape = 's32[1]{0}', space=sflag, size = 0x4, scoped, tag = 'scoped memory for tpu_custom_call.1']
    #allocation9 [shape = 'u8[262144]{0}', space=vmem, size = 0x40000, scoped, tag = 'input window, operand 2, single buffered']
    #allocation10 [shape = 'u8[262144]{0}', space=vmem, size = 0x40000, scoped, tag = 'input window, operand 4, single buffered']
    #allocation11 [shape = 's32[1]{0}', space=sflag, size = 0x4, scoped, tag = 'scoped memory for tpu_custom_call.1']
    #allocation12 [shape = 'u8[262144]{0}', space=vmem, size = 0x40000, scoped, tag = 'input window, operand 5, single buffered']
    #allocation13 [shape = 'u8[65536]{0}', space=vmem, size = 0x10000, scoped, tag = 'input window, operand 7, single buffered']
    #allocation14 [shape = 's32[1]{0}', space=sflag, size = 0x4, scoped, tag = 'scoped memory for tpu_custom_call.1']
    #allocation15 [shape = 'u8[4096]{0}', space=vmem, size = 0x1000, scoped, tag = 'output window, operand 0, single buffered']
    %14 = vsyncpa [#allocation5], 0
    %15 = vsyncpa [#allocation8], 0
    %16 = vsyncpa [#allocation11], 0
    %17 = vsyncpa [#allocation14], 0
    %18 = vsyncpa [#allocation6], 0
    // Predicated region
    $region2: #{tpu_custom_call.1} parent=1 // pred_check
      _
    $region3: #{tpu_custom_call.1} parent=1 // pred_check_branch
      %20 = sbr.rel (0) target = $region5
    $region4: #{tpu_custom_call.1} parent=1 // pred_region
      %s22 = ssub.s32 1024, 1024
      %23 = vsyncadd [#allocation5], %s22
      %s24 = sshll.u32 [#allocation4], 4
      %s25 = int_to_ptr.vmem [resolvable:$true] %s24
      %30 = dma.hbm_to_vmem [thread:$0]  %s0, 1024, %s25, [#allocation5], 128, 128, 8
    $region5: #{tpu_custom_call.1} parent=1 // pred_fallthru
      _
    // Predicated region
    $region6: #{tpu_custom_call.1} parent=1 // pred_check
      _
    $region7: #{tpu_custom_call.1} parent=1 // pred_check_branch
      %32 = sbr.rel (0) target = $region9
    $region8: #{tpu_custom_call.1} parent=1 // pred_region
      %s34 = ssub.s32 8192, 8192
      %35 = vsyncadd [#allocation8], %s34
      %s36 = sshll.u32 [#allocation7], 4
      %s37 = int_to_ptr.vmem [resolvable:$true] %s36
      %42 = dma.hbm_to_vmem [thread:$0]  %s1, 8192, %s37, [#allocation8], 512, 512, 32
    $region9: #{tpu_custom_call.1} parent=1 // pred_fallthru
      _
    // Predicated region
    $region10: #{tpu_custom_call.1} parent=1 // pred_check
      _
    $region11: #{tpu_custom_call.1} parent=1 // pred_check_branch
      %44 = sbr.rel (0) target = $region13
    $region12: #{tpu_custom_call.1} parent=1 // pred_region
      %s46 = ssub.s32 8192, 8192
      %47 = vsyncadd [#allocation8], %s46
      %s48 = sshll.u32 [#allocation9], 4
      %s49 = int_to_ptr.vmem [resolvable:$true] %s48
      %54 = dma.hbm_to_vmem [thread:$0]  %s2, 8192, %s49, [#allocation8], 512, 512, 32
    $region13: #{tpu_custom_call.1} parent=1 // pred_fallthru
      _
    // Predicated region
    $region14: #{tpu_custom_call.1} parent=1 // pred_check
      _
    $region15: #{tpu_custom_call.1} parent=1 // pred_check_branch
      %56 = sbr.rel (0) target = $region17
    $region16: #{tpu_custom_call.1} parent=1 // pred_region
      _
    $region17: #{tpu_custom_call.1} parent=1 // pred_fallthru
      _
    // Predicated region
    $region18: #{tpu_custom_call.1} parent=1 // pred_check
      _
    $region19: #{tpu_custom_call.1} parent=1 // pred_check_branch
      %58 = sbr.rel (0) target = $region21
    $region20: #{tpu_custom_call.1} parent=1 // pred_region
      %s60 = ssub.s32 8192, 8192
      %61 = vsyncadd [#allocation11], %s60
      %s62 = sshll.u32 [#allocation10], 4
      %s63 = int_to_ptr.vmem [resolvable:$true] %s62
      %68 = dma.hbm_to_vmem [thread:$0]  %s4, 8192, %s63, [#allocation11], 512, 512, 32
    $region21: #{tpu_custom_call.1} parent=1 // pred_fallthru
      _
    // Predicated region
    $region22: #{tpu_custom_call.1} parent=1 // pred_check
      _
    $region23: #{tpu_custom_call.1} parent=1 // pred_check_branch
      %70 = sbr.rel (0) target = $region25
    $region24: #{tpu_custom_call.1} parent=1 // pred_region
      %s72 = ssub.s32 8192, 8192
      %73 = vsyncadd [#allocation11], %s72
      %s74 = sshll.u32 [#allocation12], 4
      %s75 = int_to_ptr.vmem [resolvable:$true] %s74
      %80 = dma.hbm_to_vmem [thread:$0]  %s5, 8192, %s75, [#allocation11], 512, 512, 32
    $region25: #{tpu_custom_call.1} parent=1 // pred_fallthru
      _
    // Predicated region
    $region26: #{tpu_custom_call.1} parent=1 // pred_check
      _
    $region27: #{tpu_custom_call.1} parent=1 // pred_check_branch
      %82 = sbr.rel (0) target = $region29
    $region28: #{tpu_custom_call.1} parent=1 // pred_region
      _
    $region29: #{tpu_custom_call.1} parent=1 // pred_fallthru
      _
    // Predicated region
    $region30: #{tpu_custom_call.1} parent=1 // pred_check
      _
    $region31: #{tpu_custom_call.1} parent=1 // pred_check_branch
      %84 = sbr.rel (0) target = $region33
    $region32: #{tpu_custom_call.1} parent=1 // pred_region
      %s86 = ssub.s32 2048, 2048
      %87 = vsyncadd [#allocation14], %s86
      %s88 = sshll.u32 [#allocation13], 4
      %s89 = int_to_ptr.vmem [resolvable:$true] %s88
      %94 = dma.hbm_to_vmem [thread:$0]  %s7, 2048, %s89, [#allocation14], 128, 128, 8
    $region33: #{tpu_custom_call.1} parent=1 // pred_fallthru
      _
    // Predicated region
    $region34: #{tpu_custom_call.1} parent=1 // pred_check
      _
    $region35: #{tpu_custom_call.1} parent=1 // pred_check_branch
      %96 = sbr.rel (0) target = $region37
    $region36: #{tpu_custom_call.1} parent=1 // pred_region
      _
    $region37: #{tpu_custom_call.1} parent=1 // pred_fallthru
      _
    // Predicated region
    $region38: #{tpu_custom_call.1} parent=1 // pred_check
      _
    $region39: #{tpu_custom_call.1} parent=1 // pred_check_branch
      %98 = sbr.rel (0) target = $region41
    $region40: #{tpu_custom_call.1} parent=1 // pred_region
      %99 = dma.done [#allocation5], 1024
    $region41: #{tpu_custom_call.1} parent=1 // pred_fallthru
      _
    // Predicated region
    $region42: #{tpu_custom_call.1} parent=1 // pred_check
      _
    $region43: #{tpu_custom_call.1} parent=1 // pred_check_branch
      %101 = sbr.rel (0) target = $region45
    $region44: #{tpu_custom_call.1} parent=1 // pred_region
      %102 = dma.done [#allocation8], 8192
    $region45: #{tpu_custom_call.1} parent=1 // pred_fallthru
      _
    // Predicated region
    $region46: #{tpu_custom_call.1} parent=1 // pred_check
      _
    $region47: #{tpu_custom_call.1} parent=1 // pred_check_branch
      %104 = sbr.rel (0) target = $region49
    $region48: #{tpu_custom_call.1} parent=1 // pred_region
      %105 = dma.done [#allocation8], 8192
    $region49: #{tpu_custom_call.1} parent=1 // pred_fallthru
      _
    // Predicated region
    $region50: #{tpu_custom_call.1} parent=1 // pred_check
      _
    $region51: #{tpu_custom_call.1} parent=1 // pred_check_branch
      %107 = sbr.rel (0) target = $region53
    $region52: #{tpu_custom_call.1} parent=1 // pred_region
      %108 = dma.done [#allocation11], 8192
    $region53: #{tpu_custom_call.1} parent=1 // pred_fallthru
      _
    // Predicated region
    $region54: #{tpu_custom_call.1} parent=1 // pred_check
      _
    $region55: #{tpu_custom_call.1} parent=1 // pred_check_branch
      %110 = sbr.rel (0) target = $region57
    $region56: #{tpu_custom_call.1} parent=1 // pred_region
      %111 = dma.done [#allocation11], 8192
    $region57: #{tpu_custom_call.1} parent=1 // pred_fallthru
      _
    // Predicated region
    $region58: #{tpu_custom_call.1} parent=1 // pred_check
      _
    $region59: #{tpu_custom_call.1} parent=1 // pred_check_branch
      %113 = sbr.rel (0) target = $region61
    $region60: #{tpu_custom_call.1} parent=1 // pred_region
      %114 = dma.done [#allocation14], 2048
    $region61: #{tpu_custom_call.1} parent=1 // pred_fallthru
      _
    %v115 = vld [vmem:[#allocation4] sm:$0xff]
    %v116 = vld [vmem:[#allocation4 + $0x8] sm:$0xff]
    %v117 = vld [vmem:[#allocation4 + $0x10] sm:$0xff]
    %v118 = vld [vmem:[#allocation4 + $0x18] sm:$0xff]
    %v119 = vld [vmem:[#allocation4 + $0x20] sm:$0xff]
    %v120 = vld [vmem:[#allocation4 + $0x28] sm:$0xff]
    %v121 = vld [vmem:[#allocation4 + $0x30] sm:$0xff]
    %v122 = vld [vmem:[#allocation4 + $0x38] sm:$0xff]
    %v123 = vld [vmem:[#allocation7] sm:$0xff]
    %v124 = vld [vmem:[#allocation7 + $0x8] sm:$0xff]
    %v125 = vld [vmem:[#allocation7 + $0x10] sm:$0xff]
    %v126 = vld [vmem:[#allocation7 + $0x18] sm:$0xff]
    %v127 = vld [vmem:[#allocation7 + $0x20] sm:$0xff]
    %v128 = vld [vmem:[#allocation7 + $0x28] sm:$0xff]
    %v129 = vld [vmem:[#allocation7 + $0x30] sm:$0xff]
    %v130 = vld [vmem:[#allocation7 + $0x38] sm:$0xff]
    %v131 = vld [vmem:[#allocation7 + $0x40] sm:$0xff]
    %v132 = vld [vmem:[#allocation7 + $0x48] sm:$0xff]
    %v133 = vld [vmem:[#allocation7 + $0x50] sm:$0xff]
    %v134 = vld [vmem:[#allocation7 + $0x58] sm:$0xff]
    %v135 = vld [vmem:[#allocation7 + $0x60] sm:$0xff]
    %v136 = vld [vmem:[#allocation7 + $0x68] sm:$0xff]
    %v137 = vld [vmem:[#allocation7 + $0x70] sm:$0xff]
    %v138 = vld [vmem:[#allocation7 + $0x78] sm:$0xff]
    %v139 = vld [vmem:[#allocation7 + $0x80] sm:$0xff]
    %v140 = vld [vmem:[#allocation7 + $0x88] sm:$0xff]
    %v141 = vld [vmem:[#allocation7 + $0x90] sm:$0xff]
    %v142 = vld [vmem:[#allocation7 + $0x98] sm:$0xff]
    %v143 = vld [vmem:[#allocation7 + $0xa0] sm:$0xff]
    %v144 = vld [vmem:[#allocation7 + $0xa8] sm:$0xff]
    %v145 = vld [vmem:[#allocation7 + $0xb0] sm:$0xff]
    %v146 = vld [vmem:[#allocation7 + $0xb8] sm:$0xff]
    %v147 = vld [vmem:[#allocation7 + $0xc0] sm:$0xff]
    %v148 = vld [vmem:[#allocation7 + $0xc8] sm:$0xff]
    %v149 = vld [vmem:[#allocation7 + $0xd0] sm:$0xff]
    %v150 = vld [vmem:[#allocation7 + $0xd8] sm:$0xff]
    %v151 = vld [vmem:[#allocation7 + $0xe0] sm:$0xff]
    %v152 = vld [vmem:[#allocation7 + $0xe8] sm:$0xff]
    %v153 = vld [vmem:[#allocation7 + $0xf0] sm:$0xff]
    %v154 = vld [vmem:[#allocation7 + $0xf8] sm:$0xff]
    %v155 = vld [vmem:[#allocation7 + $0x100] sm:$0xff]
    %v156 = vld [vmem:[#allocation7 + $0x108] sm:$0xff]
    %v157 = vld [vmem:[#allocation7 + $0x110] sm:$0xff]
    %v158 = vld [vmem:[#allocation7 + $0x118] sm:$0xff]
    %v159 = vld [vmem:[#allocation7 + $0x120] sm:$0xff]
    %v160 = vld [vmem:[#allocation7 + $0x128] sm:$0xff]
    %v161 = vld [vmem:[#allocation7 + $0x130] sm:$0xff]
    %v162 = vld [vmem:[#allocation7 + $0x138] sm:$0xff]
    %v163 = vld [vmem:[#allocation7 + $0x140] sm:$0xff]
    %v164 = vld [vmem:[#allocation7 + $0x148] sm:$0xff]
    %v165 = vld [vmem:[#allocation7 + $0x150] sm:$0xff]
    %v166 = vld [vmem:[#allocation7 + $0x158] sm:$0xff]
    %v167 = vld [vmem:[#allocation7 + $0x160] sm:$0xff]
    %v168 = vld [vmem:[#allocation7 + $0x168] sm:$0xff]
    %v169 = vld [vmem:[#allocation7 + $0x170] sm:$0xff]
    %v170 = vld [vmem:[#allocation7 + $0x178] sm:$0xff]
    %v171 = vld [vmem:[#allocation7 + $0x180] sm:$0xff]
    %v172 = vld [vmem:[#allocation7 + $0x188] sm:$0xff]
    %v173 = vld [vmem:[#allocation7 + $0x190] sm:$0xff]
    %v174 = vld [vmem:[#allocation7 + $0x198] sm:$0xff]
    %v175 = vld [vmem:[#allocation7 + $0x1a0] sm:$0xff]
    %v176 = vld [vmem:[#allocation7 + $0x1a8] sm:$0xff]
    %v177 = vld [vmem:[#allocation7 + $0x1b0] sm:$0xff]
    %v178 = vld [vmem:[#allocation7 + $0x1b8] sm:$0xff]
    %v179 = vld [vmem:[#allocation7 + $0x1c0] sm:$0xff]
    %v180 = vld [vmem:[#allocation7 + $0x1c8] sm:$0xff]
    %v181 = vld [vmem:[#allocation7 + $0x1d0] sm:$0xff]
    %v182 = vld [vmem:[#allocation7 + $0x1d8] sm:$0xff]
    %v183 = vld [vmem:[#allocation7 + $0x1e0] sm:$0xff]
    %v184 = vld [vmem:[#allocation7 + $0x1e8] sm:$0xff]
    %v185 = vld [vmem:[#allocation7 + $0x1f0] sm:$0xff]
    %v186 = vld [vmem:[#allocation7 + $0x1f8] sm:$0xff]
    %v187 = vld [vmem:[%s3] sm:$0xf]
    %v189 = vlaneseq
    %v190 = vshrl.u32 %v189, 7
    %v191 = vsub.s32 0, %v190
    %v192 = vrot.slane %v187, %v191
    %v193 = vlaneseq
    %v194 = vshrl.u32 %v193, 7
    %v195 = vsub.s32 1, %v194
    %v196 = vrot.slane %v187, %v195
    %v197 = vlaneseq
    %v198 = vshrl.u32 %v197, 7
    %v199 = vsub.s32 2, %v198
    %v200 = vrot.slane %v187, %v199
    %v201 = vlaneseq
    %v202 = vshrl.u32 %v201, 7
    %v203 = vsub.s32 3, %v202
    %v204 = vrot.slane %v187, %v203
    %209 = vmatprep.subr.mxu0 %v184
    %210 = vmatpush1.msra.mxu0 %v183
    %211 = vmatprep.subr.mxu0 %v180
    %212 = vmatpush1.msra.mxu0 %v179
    %213 = vmatprep.subr.mxu0 %v176
    %214 = vmatpush1.msra.mxu0 %v175
    %215 = vmatprep.subr.mxu0 %v172
    %216 = vmatpush1.msra.mxu0 %v171
    %217 = vmatprep.subr.mxu0 %v168
    %218 = vmatpush1.msra.mxu0 %v167
    %219 = vmatprep.subr.mxu0 %v164
    %220 = vmatpush1.msra.mxu0 %v163
    %221 = vmatprep.subr.mxu0 %v160
    %222 = vmatpush1.msra.mxu0 %v159
    %223 = vmatprep.subr.mxu0 %v156
    %224 = vmatpush1.msra.mxu0 %v155
    %225 = vmatprep.subr.mxu0 %v152
    %226 = vmatpush1.msra.mxu0 %v151
    %227 = vmatprep.subr.mxu0 %v148
    %228 = vmatpush1.msra.mxu0 %v147
    %229 = vmatprep.subr.mxu0 %v144
    %230 = vmatpush1.msra.mxu0 %v143
    %231 = vmatprep.subr.mxu0 %v140
    %232 = vmatpush1.msra.mxu0 %v139
    %233 = vmatprep.subr.mxu0 %v136
    %234 = vmatpush1.msra.mxu0 %v135
    %235 = vmatprep.subr.mxu0 %v132
    %236 = vmatpush1.msra.mxu0 %v131
    %237 = vmatprep.subr.mxu0 %v128
    %238 = vmatpush1.msra.mxu0 %v127
    %239 = vmatprep.subr.mxu0 %v124
    %240 = vmatpush1.msra.mxu0 %v123
    %241 = vmatprep.subr.mxu0 0.0
    %242 = vmatpush2.msra.mxu0 0.0
    %243 = vmatprep.subr.mxu0 0.0
    %244 = vmatpush2.msra.mxu0 0.0
    %245 = vmatprep.subr.mxu0 0.0
    %246 = vmatpush2.msra.mxu0 0.0
    %247 = vmatprep.subr.mxu0 0.0
    %248 = vmatpush2.msra.mxu0 0.0
    %249 = vmatprep.subr.mxu0 0.0
    %250 = vmatpush2.msra.mxu0 0.0
    %251 = vmatprep.subr.mxu0 0.0
    %252 = vmatpush2.msra.mxu0 0.0
    %253 = vmatprep.subr.mxu0 0.0
    %254 = vmatpush2.msra.mxu0 0.0
    %255 = vmatprep.subr.mxu0 0.0
    %256 = vmatpush2.msra.mxu0 0.0
    %257 = vmatprep.subr.mxu0 0.0
    %258 = vmatpush2.msra.mxu0 0.0
    %259 = vmatprep.subr.mxu0 0.0
    %260 = vmatpush2.msra.mxu0 0.0
    %261 = vmatprep.subr.mxu0 0.0
    %262 = vmatpush2.msra.mxu0 0.0
    %263 = vmatprep.subr.mxu0 0.0
    %264 = vmatpush2.msra.mxu0 0.0
    %265 = vmatprep.subr.mxu0 0.0
    %266 = vmatpush2.msra.mxu0 0.0
    %267 = vmatprep.subr.mxu0 0.0
    %268 = vmatpush2.msra.mxu0 0.0
    %269 = vmatprep.subr.mxu0 0.0
    %270 = vmatpush2.msra.mxu0 0.0
    %271 = vmatprep.subr.mxu0 0.0
    %272 = vmatpush2.msra.mxu0 0.0
    %273 = vmatprep.mubr.f32.mxu0 0.0
    %274 = vmatmul.mubr.f32.gmra.mxu0 %v115
    %v275 = vpop.f32.mrf.mxu0
    %v276 = vadd.f32 %v192, %v275
    %v277 = vpop.f32.mrf.mxu0
    %v278 = vadd.f32 %v196, %v277
    %279 = vmatprep.mubr.f32.mxu0 0.0
    %280 = vmatmul.mubr.f32.gmra.mxu0 %v116
    %v281 = vpop.f32.mrf.mxu0
    %v282 = vadd.f32 %v192, %v281
    %v283 = vpop.f32.mrf.mxu0
    %v284 = vadd.f32 %v196, %v283
    %285 = vmatprep.mubr.f32.mxu0 0.0
    %286 = vmatmul.mubr.f32.gmra.mxu0 %v117
    %v287 = vpop.f32.mrf.mxu0
    %v288 = vadd.f32 %v192, %v287
    %v289 = vpop.f32.mrf.mxu0
    %v290 = vadd.f32 %v196, %v289
    %291 = vmatprep.mubr.f32.mxu0 0.0
    %292 = vmatmul.mubr.f32.gmra.mxu0 %v118
    %v293 = vpop.f32.mrf.mxu0
    %v294 = vadd.f32 %v192, %v293
    %v295 = vpop.f32.mrf.mxu0
    %v296 = vadd.f32 %v196, %v295
    %297 = vmatprep.mubr.f32.mxu0 0.0
    %298 = vmatmul.mubr.f32.gmra.mxu0 %v119
    %v299 = vpop.f32.mrf.mxu0
    %v300 = vadd.f32 %v192, %v299
    %v301 = vpop.f32.mrf.mxu0
    %v302 = vadd.f32 %v196, %v301
    %303 = vmatprep.mubr.f32.mxu0 0.0
    %304 = vmatmul.mubr.f32.gmra.mxu0 %v120
    %v305 = vpop.f32.mrf.mxu0
    %v306 = vadd.f32 %v192, %v305
    %v307 = vpop.f32.mrf.mxu0
    %v308 = vadd.f32 %v196, %v307
    %309 = vmatprep.mubr.f32.mxu0 0.0
    %310 = vmatmul.mubr.f32.gmra.mxu0 %v121
    %v311 = vpop.f32.mrf.mxu0
    %v312 = vadd.f32 %v192, %v311
    %v313 = vpop.f32.mrf.mxu0
    %v314 = vadd.f32 %v196, %v313
    %315 = vmatprep.mubr.f32.mxu0 0.0
    %316 = vmatmul.mubr.f32.gmra.mxu0 %v122
    %v317 = vpop.f32.mrf.mxu0
    %v318 = vadd.f32 %v192, %v317
    %v319 = vpop.f32.mrf.mxu0
    %v320 = vadd.f32 %v196, %v319
    %321 = vdwg.mxu0
    %322 = vmatprep.subr.mxu0 %v186
    %323 = vmatpush1.msra.mxu0 %v185
    %324 = vmatprep.subr.mxu0 %v182
    %325 = vmatpush1.msra.mxu0 %v181
    %326 = vmatprep.subr.mxu0 %v178
    %327 = vmatpush1.msra.mxu0 %v177
    %328 = vmatprep.subr.mxu0 %v174
    %329 = vmatpush1.msra.mxu0 %v173
    %330 = vmatprep.subr.mxu0 %v170
    %331 = vmatpush1.msra.mxu0 %v169
    %332 = vmatprep.subr.mxu0 %v166
    %333 = vmatpush1.msra.mxu0 %v165
    %334 = vmatprep.subr.mxu0 %v162
    %335 = vmatpush1.msra.mxu0 %v161
    %336 = vmatprep.subr.mxu0 %v158
    %337 = vmatpush1.msra.mxu0 %v157
    %338 = vmatprep.subr.mxu0 %v154
    %339 = vmatpush1.msra.mxu0 %v153
    %340 = vmatprep.subr.mxu0 %v150
    %341 = vmatpush1.msra.mxu0 %v149
    %342 = vmatprep.subr.mxu0 %v146
    %343 = vmatpush1.msra.mxu0 %v145
    %344 = vmatprep.subr.mxu0 %v142
    %345 = vmatpush1.msra.mxu0 %v141
    %346 = vmatprep.subr.mxu0 %v138
    %347 = vmatpush1.msra.mxu0 %v137
    %348 = vmatprep.subr.mxu0 %v134
    %349 = vmatpush1.msra.mxu0 %v133
    %350 = vmatprep.subr.mxu0 %v130
    %351 = vmatpush1.msra.mxu0 %v129
    %352 = vmatprep.subr.mxu0 %v126
    %353 = vmatpush1.msra.mxu0 %v125
    %354 = vmatprep.subr.mxu0 0.0
    %355 = vmatpush2.msra.mxu0 0.0
    %356 = vmatprep.subr.mxu0 0.0
    %357 = vmatpush2.msra.mxu0 0.0
    %358 = vmatprep.subr.mxu0 0.0
    %359 = vmatpush2.msra.mxu0 0.0
    %360 = vmatprep.subr.mxu0 0.0
    %361 = vmatpush2.msra.mxu0 0.0
    %362 = vmatprep.subr.mxu0 0.0
    %363 = vmatpush2.msra.mxu0 0.0
    %364 = vmatprep.subr.mxu0 0.0
    %365 = vmatpush2.msra.mxu0 0.0
    %366 = vmatprep.subr.mxu0 0.0
    %367 = vmatpush2.msra.mxu0 0.0
    %368 = vmatprep.subr.mxu0 0.0
    %369 = vmatpush2.msra.mxu0 0.0
    %370 = vmatprep.subr.mxu0 0.0
    %371 = vmatpush2.msra.mxu0 0.0
    %372 = vmatprep.subr.mxu0 0.0
    %373 = vmatpush2.msra.mxu0 0.0
    %374 = vmatprep.subr.mxu0 0.0
    %375 = vmatpush2.msra.mxu0 0.0
    %376 = vmatprep.subr.mxu0 0.0
    %377 = vmatpush2.msra.mxu0 0.0
    %378 = vmatprep.subr.mxu0 0.0
    %379 = vmatpush2.msra.mxu0 0.0
    %380 = vmatprep.subr.mxu0 0.0
    %381 = vmatpush2.msra.mxu0 0.0
    %382 = vmatprep.subr.mxu0 0.0
    %383 = vmatpush2.msra.mxu0 0.0
    %384 = vmatprep.subr.mxu0 0.0
    %385 = vmatpush2.msra.mxu0 0.0
    %386 = vmatprep.mubr.f32.mxu0 0.0
    %387 = vmatmul.mubr.f32.gmra.mxu0 %v115
    %v388 = vpop.f32.mrf.mxu0
    %v389 = vadd.f32 %v200, %v388
    %v390 = vpop.f32.mrf.mxu0
    %v391 = vadd.f32 %v204, %v390
    %392 = vmatprep.mubr.f32.mxu0 0.0
    %393 = vmatmul.mubr.f32.gmra.mxu0 %v116
    %v394 = vpop.f32.mrf.mxu0
    %v395 = vadd.f32 %v200, %v394
    %v396 = vpop.f32.mrf.mxu0
    %v397 = vadd.f32 %v204, %v396
    %398 = vmatprep.mubr.f32.mxu0 0.0
    %399 = vmatmul.mubr.f32.gmra.mxu0 %v117
    %v400 = vpop.f32.mrf.mxu0
    %v401 = vadd.f32 %v200, %v400
    %v402 = vpop.f32.mrf.mxu0
    %v403 = vadd.f32 %v204, %v402
    %404 = vmatprep.mubr.f32.mxu0 0.0
    %405 = vmatmul.mubr.f32.gmra.mxu0 %v118
    %v406 = vpop.f32.mrf.mxu0
    %v407 = vadd.f32 %v200, %v406
    %v408 = vpop.f32.mrf.mxu0
    %v409 = vadd.f32 %v204, %v408
    %410 = vmatprep.mubr.f32.mxu0 0.0
    %411 = vmatmul.mubr.f32.gmra.mxu0 %v119
    %v412 = vpop.f32.mrf.mxu0
    %v413 = vadd.f32 %v200, %v412
    %v414 = vpop.f32.mrf.mxu0
    %v415 = vadd.f32 %v204, %v414
    %416 = vmatprep.mubr.f32.mxu0 0.0
    %417 = vmatmul.mubr.f32.gmra.mxu0 %v120
    %v418 = vpop.f32.mrf.mxu0
    %v419 = vadd.f32 %v200, %v418
    %v420 = vpop.f32.mrf.mxu0
    %v421 = vadd.f32 %v204, %v420
    %422 = vmatprep.mubr.f32.mxu0 0.0
    %423 = vmatmul.mubr.f32.gmra.mxu0 %v121
    %v424 = vpop.f32.mrf.mxu0
    %v425 = vadd.f32 %v200, %v424
    %v426 = vpop.f32.mrf.mxu0
    %v427 = vadd.f32 %v204, %v426
    %428 = vmatprep.mubr.f32.mxu0 0.0
    %429 = vmatmul.mubr.f32.gmra.mxu0 %v122
    %v430 = vpop.f32.mrf.mxu0
    %v431 = vadd.f32 %v200, %v430
    %v432 = vpop.f32.mrf.mxu0
    %v433 = vadd.f32 %v204, %v432
    %434 = vdwg.mxu0
    %435 = vst [vmem:[#allocation3] sm:$0xff] %v276
    %436 = vst [vmem:[#allocation3 + $0x8] sm:$0xff] %v278
    %437 = vst [vmem:[#allocation3 + $0x10] sm:$0xff] %v389
    %438 = vst [vmem:[#allocation3 + $0x18] sm:$0xff] %v391
    %439 = vst [vmem:[#allocation3 + $0x20] sm:$0xff] %v282
    %440 = vst [vmem:[#allocation3 + $0x28] sm:$0xff] %v284
    %441 = vst [vmem:[#allocation3 + $0x30] sm:$0xff] %v395
    %442 = vst [vmem:[#allocation3 + $0x38] sm:$0xff] %v397
    %443 = vst [vmem:[#allocation3 + $0x40] sm:$0xff] %v288
    %444 = vst [vmem:[#allocation3 + $0x48] sm:$0xff] %v290
    %445 = vst [vmem:[#allocation3 + $0x50] sm:$0xff] %v401
    %446 = vst [vmem:[#allocation3 + $0x58] sm:$0xff] %v403
    %447 = vst [vmem:[#allocation3 + $0x60] sm:$0xff] %v294
    %448 = vst [vmem:[#allocation3 + $0x68] sm:$0xff] %v296
    %449 = vst [vmem:[#allocation3 + $0x70] sm:$0xff] %v407
    %450 = vst [vmem:[#allocation3 + $0x78] sm:$0xff] %v409
    %451 = vst [vmem:[#allocation3 + $0x80] sm:$0xff] %v300
    %452 = vst [vmem:[#allocation3 + $0x88] sm:$0xff] %v302
    %453 = vst [vmem:[#allocation3 + $0x90] sm:$0xff] %v413
    %454 = vst [vmem:[#allocation3 + $0x98] sm:$0xff] %v415
    %455 = vst [vmem:[#allocation3 + $0xa0] sm:$0xff] %v306
    %456 = vst [vmem:[#allocation3 + $0xa8] sm:$0xff] %v308
    %457 = vst [vmem:[#allocation3 + $0xb0] sm:$0xff] %v419
    %458 = vst [vmem:[#allocation3 + $0xb8] sm:$0xff] %v421
    %459 = vst [vmem:[#allocation3 + $0xc0] sm:$0xff] %v312
    %460 = vst [vmem:[#allocation3 + $0xc8] sm:$0xff] %v314
    %461 = vst [vmem:[#allocation3 + $0xd0] sm:$0xff] %v425
    %462 = vst [vmem:[#allocation3 + $0xd8] sm:$0xff] %v427
    %463 = vst [vmem:[#allocation3 + $0xe0] sm:$0xff] %v318
    %464 = vst [vmem:[#allocation3 + $0xe8] sm:$0xff] %v320
    %465 = vst [vmem:[#allocation3 + $0xf0] sm:$0xff] %v431
    %466 = vst [vmem:[#allocation3 + $0xf8] sm:$0xff] %v433
    %v467 = vld [vmem:[#allocation9] sm:$0xff]
    %v468 = vld [vmem:[#allocation9 + $0x8] sm:$0xff]
    %v469 = vld [vmem:[#allocation9 + $0x10] sm:$0xff]
    %v470 = vld [vmem:[#allocation9 + $0x18] sm:$0xff]
    %v471 = vld [vmem:[#allocation9 + $0x20] sm:$0xff]
    %v472 = vld [vmem:[#allocation9 + $0x28] sm:$0xff]
    %v473 = vld [vmem:[#allocation9 + $0x30] sm:$0xff]
    %v474 = vld [vmem:[#allocation9 + $0x38] sm:$0xff]
    %v475 = vld [vmem:[#allocation9 + $0x40] sm:$0xff]
    %v476 = vld [vmem:[#allocation9 + $0x48] sm:$0xff]
    %v477 = vld [vmem:[#allocation9 + $0x50] sm:$0xff]
    %v478 = vld [vmem:[#allocation9 + $0x58] sm:$0xff]
    %v479 = vld [vmem:[#allocation9 + $0x60] sm:$0xff]
    %v480 = vld [vmem:[#allocation9 + $0x68] sm:$0xff]
    %v481 = vld [vmem:[#allocation9 + $0x70] sm:$0xff]
    %v482 = vld [vmem:[#allocation9 + $0x78] sm:$0xff]
    %v483 = vld [vmem:[#allocation9 + $0x80] sm:$0xff]
    %v484 = vld [vmem:[#allocation9 + $0x88] sm:$0xff]
    %v485 = vld [vmem:[#allocation9 + $0x90] sm:$0xff]
    %v486 = vld [vmem:[#allocation9 + $0x98] sm:$0xff]
    %v487 = vld [vmem:[#allocation9 + $0xa0] sm:$0xff]
    %v488 = vld [vmem:[#allocation9 + $0xa8] sm:$0xff]
    %v489 = vld [vmem:[#allocation9 + $0xb0] sm:$0xff]
    %v490 = vld [vmem:[#allocation9 + $0xb8] sm:$0xff]
    %v491 = vld [vmem:[#allocation9 + $0xc0] sm:$0xff]
    %v492 = vld [vmem:[#allocation9 + $0xc8] sm:$0xff]
    %v493 = vld [vmem:[#allocation9 + $0xd0] sm:$0xff]
    %v494 = vld [vmem:[#allocation9 + $0xd8] sm:$0xff]
    %v495 = vld [vmem:[#allocation9 + $0xe0] sm:$0xff]
    %v496 = vld [vmem:[#allocation9 + $0xe8] sm:$0xff]
    %v497 = vld [vmem:[#allocation9 + $0xf0] sm:$0xff]
    %v498 = vld [vmem:[#allocation9 + $0xf8] sm:$0xff]
    %v499 = vld [vmem:[#allocation9 + $0x100] sm:$0xff]
    %v500 = vld [vmem:[#allocation9 + $0x108] sm:$0xff]
    %v501 = vld [vmem:[#allocation9 + $0x110] sm:$0xff]
    %v502 = vld [vmem:[#allocation9 + $0x118] sm:$0xff]
    %v503 = vld [vmem:[#allocation9 + $0x120] sm:$0xff]
    %v504 = vld [vmem:[#allocation9 + $0x128] sm:$0xff]
    %v505 = vld [vmem:[#allocation9 + $0x130] sm:$0xff]
    %v506 = vld [vmem:[#allocation9 + $0x138] sm:$0xff]
    %v507 = vld [vmem:[#allocation9 + $0x140] sm:$0xff]
    %v508 = vld [vmem:[#allocation9 + $0x148] sm:$0xff]
    %v509 = vld [vmem:[#allocation9 + $0x150] sm:$0xff]
    %v510 = vld [vmem:[#allocation9 + $0x158] sm:$0xff]
    %v511 = vld [vmem:[#allocation9 + $0x160] sm:$0xff]
    %v512 = vld [vmem:[#allocation9 + $0x168] sm:$0xff]
    %v513 = vld [vmem:[#allocation9 + $0x170] sm:$0xff]
    %v514 = vld [vmem:[#allocation9 + $0x178] sm:$0xff]
    %v515 = vld [vmem:[#allocation9 + $0x180] sm:$0xff]
    %v516 = vld [vmem:[#allocation9 + $0x188] sm:$0xff]
    %v517 = vld [vmem:[#allocation9 + $0x190] sm:$0xff]
    %v518 = vld [vmem:[#allocation9 + $0x198] sm:$0xff]
    %v519 = vld [vmem:[#allocation9 + $0x1a0] sm:$0xff]
    %v520 = vld [vmem:[#allocation9 + $0x1a8] sm:$0xff]
    %v521 = vld [vmem:[#allocation9 + $0x1b0] sm:$0xff]
    %v522 = vld [vmem:[#allocation9 + $0x1b8] sm:$0xff]
    %v523 = vld [vmem:[#allocation9 + $0x1c0] sm:$0xff]
    %v524 = vld [vmem:[#allocation9 + $0x1c8] sm:$0xff]
    %v525 = vld [vmem:[#allocation9 + $0x1d0] sm:$0xff]
    %v526 = vld [vmem:[#allocation9 + $0x1d8] sm:$0xff]
    %v527 = vld [vmem:[#allocation9 + $0x1e0] sm:$0xff]
    %v528 = vld [vmem:[#allocation9 + $0x1e8] sm:$0xff]
    %v529 = vld [vmem:[#allocation9 + $0x1f0] sm:$0xff]
    %v530 = vld [vmem:[#allocation9 + $0x1f8] sm:$0xff]
    %v531 = vld [vmem:[#allocation3] sm:$0xff]
    %v532 = vld [vmem:[#allocation3 + $0x8] sm:$0xff]
    %v533 = vld [vmem:[#allocation3 + $0x10] sm:$0xff]
    %v534 = vld [vmem:[#allocation3 + $0x18] sm:$0xff]
    %535 = vmatprep.subr.mxu0 %v528
    %536 = vmatpush1.msra.mxu0 %v527
    %537 = vmatprep.subr.mxu0 %v524
    %538 = vmatpush1.msra.mxu0 %v523
    %539 = vmatprep.subr.mxu0 %v520
    %540 = vmatpush1.msra.mxu0 %v519
    %541 = vmatprep.subr.mxu0 %v516
    %542 = vmatpush1.msra.mxu0 %v515
    %543 = vmatprep.subr.mxu0 %v512
    %544 = vmatpush1.msra.mxu0 %v511
    %545 = vmatprep.subr.mxu0 %v508
    %546 = vmatpush1.msra.mxu0 %v507
    %547 = vmatprep.subr.mxu0 %v504
    %548 = vmatpush1.msra.mxu0 %v503
    %549 = vmatprep.subr.mxu0 %v500
    %550 = vmatpush1.msra.mxu0 %v499
    %551 = vmatprep.subr.mxu0 %v496
    %552 = vmatpush1.msra.mxu0 %v495
    %553 = vmatprep.subr.mxu0 %v492
    %554 = vmatpush1.msra.mxu0 %v491
    %555 = vmatprep.subr.mxu0 %v488
    %556 = vmatpush1.msra.mxu0 %v487
    %557 = vmatprep.subr.mxu0 %v484
    %558 = vmatpush1.msra.mxu0 %v483
    %559 = vmatprep.subr.mxu0 %v480
    %560 = vmatpush1.msra.mxu0 %v479
    %561 = vmatprep.subr.mxu0 %v476
    %562 = vmatpush1.msra.mxu0 %v475
    %563 = vmatprep.subr.mxu0 %v472
    %564 = vmatpush1.msra.mxu0 %v471
    %565 = vmatprep.subr.mxu0 %v468
    %566 = vmatpush1.msra.mxu0 %v467
    %567 = vmatprep.subr.mxu0 0.0
    %568 = vmatpush2.msra.mxu0 0.0
    %569 = vmatprep.subr.mxu0 0.0
    %570 = vmatpush2.msra.mxu0 0.0
    %571 = vmatprep.subr.mxu0 0.0
    %572 = vmatpush2.msra.mxu0 0.0
    %573 = vmatprep.subr.mxu0 0.0
    %574 = vmatpush2.msra.mxu0 0.0
    %575 = vmatprep.subr.mxu0 0.0
    %576 = vmatpush2.msra.mxu0 0.0
    %577 = vmatprep.subr.mxu0 0.0
    %578 = vmatpush2.msra.mxu0 0.0
    %579 = vmatprep.subr.mxu0 0.0
    %580 = vmatpush2.msra.mxu0 0.0
    %581 = vmatprep.subr.mxu0 0.0
    %582 = vmatpush2.msra.mxu0 0.0
    %583 = vmatprep.subr.mxu0 0.0
    %584 = vmatpush2.msra.mxu0 0.0
    %585 = vmatprep.subr.mxu0 0.0
    %586 = vmatpush2.msra.mxu0 0.0
    %587 = vmatprep.subr.mxu0 0.0
    %588 = vmatpush2.msra.mxu0 0.0
    %589 = vmatprep.subr.mxu0 0.0
    %590 = vmatpush2.msra.mxu0 0.0
    %591 = vmatprep.subr.mxu0 0.0
    %592 = vmatpush2.msra.mxu0 0.0
    %593 = vmatprep.subr.mxu0 0.0
    %594 = vmatpush2.msra.mxu0 0.0
    %595 = vmatprep.subr.mxu0 0.0
    %596 = vmatpush2.msra.mxu0 0.0
    %597 = vmatprep.subr.mxu0 0.0
    %598 = vmatpush2.msra.mxu0 0.0
    %599 = vmatprep.mubr.f32.mxu0 0.0
    %600 = vmatmul.mubr.f32.gmra.mxu0 0.0
    %v601 = vpop.f32.mrf.mxu0
    %v602 = vadd.f32 0.0, %v601
    %v603 = vpop.f32.mrf.mxu0
    %v604 = vadd.f32 0.0, %v603
    %605 = vdwg.mxu0
    %606 = vmatprep.subr.mxu0 %v530
    %607 = vmatpush1.msra.mxu0 %v529
    %608 = vmatprep.subr.mxu0 %v526
    %609 = vmatpush1.msra.mxu0 %v525
    %610 = vmatprep.subr.mxu0 %v522
    %611 = vmatpush1.msra.mxu0 %v521
    %612 = vmatprep.subr.mxu0 %v518
    %613 = vmatpush1.msra.mxu0 %v517
    %614 = vmatprep.subr.mxu0 %v514
    %615 = vmatpush1.msra.mxu0 %v513
    %616 = vmatprep.subr.mxu0 %v510
    %617 = vmatpush1.msra.mxu0 %v509
    %618 = vmatprep.subr.mxu0 %v506
    %619 = vmatpush1.msra.mxu0 %v505
    %620 = vmatprep.subr.mxu0 %v502
    %621 = vmatpush1.msra.mxu0 %v501
    %622 = vmatprep.subr.mxu0 %v498
    %623 = vmatpush1.msra.mxu0 %v497
    %624 = vmatprep.subr.mxu0 %v494
    %625 = vmatpush1.msra.mxu0 %v493
    %626 = vmatprep.subr.mxu0 %v490
    %627 = vmatpush1.msra.mxu0 %v489
    %628 = vmatprep.subr.mxu0 %v486
    %629 = vmatpush1.msra.mxu0 %v485
    %630 = vmatprep.subr.mxu0 %v482
    %631 = vmatpush1.msra.mxu0 %v481
    %632 = vmatprep.subr.mxu0 %v478
    %633 = vmatpush1.msra.mxu0 %v477
    %634 = vmatprep.subr.mxu0 %v474
    %635 = vmatpush1.msra.mxu0 %v473
    %636 = vmatprep.subr.mxu0 %v470
    %637 = vmatpush1.msra.mxu0 %v469
    %638 = vmatprep.subr.mxu0 0.0
    %639 = vmatpush2.msra.mxu0 0.0
    %640 = vmatprep.subr.mxu0 0.0
    %641 = vmatpush2.msra.mxu0 0.0
    %642 = vmatprep.subr.mxu0 0.0
    %643 = vmatpush2.msra.mxu0 0.0
    %644 = vmatprep.subr.mxu0 0.0
    %645 = vmatpush2.msra.mxu0 0.0
    %646 = vmatprep.subr.mxu0 0.0
    %647 = vmatpush2.msra.mxu0 0.0
    %648 = vmatprep.subr.mxu0 0.0
    %649 = vmatpush2.msra.mxu0 0.0
    %650 = vmatprep.subr.mxu0 0.0
    %651 = vmatpush2.msra.mxu0 0.0
    %652 = vmatprep.subr.mxu0 0.0
    %653 = vmatpush2.msra.mxu0 0.0
    %654 = vmatprep.subr.mxu0 0.0
    %655 = vmatpush2.msra.mxu0 0.0
    %656 = vmatprep.subr.mxu0 0.0
    %657 = vmatpush2.msra.mxu0 0.0
    %658 = vmatprep.subr.mxu0 0.0
    %659 = vmatpush2.msra.mxu0 0.0
    %660 = vmatprep.subr.mxu0 0.0
    %661 = vmatpush2.msra.mxu0 0.0
    %662 = vmatprep.subr.mxu0 0.0
    %663 = vmatpush2.msra.mxu0 0.0
    %664 = vmatprep.subr.mxu0 0.0
    %665 = vmatpush2.msra.mxu0 0.0
    %666 = vmatprep.subr.mxu0 0.0
    %667 = vmatpush2.msra.mxu0 0.0
    %668 = vmatprep.subr.mxu0 0.0
    %669 = vmatpush2.msra.mxu0 0.0
    %670 = vmatprep.mubr.f32.mxu0 0.0
    %671 = vmatmul.mubr.f32.gmra.mxu0 0.0
    %v672 = vpop.f32.mrf.mxu0
    %v673 = vadd.f32 0.0, %v672
    %v674 = vpop.f32.mrf.mxu0
    %v675 = vadd.f32 0.0, %v674
    %676 = vdwg.mxu0
    %v677 = vadd.f32 %v531, %v602
    %v678 = vadd.f32 %v532, %v604
    %v679 = vadd.f32 %v533, %v673
    %v680 = vadd.f32 %v534, %v675
    %v681 = vxor.u32 %v677, 2147483648
    %v682 = vmul.f32 %v681, 1.442695
    %v683 = vpow.pop %v682
    %v684 = vadd.f32 %v683, 1.0
    %v685 = vrcp.pop %v684
    %v686 = vmul.f32 1.0, %v685
    %v687 = vxor.u32 %v678, 2147483648
    %v688 = vmul.f32 %v687, 1.442695
    %v689 = vpow.pop %v688
    %v690 = vadd.f32 %v689, 1.0
    %v691 = vrcp.pop %v690
    %v692 = vmul.f32 1.0, %v691
    %v693 = vtanh.pop %v679
    %v694 = vxor.u32 %v680, 2147483648
    %v695 = vmul.f32 %v694, 1.442695
    %v696 = vpow.pop %v695
    %v697 = vadd.f32 %v696, 1.0
    %v698 = vrcp.pop %v697
    %v699 = vmul.f32 1.0, %v698
    %v700 = vmul.f32 %v692, 0.0
    %v701 = vmul.f32 %v686, %v693
    %v702 = vadd.f32 %v700, %v701
    %v703 = vtanh.pop %v702
    %v704 = vmul.f32 %v699, %v703
    %705 = vst [vmem:[#allocation2] sm:$0xff] %v704
    %s706 = scalar_lea.vmem [#allocation3], 32
    %v707 = vld [vmem:[%s706] sm:$0xff]
    %v708 = vld [vmem:[%s706 + $0x8] sm:$0xff]
    %v709 = vld [vmem:[%s706 + $0x10] sm:$0xff]
    %v710 = vld [vmem:[%s706 + $0x18] sm:$0xff]
    %711 = vmatprep.subr.mxu0 %v528
    %712 = vmatpush1.msra.mxu0 %v527
    %713 = vmatprep.subr.mxu0 %v524
    %714 = vmatpush1.msra.mxu0 %v523
    %715 = vmatprep.subr.mxu0 %v520
    %716 = vmatpush1.msra.mxu0 %v519
    %717 = vmatprep.subr.mxu0 %v516
    %718 = vmatpush1.msra.mxu0 %v515
    %719 = vmatprep.subr.mxu0 %v512
    %720 = vmatpush1.msra.mxu0 %v511
    %721 = vmatprep.subr.mxu0 %v508
    %722 = vmatpush1.msra.mxu0 %v507
    %723 = vmatprep.subr.mxu0 %v504
    %724 = vmatpush1.msra.mxu0 %v503
    %725 = vmatprep.subr.mxu0 %v500
    %726 = vmatpush1.msra.mxu0 %v499
    %727 = vmatprep.subr.mxu0 %v496
    %728 = vmatpush1.msra.mxu0 %v495
    %729 = vmatprep.subr.mxu0 %v492
    %730 = vmatpush1.msra.mxu0 %v491
    %731 = vmatprep.subr.mxu0 %v488
    %732 = vmatpush1.msra.mxu0 %v487
    %733 = vmatprep.subr.mxu0 %v484
    %734 = vmatpush1.msra.mxu0 %v483
    %735 = vmatprep.subr.mxu0 %v480
    %736 = vmatpush1.msra.mxu0 %v479
    %737 = vmatprep.subr.mxu0 %v476
    %738 = vmatpush1.msra.mxu0 %v475
    %739 = vmatprep.subr.mxu0 %v472
    %740 = vmatpush1.msra.mxu0 %v471
    %741 = vmatprep.subr.mxu0 %v468
    %742 = vmatpush1.msra.mxu0 %v467
    %743 = vmatprep.subr.mxu0 0.0
    %744 = vmatpush2.msra.mxu0 0.0
    %745 = vmatprep.subr.mxu0 0.0
    %746 = vmatpush2.msra.mxu0 0.0
    %747 = vmatprep.subr.mxu0 0.0
    %748 = vmatpush2.msra.mxu0 0.0
    %749 = vmatprep.subr.mxu0 0.0
    %750 = vmatpush2.msra.mxu0 0.0
    %751 = vmatprep.subr.mxu0 0.0
    %752 = vmatpush2.msra.mxu0 0.0
    %753 = vmatprep.subr.mxu0 0.0
    %754 = vmatpush2.msra.mxu0 0.0
    %755 = vmatprep.subr.mxu0 0.0
    %756 = vmatpush2.msra.mxu0 0.0
    %757 = vmatprep.subr.mxu0 0.0
    %758 = vmatpush2.msra.mxu0 0.0
    %759 = vmatprep.subr.mxu0 0.0
    %760 = vmatpush2.msra.mxu0 0.0
    %761 = vmatprep.subr.mxu0 0.0
    %762 = vmatpush2.msra.mxu0 0.0
    %763 = vmatprep.subr.mxu0 0.0
    %764 = vmatpush2.msra.mxu0 0.0
    %765 = vmatprep.subr.mxu0 0.0
    %766 = vmatpush2.msra.mxu0 0.0
    %767 = vmatprep.subr.mxu0 0.0
    %768 = vmatpush2.msra.mxu0 0.0
    %769 = vmatprep.subr.mxu0 0.0
    %770 = vmatpush2.msra.mxu0 0.0
    %771 = vmatprep.subr.mxu0 0.0
    %772 = vmatpush2.msra.mxu0 0.0
    %773 = vmatprep.subr.mxu0 0.0
    %774 = vmatpush2.msra.mxu0 0.0
    %775 = vmatprep.mubr.f32.mxu0 0.0
    %776 = vmatmul.mubr.f32.gmra.mxu0 %v704
    %v777 = vpop.f32.mrf.mxu0
    %v778 = vadd.f32 0.0, %v777
    %v779 = vpop.f32.mrf.mxu0
    %v780 = vadd.f32 0.0, %v779
    %781 = vdwg.mxu0
    %782 = vmatprep.subr.mxu0 %v530
    %783 = vmatpush1.msra.mxu0 %v529
    %784 = vmatprep.subr.mxu0 %v526
    %785 = vmatpush1.msra.mxu0 %v525
    %786 = vmatprep.subr.mxu0 %v522
    %787 = vmatpush1.msra.mxu0 %v521
    %788 = vmatprep.subr.mxu0 %v518
    %789 = vmatpush1.msra.mxu0 %v517
    %790 = vmatprep.subr.mxu0 %v514
    %791 = vmatpush1.msra.mxu0 %v513
    %792 = vmatprep.subr.mxu0 %v510
    %793 = vmatpush1.msra.mxu0 %v509
    %794 = vmatprep.subr.mxu0 %v506
    %795 = vmatpush1.msra.mxu0 %v505
    %796 = vmatprep.subr.mxu0 %v502
    %797 = vmatpush1.msra.mxu0 %v501
    %798 = vmatprep.subr.mxu0 %v498
    %799 = vmatpush1.msra.mxu0 %v497
    %800 = vmatprep.subr.mxu0 %v494
    %801 = vmatpush1.msra.mxu0 %v493
    %802 = vmatprep.subr.mxu0 %v490
    %803 = vmatpush1.msra.mxu0 %v489
    %804 = vmatprep.subr.mxu0 %v486
    %805 = vmatpush1.msra.mxu0 %v485
    %806 = vmatprep.subr.mxu0 %v482
    %807 = vmatpush1.msra.mxu0 %v481
    %808 = vmatprep.subr.mxu0 %v478
    %809 = vmatpush1.msra.mxu0 %v477
    %810 = vmatprep.subr.mxu0 %v474
    %811 = vmatpush1.msra.mxu0 %v473
    %812 = vmatprep.subr.mxu0 %v470
    %813 = vmatpush1.msra.mxu0 %v469
    %814 = vmatprep.subr.mxu0 0.0
    %815 = vmatpush2.msra.mxu0 0.0
    %816 = vmatprep.subr.mxu0 0.0
    %817 = vmatpush2.msra.mxu0 0.0
    %818 = vmatprep.subr.mxu0 0.0
    %819 = vmatpush2.msra.mxu0 0.0
    %820 = vmatprep.subr.mxu0 0.0
    %821 = vmatpush2.msra.mxu0 0.0
    %822 = vmatprep.subr.mxu0 0.0
    %823 = vmatpush2.msra.mxu0 0.0
    %824 = vmatprep.subr.mxu0 0.0
    %825 = vmatpush2.msra.mxu0 0.0
    %826 = vmatprep.subr.mxu0 0.0
    %827 = vmatpush2.msra.mxu0 0.0
    %828 = vmatprep.subr.mxu0 0.0
    %829 = vmatpush2.msra.mxu0 0.0
    %830 = vmatprep.subr.mxu0 0.0
    %831 = vmatpush2.msra.mxu0 0.0
    %832 = vmatprep.subr.mxu0 0.0
    %833 = vmatpush2.msra.mxu0 0.0
    %834 = vmatprep.subr.mxu0 0.0
    %835 = vmatpush2.msra.mxu0 0.0
    %836 = vmatprep.subr.mxu0 0.0
    %837 = vmatpush2.msra.mxu0 0.0
    %838 = vmatprep.subr.mxu0 0.0
    %839 = vmatpush2.msra.mxu0 0.0
    %840 = vmatprep.subr.mxu0 0.0
    %841 = vmatpush2.msra.mxu0 0.0
    %842 = vmatprep.subr.mxu0 0.0
    %843 = vmatpush2.msra.mxu0 0.0
    %844 = vmatprep.subr.mxu0 0.0
    %845 = vmatpush2.msra.mxu0 0.0
    %846 = vmatprep.mubr.f32.mxu0 0.0
    %847 = vmatmul.mubr.f32.gmra.mxu0 %v704
    %v848 = vpop.f32.mrf.mxu0
    %v849 = vadd.f32 0.0, %v848
    %v850 = vpop.f32.mrf.mxu0
    %v851 = vadd.f32 0.0, %v850
    %852 = vdwg.mxu0
    %v853 = vadd.f32 %v707, %v778
    %v854 = vadd.f32 %v708, %v780
    %v855 = vadd.f32 %v709, %v849
    %v856 = vadd.f32 %v710, %v851
    %v857 = vxor.u32 %v853, 2147483648
    %v858 = vmul.f32 %v857, 1.442695
    %v859 = vpow.pop %v858
    %v860 = vadd.f32 %v859, 1.0
    %v861 = vrcp.pop %v860
    %v862 = vmul.f32 1.0, %v861
    %v863 = vxor.u32 %v854, 2147483648
    %v864 = vmul.f32 %v863, 1.442695
    %v865 = vpow.pop %v864
    %v866 = vadd.f32 %v865, 1.0
    %v867 = vrcp.pop %v866
    %v868 = vmul.f32 1.0, %v867
    %v869 = vtanh.pop %v855
    %v870 = vxor.u32 %v856, 2147483648
    %v871 = vmul.f32 %v870, 1.442695
    %v872 = vpow.pop %v871
    %v873 = vadd.f32 %v872, 1.0
    %v874 = vrcp.pop %v873
    %v875 = vmul.f32 1.0, %v874
    %v876 = vmul.f32 %v868, %v702
    %v877 = vmul.f32 %v862, %v869
    %v878 = vadd.f32 %v876, %v877
    %v879 = vtanh.pop %v878
    %v880 = vmul.f32 %v875, %v879
    %s881 = scalar_lea.vmem [#allocation2], 8
    %882 = vst [vmem:[%s881] sm:$0xff] %v880
    %s883 = scalar_lea.vmem [#allocation3], 64
    %v884 = vld [vmem:[%s883] sm:$0xff]
    %v885 = vld [vmem:[%s883 + $0x8] sm:$0xff]
    %v886 = vld [vmem:[%s883 + $0x10] sm:$0xff]
    %v887 = vld [vmem:[%s883 + $0x18] sm:$0xff]
    %888 = vmatprep.subr.mxu0 %v528
    %889 = vmatpush1.msra.mxu0 %v527
    %890 = vmatprep.subr.mxu0 %v524
    %891 = vmatpush1.msra.mxu0 %v523
    %892 = vmatprep.subr.mxu0 %v520
    %893 = vmatpush1.msra.mxu0 %v519
    %894 = vmatprep.subr.mxu0 %v516
    %895 = vmatpush1.msra.mxu0 %v515
    %896 = vmatprep.subr.mxu0 %v512
    %897 = vmatpush1.msra.mxu0 %v511
    %898 = vmatprep.subr.mxu0 %v508
    %899 = vmatpush1.msra.mxu0 %v507
    %900 = vmatprep.subr.mxu0 %v504
    %901 = vmatpush1.msra.mxu0 %v503
    %902 = vmatprep.subr.mxu0 %v500
    %903 = vmatpush1.msra.mxu0 %v499
    %904 = vmatprep.subr.mxu0 %v496
    %905 = vmatpush1.msra.mxu0 %v495
    %906 = vmatprep.subr.mxu0 %v492
    %907 = vmatpush1.msra.mxu0 %v491
    %908 = vmatprep.subr.mxu0 %v488
    %909 = vmatpush1.msra.mxu0 %v487
    %910 = vmatprep.subr.mxu0 %v484
    %911 = vmatpush1.msra.mxu0 %v483
    %912 = vmatprep.subr.mxu0 %v480
    %913 = vmatpush1.msra.mxu0 %v479
    %914 = vmatprep.subr.mxu0 %v476
    %915 = vmatpush1.msra.mxu0 %v475
    %916 = vmatprep.subr.mxu0 %v472
    %917 = vmatpush1.msra.mxu0 %v471
    %918 = vmatprep.subr.mxu0 %v468
    %919 = vmatpush1.msra.mxu0 %v467
    %920 = vmatprep.subr.mxu0 0.0
    %921 = vmatpush2.msra.mxu0 0.0
    %922 = vmatprep.subr.mxu0 0.0
    %923 = vmatpush2.msra.mxu0 0.0
    %924 = vmatprep.subr.mxu0 0.0
    %925 = vmatpush2.msra.mxu0 0.0
    %926 = vmatprep.subr.mxu0 0.0
    %927 = vmatpush2.msra.mxu0 0.0
    %928 = vmatprep.subr.mxu0 0.0
    %929 = vmatpush2.msra.mxu0 0.0
    %930 = vmatprep.subr.mxu0 0.0
    %931 = vmatpush2.msra.mxu0 0.0
    %932 = vmatprep.subr.mxu0 0.0
    %933 = vmatpush2.msra.mxu0 0.0
    %934 = vmatprep.subr.mxu0 0.0
    %935 = vmatpush2.msra.mxu0 0.0
    %936 = vmatprep.subr.mxu0 0.0
    %937 = vmatpush2.msra.mxu0 0.0
    %938 = vmatprep.subr.mxu0 0.0
    %939 = vmatpush2.msra.mxu0 0.0
    %940 = vmatprep.subr.mxu0 0.0
    %941 = vmatpush2.msra.mxu0 0.0
    %942 = vmatprep.subr.mxu0 0.0
    %943 = vmatpush2.msra.mxu0 0.0
    %944 = vmatprep.subr.mxu0 0.0
    %945 = vmatpush2.msra.mxu0 0.0
    %946 = vmatprep.subr.mxu0 0.0
    %947 = vmatpush2.msra.mxu0 0.0
    %948 = vmatprep.subr.mxu0 0.0
    %949 = vmatpush2.msra.mxu0 0.0
    %950 = vmatprep.subr.mxu0 0.0
    %951 = vmatpush2.msra.mxu0 0.0
    %952 = vmatprep.mubr.f32.mxu0 0.0
    %953 = vmatmul.mubr.f32.gmra.mxu0 %v880
    %v954 = vpop.f32.mrf.mxu0
    %v955 = vadd.f32 0.0, %v954
    %v956 = vpop.f32.mrf.mxu0
    %v957 = vadd.f32 0.0, %v956
    %958 = vdwg.mxu0
    %959 = vmatprep.subr.mxu0 %v530
    %960 = vmatpush1.msra.mxu0 %v529
    %961 = vmatprep.subr.mxu0 %v526
    %962 = vmatpush1.msra.mxu0 %v525
    %963 = vmatprep.subr.mxu0 %v522
    %964 = vmatpush1.msra.mxu0 %v521
    %965 = vmatprep.subr.mxu0 %v518
    %966 = vmatpush1.msra.mxu0 %v517
    %967 = vmatprep.subr.mxu0 %v514
    %968 = vmatpush1.msra.mxu0 %v513
    %969 = vmatprep.subr.mxu0 %v510
    %970 = vmatpush1.msra.mxu0 %v509
    %971 = vmatprep.subr.mxu0 %v506
    %972 = vmatpush1.msra.mxu0 %v505
    %973 = vmatprep.subr.mxu0 %v502
    %974 = vmatpush1.msra.mxu0 %v501
    %975 = vmatprep.subr.mxu0 %v498
    %976 = vmatpush1.msra.mxu0 %v497
    %977 = vmatprep.subr.mxu0 %v494
    %978 = vmatpush1.msra.mxu0 %v493
    %979 = vmatprep.subr.mxu0 %v490
    %980 = vmatpush1.msra.mxu0 %v489
    %981 = vmatprep.subr.mxu0 %v486
    %982 = vmatpush1.msra.mxu0 %v485
    %983 = vmatprep.subr.mxu0 %v482
    %984 = vmatpush1.msra.mxu0 %v481
    %985 = vmatprep.subr.mxu0 %v478
    %986 = vmatpush1.msra.mxu0 %v477
    %987 = vmatprep.subr.mxu0 %v474
    %988 = vmatpush1.msra.mxu0 %v473
    %989 = vmatprep.subr.mxu0 %v470
    %990 = vmatpush1.msra.mxu0 %v469
    %991 = vmatprep.subr.mxu0 0.0
    %992 = vmatpush2.msra.mxu0 0.0
    %993 = vmatprep.subr.mxu0 0.0
    %994 = vmatpush2.msra.mxu0 0.0
    %995 = vmatprep.subr.mxu0 0.0
    %996 = vmatpush2.msra.mxu0 0.0
    %997 = vmatprep.subr.mxu0 0.0
    %998 = vmatpush2.msra.mxu0 0.0
    %999 = vmatprep.subr.mxu0 0.0
    %1000 = vmatpush2.msra.mxu0 0.0
    %1001 = vmatprep.subr.mxu0 0.0
    %1002 = vmatpush2.msra.mxu0 0.0
    %1003 = vmatprep.subr.mxu0 0.0
    %1004 = vmatpush2.msra.mxu0 0.0
    %1005 = vmatprep.subr.mxu0 0.0
    %1006 = vmatpush2.msra.mxu0 0.0
    %1007 = vmatprep.subr.mxu0 0.0
    %1008 = vmatpush2.msra.mxu0 0.0
    %1009 = vmatprep.subr.mxu0 0.0
    %1010 = vmatpush2.msra.mxu0 0.0
    %1011 = vmatprep.subr.mxu0 0.0
    %1012 = vmatpush2.msra.mxu0 0.0
    %1013 = vmatprep.subr.mxu0 0.0
    %1014 = vmatpush2.msra.mxu0 0.0
    %1015 = vmatprep.subr.mxu0 0.0
    %1016 = vmatpush2.msra.mxu0 0.0
    %1017 = vmatprep.subr.mxu0 0.0
    %1018 = vmatpush2.msra.mxu0 0.0
    %1019 = vmatprep.subr.mxu0 0.0
    %1020 = vmatpush2.msra.mxu0 0.0
    %1021 = vmatprep.subr.mxu0 0.0
    %1022 = vmatpush2.msra.mxu0 0.0
    %1023 = vmatprep.mubr.f32.mxu0 0.0
    %1024 = vmatmul.mubr.f32.gmra.mxu0 %v880
    %v1025 = vpop.f32.mrf.mxu0
    %v1026 = vadd.f32 0.0, %v1025
    %v1027 = vpop.f32.mrf.mxu0
    %v1028 = vadd.f32 0.0, %v1027
    %1029 = vdwg.mxu0
    %v1030 = vadd.f32 %v884, %v955
    %v1031 = vadd.f32 %v885, %v957
    %v1032 = vadd.f32 %v886, %v1026
    %v1033 = vadd.f32 %v887, %v1028
    %v1034 = vxor.u32 %v1030, 2147483648
    %v1035 = vmul.f32 %v1034, 1.442695
    %v1036 = vpow.pop %v1035
    %v1037 = vadd.f32 %v1036, 1.0
    %v1038 = vrcp.pop %v1037
    %v1039 = vmul.f32 1.0, %v1038
    %v1040 = vxor.u32 %v1031, 2147483648
    %v1041 = vmul.f32 %v1040, 1.442695
    %v1042 = vpow.pop %v1041
    %v1043 = vadd.f32 %v1042, 1.0
    %v1044 = vrcp.pop %v1043
    %v1045 = vmul.f32 1.0, %v1044
    %v1046 = vtanh.pop %v1032
    %v1047 = vxor.u32 %v1033, 2147483648
    %v1048 = vmul.f32 %v1047, 1.442695
    %v1049 = vpow.pop %v1048
    %v1050 = vadd.f32 %v1049, 1.0
    %v1051 = vrcp.pop %v1050
    %v1052 = vmul.f32 1.0, %v1051
    %v1053 = vmul.f32 %v1045, %v878
    %v1054 = vmul.f32 %v1039, %v1046
    %v1055 = vadd.f32 %v1053, %v1054
    %v1056 = vtanh.pop %v1055
    %v1057 = vmul.f32 %v1052, %v1056
    %s1058 = scalar_lea.vmem [#allocation2], 16
    %1059 = vst [vmem:[%s1058] sm:$0xff] %v1057
    %s1060 = scalar_lea.vmem [#allocation3], 96
    %v1061 = vld [vmem:[%s1060] sm:$0xff]
    %v1062 = vld [vmem:[%s1060 + $0x8] sm:$0xff]
    %v1063 = vld [vmem:[%s1060 + $0x10] sm:$0xff]
    %v1064 = vld [vmem:[%s1060 + $0x18] sm:$0xff]
    %1065 = vmatprep.subr.mxu0 %v528
    %1066 = vmatpush1.msra.mxu0 %v527
    %1067 = vmatprep.subr.mxu0 %v524
    %1068 = vmatpush1.msra.mxu0 %v523
    %1069 = vmatprep.subr.mxu0 %v520
    %1070 = vmatpush1.msra.mxu0 %v519
    %1071 = vmatprep.subr.mxu0 %v516
    %1072 = vmatpush1.msra.mxu0 %v515
    %1073 = vmatprep.subr.mxu0 %v512
    %1074 = vmatpush1.msra.mxu0 %v511
    %1075 = vmatprep.subr.mxu0 %v508
    %1076 = vmatpush1.msra.mxu0 %v507
    %1077 = vmatprep.subr.mxu0 %v504
    %1078 = vmatpush1.msra.mxu0 %v503
    %1079 = vmatprep.subr.mxu0 %v500
    %1080 = vmatpush1.msra.mxu0 %v499
    %1081 = vmatprep.subr.mxu0 %v496
    %1082 = vmatpush1.msra.mxu0 %v495
    %1083 = vmatprep.subr.mxu0 %v492
    %1084 = vmatpush1.msra.mxu0 %v491
    %1085 = vmatprep.subr.mxu0 %v488
    %1086 = vmatpush1.msra.mxu0 %v487
    %1087 = vmatprep.subr.mxu0 %v484
    %1088 = vmatpush1.msra.mxu0 %v483
    %1089 = vmatprep.subr.mxu0 %v480
    %1090 = vmatpush1.msra.mxu0 %v479
    %1091 = vmatprep.subr.mxu0 %v476
    %1092 = vmatpush1.msra.mxu0 %v475
    %1093 = vmatprep.subr.mxu0 %v472
    %1094 = vmatpush1.msra.mxu0 %v471
    %1095 = vmatprep.subr.mxu0 %v468
    %1096 = vmatpush1.msra.mxu0 %v467
    %1097 = vmatprep.subr.mxu0 0.0
    %1098 = vmatpush2.msra.mxu0 0.0
    %1099 = vmatprep.subr.mxu0 0.0
    %1100 = vmatpush2.msra.mxu0 0.0
    %1101 = vmatprep.subr.mxu0 0.0
    %1102 = vmatpush2.msra.mxu0 0.0
    %1103 = vmatprep.subr.mxu0 0.0
    %1104 = vmatpush2.msra.mxu0 0.0
    %1105 = vmatprep.subr.mxu0 0.0
    %1106 = vmatpush2.msra.mxu0 0.0
    %1107 = vmatprep.subr.mxu0 0.0
    %1108 = vmatpush2.msra.mxu0 0.0
    %1109 = vmatprep.subr.mxu0 0.0
    %1110 = vmatpush2.msra.mxu0 0.0
    %1111 = vmatprep.subr.mxu0 0.0
    %1112 = vmatpush2.msra.mxu0 0.0
    %1113 = vmatprep.subr.mxu0 0.0
    %1114 = vmatpush2.msra.mxu0 0.0
    %1115 = vmatprep.subr.mxu0 0.0
    %1116 = vmatpush2.msra.mxu0 0.0
    %1117 = vmatprep.subr.mxu0 0.0
    %1118 = vmatpush2.msra.mxu0 0.0
    %1119 = vmatprep.subr.mxu0 0.0
    %1120 = vmatpush2.msra.mxu0 0.0
    %1121 = vmatprep.subr.mxu0 0.0
    %1122 = vmatpush2.msra.mxu0 0.0
    %1123 = vmatprep.subr.mxu0 0.0
    %1124 = vmatpush2.msra.mxu0 0.0
    %1125 = vmatprep.subr.mxu0 0.0
    %1126 = vmatpush2.msra.mxu0 0.0
    %1127 = vmatprep.subr.mxu0 0.0
    %1128 = vmatpush2.msra.mxu0 0.0
    %1129 = vmatprep.mubr.f32.mxu0 0.0
    %1130 = vmatmul.mubr.f32.gmra.mxu0 %v1057
    %v1131 = vpop.f32.mrf.mxu0
    %v1132 = vadd.f32 0.0, %v1131
    %v1133 = vpop.f32.mrf.mxu0
    %v1134 = vadd.f32 0.0, %v1133
    %1135 = vdwg.mxu0
    %1136 = vmatprep.subr.mxu0 %v530
    %1137 = vmatpush1.msra.mxu0 %v529
    %1138 = vmatprep.subr.mxu0 %v526
    %1139 = vmatpush1.msra.mxu0 %v525
    %1140 = vmatprep.subr.mxu0 %v522
    %1141 = vmatpush1.msra.mxu0 %v521
    %1142 = vmatprep.subr.mxu0 %v518
    %1143 = vmatpush1.msra.mxu0 %v517
    %1144 = vmatprep.subr.mxu0 %v514
    %1145 = vmatpush1.msra.mxu0 %v513
    %1146 = vmatprep.subr.mxu0 %v510
    %1147 = vmatpush1.msra.mxu0 %v509
    %1148 = vmatprep.subr.mxu0 %v506
    %1149 = vmatpush1.msra.mxu0 %v505
    %1150 = vmatprep.subr.mxu0 %v502
    %1151 = vmatpush1.msra.mxu0 %v501
    %1152 = vmatprep.subr.mxu0 %v498
    %1153 = vmatpush1.msra.mxu0 %v497
    %1154 = vmatprep.subr.mxu0 %v494
    %1155 = vmatpush1.msra.mxu0 %v493
    %1156 = vmatprep.subr.mxu0 %v490
    %1157 = vmatpush1.msra.mxu0 %v489
    %1158 = vmatprep.subr.mxu0 %v486
    %1159 = vmatpush1.msra.mxu0 %v485
    %1160 = vmatprep.subr.mxu0 %v482
    %1161 = vmatpush1.msra.mxu0 %v481
    %1162 = vmatprep.subr.mxu0 %v478
    %1163 = vmatpush1.msra.mxu0 %v477
    %1164 = vmatprep.subr.mxu0 %v474
    %1165 = vmatpush1.msra.mxu0 %v473
    %1166 = vmatprep.subr.mxu0 %v470
    %1167 = vmatpush1.msra.mxu0 %v469
    %1168 = vmatprep.subr.mxu0 0.0
    %1169 = vmatpush2.msra.mxu0 0.0
    %1170 = vmatprep.subr.mxu0 0.0
    %1171 = vmatpush2.msra.mxu0 0.0
    %1172 = vmatprep.subr.mxu0 0.0
    %1173 = vmatpush2.msra.mxu0 0.0
    %1174 = vmatprep.subr.mxu0 0.0
    %1175 = vmatpush2.msra.mxu0 0.0
    %1176 = vmatprep.subr.mxu0 0.0
    %1177 = vmatpush2.msra.mxu0 0.0
    %1178 = vmatprep.subr.mxu0 0.0
    %1179 = vmatpush2.msra.mxu0 0.0
    %1180 = vmatprep.subr.mxu0 0.0
    %1181 = vmatpush2.msra.mxu0 0.0
    %1182 = vmatprep.subr.mxu0 0.0
    %1183 = vmatpush2.msra.mxu0 0.0
    %1184 = vmatprep.subr.mxu0 0.0
    %1185 = vmatpush2.msra.mxu0 0.0
    %1186 = vmatprep.subr.mxu0 0.0
    %1187 = vmatpush2.msra.mxu0 0.0
    %1188 = vmatprep.subr.mxu0 0.0
    %1189 = vmatpush2.msra.mxu0 0.0
    %1190 = vmatprep.subr.mxu0 0.0
    %1191 = vmatpush2.msra.mxu0 0.0
    %1192 = vmatprep.subr.mxu0 0.0
    %1193 = vmatpush2.msra.mxu0 0.0
    %1194 = vmatprep.subr.mxu0 0.0
    %1195 = vmatpush2.msra.mxu0 0.0
    %1196 = vmatprep.subr.mxu0 0.0
    %1197 = vmatpush2.msra.mxu0 0.0
    %1198 = vmatprep.subr.mxu0 0.0
    %1199 = vmatpush2.msra.mxu0 0.0
    %1200 = vmatprep.mubr.f32.mxu0 0.0
    %1201 = vmatmul.mubr.f32.gmra.mxu0 %v1057
    %v1202 = vpop.f32.mrf.mxu0
    %v1203 = vadd.f32 0.0, %v1202
    %v1204 = vpop.f32.mrf.mxu0
    %v1205 = vadd.f32 0.0, %v1204
    %1206 = vdwg.mxu0
    %v1207 = vadd.f32 %v1061, %v1132
    %v1208 = vadd.f32 %v1062, %v1134
    %v1209 = vadd.f32 %v1063, %v1203
    %v1210 = vadd.f32 %v1064, %v1205
    %v1211 = vxor.u32 %v1207, 2147483648
    %v1212 = vmul.f32 %v1211, 1.442695
    %v1213 = vpow.pop %v1212
    %v1214 = vadd.f32 %v1213, 1.0
    %v1215 = vrcp.pop %v1214
    %v1216 = vmul.f32 1.0, %v1215
    %v1217 = vxor.u32 %v1208, 2147483648
    %v1218 = vmul.f32 %v1217, 1.442695
    %v1219 = vpow.pop %v1218
    %v1220 = vadd.f32 %v1219, 1.0
    %v1221 = vrcp.pop %v1220
    %v1222 = vmul.f32 1.0, %v1221
    %v1223 = vtanh.pop %v1209
    %v1224 = vxor.u32 %v1210, 2147483648
    %v1225 = vmul.f32 %v1224, 1.442695
    %v1226 = vpow.pop %v1225
    %v1227 = vadd.f32 %v1226, 1.0
    %v1228 = vrcp.pop %v1227
    %v1229 = vmul.f32 1.0, %v1228
    %v1230 = vmul.f32 %v1222, %v1055
    %v1231 = vmul.f32 %v1216, %v1223
    %v1232 = vadd.f32 %v1230, %v1231
    %v1233 = vtanh.pop %v1232
    %v1234 = vmul.f32 %v1229, %v1233
    %s1235 = scalar_lea.vmem [#allocation2], 24
    %1236 = vst [vmem:[%s1235] sm:$0xff] %v1234
    %s1237 = scalar_lea.vmem [#allocation3], 128
    %v1238 = vld [vmem:[%s1237] sm:$0xff]
    %v1239 = vld [vmem:[%s1237 + $0x8] sm:$0xff]
    %v1240 = vld [vmem:[%s1237 + $0x10] sm:$0xff]
    %v1241 = vld [vmem:[%s1237 + $0x18] sm:$0xff]
    %1242 = vmatprep.subr.mxu0 %v528
    %1243 = vmatpush1.msra.mxu0 %v527
    %1244 = vmatprep.subr.mxu0 %v524
    %1245 = vmatpush1.msra.mxu0 %v523
    %1246 = vmatprep.subr.mxu0 %v520
    %1247 = vmatpush1.msra.mxu0 %v519
    %1248 = vmatprep.subr.mxu0 %v516
    %1249 = vmatpush1.msra.mxu0 %v515
    %1250 = vmatprep.subr.mxu0 %v512
    %1251 = vmatpush1.msra.mxu0 %v511
    %1252 = vmatprep.subr.mxu0 %v508
    %1253 = vmatpush1.msra.mxu0 %v507
    %1254 = vmatprep.subr.mxu0 %v504
    %1255 = vmatpush1.msra.mxu0 %v503
    %1256 = vmatprep.subr.mxu0 %v500
    %1257 = vmatpush1.msra.mxu0 %v499
    %1258 = vmatprep.subr.mxu0 %v496
    %1259 = vmatpush1.msra.mxu0 %v495
    %1260 = vmatprep.subr.mxu0 %v492
    %1261 = vmatpush1.msra.mxu0 %v491
    %1262 = vmatprep.subr.mxu0 %v488
    %1263 = vmatpush1.msra.mxu0 %v487
    %1264 = vmatprep.subr.mxu0 %v484
    %1265 = vmatpush1.msra.mxu0 %v483
    %1266 = vmatprep.subr.mxu0 %v480
    %1267 = vmatpush1.msra.mxu0 %v479
    %1268 = vmatprep.subr.mxu0 %v476
    %1269 = vmatpush1.msra.mxu0 %v475
    %1270 = vmatprep.subr.mxu0 %v472
    %1271 = vmatpush1.msra.mxu0 %v471
    %1272 = vmatprep.subr.mxu0 %v468
    %1273 = vmatpush1.msra.mxu0 %v467
    %1274 = vmatprep.subr.mxu0 0.0
    %1275 = vmatpush2.msra.mxu0 0.0
    %1276 = vmatprep.subr.mxu0 0.0
    %1277 = vmatpush2.msra.mxu0 0.0
    %1278 = vmatprep.subr.mxu0 0.0
    %1279 = vmatpush2.msra.mxu0 0.0
    %1280 = vmatprep.subr.mxu0 0.0
    %1281 = vmatpush2.msra.mxu0 0.0
    %1282 = vmatprep.subr.mxu0 0.0
    %1283 = vmatpush2.msra.mxu0 0.0
    %1284 = vmatprep.subr.mxu0 0.0
    %1285 = vmatpush2.msra.mxu0 0.0
    %1286 = vmatprep.subr.mxu0 0.0
    %1287 = vmatpush2.msra.mxu0 0.0
    %1288 = vmatprep.subr.mxu0 0.0
    %1289 = vmatpush2.msra.mxu0 0.0
    %1290 = vmatprep.subr.mxu0 0.0
    %1291 = vmatpush2.msra.mxu0 0.0
    %1292 = vmatprep.subr.mxu0 0.0
    %1293 = vmatpush2.msra.mxu0 0.0
    %1294 = vmatprep.subr.mxu0 0.0
    %1295 = vmatpush2.msra.mxu0 0.0
    %1296 = vmatprep.subr.mxu0 0.0
    %1297 = vmatpush2.msra.mxu0 0.0
    %1298 = vmatprep.subr.mxu0 0.0
    %1299 = vmatpush2.msra.mxu0 0.0
    %1300 = vmatprep.subr.mxu0 0.0
    %1301 = vmatpush2.msra.mxu0 0.0
    %1302 = vmatprep.subr.mxu0 0.0
    %1303 = vmatpush2.msra.mxu0 0.0
    %1304 = vmatprep.subr.mxu0 0.0
    %1305 = vmatpush2.msra.mxu0 0.0
    %1306 = vmatprep.mubr.f32.mxu0 0.0
    %1307 = vmatmul.mubr.f32.gmra.mxu0 %v1234
    %v1308 = vpop.f32.mrf.mxu0
    %v1309 = vadd.f32 0.0, %v1308
    %v1310 = vpop.f32.mrf.mxu0
    %v1311 = vadd.f32 0.0, %v1310
    %1312 = vdwg.mxu0
    %1313 = vmatprep.subr.mxu0 %v530
    %1314 = vmatpush1.msra.mxu0 %v529
    %1315 = vmatprep.subr.mxu0 %v526
    %1316 = vmatpush1.msra.mxu0 %v525
    %1317 = vmatprep.subr.mxu0 %v522
    %1318 = vmatpush1.msra.mxu0 %v521
    %1319 = vmatprep.subr.mxu0 %v518
    %1320 = vmatpush1.msra.mxu0 %v517
    %1321 = vmatprep.subr.mxu0 %v514
    %1322 = vmatpush1.msra.mxu0 %v513
    %1323 = vmatprep.subr.mxu0 %v510
    %1324 = vmatpush1.msra.mxu0 %v509
    %1325 = vmatprep.subr.mxu0 %v506
    %1326 = vmatpush1.msra.mxu0 %v505
    %1327 = vmatprep.subr.mxu0 %v502
    %1328 = vmatpush1.msra.mxu0 %v501
    %1329 = vmatprep.subr.mxu0 %v498
    %1330 = vmatpush1.msra.mxu0 %v497
    %1331 = vmatprep.subr.mxu0 %v494
    %1332 = vmatpush1.msra.mxu0 %v493
    %1333 = vmatprep.subr.mxu0 %v490
    %1334 = vmatpush1.msra.mxu0 %v489
    %1335 = vmatprep.subr.mxu0 %v486
    %1336 = vmatpush1.msra.mxu0 %v485
    %1337 = vmatprep.subr.mxu0 %v482
    %1338 = vmatpush1.msra.mxu0 %v481
    %1339 = vmatprep.subr.mxu0 %v478
    %1340 = vmatpush1.msra.mxu0 %v477
    %1341 = vmatprep.subr.mxu0 %v474
    %1342 = vmatpush1.msra.mxu0 %v473
    %1343 = vmatprep.subr.mxu0 %v470
    %1344 = vmatpush1.msra.mxu0 %v469
    %1345 = vmatprep.subr.mxu0 0.0
    %1346 = vmatpush2.msra.mxu0 0.0
    %1347 = vmatprep.subr.mxu0 0.0
    %1348 = vmatpush2.msra.mxu0 0.0
    %1349 = vmatprep.subr.mxu0 0.0
    %1350 = vmatpush2.msra.mxu0 0.0
    %1351 = vmatprep.subr.mxu0 0.0
    %1352 = vmatpush2.msra.mxu0 0.0
    %1353 = vmatprep.subr.mxu0 0.0
    %1354 = vmatpush2.msra.mxu0 0.0
    %1355 = vmatprep.subr.mxu0 0.0
    %1356 = vmatpush2.msra.mxu0 0.0
    %1357 = vmatprep.subr.mxu0 0.0
    %1358 = vmatpush2.msra.mxu0 0.0
    %1359 = vmatprep.subr.mxu0 0.0
    %1360 = vmatpush2.msra.mxu0 0.0
    %1361 = vmatprep.subr.mxu0 0.0
    %1362 = vmatpush2.msra.mxu0 0.0
    %1363 = vmatprep.subr.mxu0 0.0
    %1364 = vmatpush2.msra.mxu0 0.0
    %1365 = vmatprep.subr.mxu0 0.0
    %1366 = vmatpush2.msra.mxu0 0.0
    %1367 = vmatprep.subr.mxu0 0.0
    %1368 = vmatpush2.msra.mxu0 0.0
    %1369 = vmatprep.subr.mxu0 0.0
    %1370 = vmatpush2.msra.mxu0 0.0
    %1371 = vmatprep.subr.mxu0 0.0
    %1372 = vmatpush2.msra.mxu0 0.0
    %1373 = vmatprep.subr.mxu0 0.0
    %1374 = vmatpush2.msra.mxu0 0.0
    %1375 = vmatprep.subr.mxu0 0.0
    %1376 = vmatpush2.msra.mxu0 0.0
    %1377 = vmatprep.mubr.f32.mxu0 0.0
    %1378 = vmatmul.mubr.f32.gmra.mxu0 %v1234
    %v1379 = vpop.f32.mrf.mxu0
    %v1380 = vadd.f32 0.0, %v1379
    %v1381 = vpop.f32.mrf.mxu0
    %v1382 = vadd.f32 0.0, %v1381
    %1383 = vdwg.mxu0
    %v1384 = vadd.f32 %v1238, %v1309
    %v1385 = vadd.f32 %v1239, %v1311
    %v1386 = vadd.f32 %v1240, %v1380
    %v1387 = vadd.f32 %v1241, %v1382
    %v1388 = vxor.u32 %v1384, 2147483648
    %v1389 = vmul.f32 %v1388, 1.442695
    %v1390 = vpow.pop %v1389
    %v1391 = vadd.f32 %v1390, 1.0
    %v1392 = vrcp.pop %v1391
    %v1393 = vmul.f32 1.0, %v1392
    %v1394 = vxor.u32 %v1385, 2147483648
    %v1395 = vmul.f32 %v1394, 1.442695
    %v1396 = vpow.pop %v1395
    %v1397 = vadd.f32 %v1396, 1.0
    %v1398 = vrcp.pop %v1397
    %v1399 = vmul.f32 1.0, %v1398
    %v1400 = vtanh.pop %v1386
    %v1401 = vxor.u32 %v1387, 2147483648
    %v1402 = vmul.f32 %v1401, 1.442695
    %v1403 = vpow.pop %v1402
    %v1404 = vadd.f32 %v1403, 1.0
    %v1405 = vrcp.pop %v1404
    %v1406 = vmul.f32 1.0, %v1405
    %v1407 = vmul.f32 %v1399, %v1232
    %v1408 = vmul.f32 %v1393, %v1400
    %v1409 = vadd.f32 %v1407, %v1408
    %v1410 = vtanh.pop %v1409
    %v1411 = vmul.f32 %v1406, %v1410
    %s1412 = scalar_lea.vmem [#allocation2], 32
    %1413 = vst [vmem:[%s1412] sm:$0xff] %v1411
    %s1414 = scalar_lea.vmem [#allocation3], 160
    %v1415 = vld [vmem:[%s1414] sm:$0xff]
    %v1416 = vld [vmem:[%s1414 + $0x8] sm:$0xff]
    %v1417 = vld [vmem:[%s1414 + $0x10] sm:$0xff]
    %v1418 = vld [vmem:[%s1414 + $0x18] sm:$0xff]
    %1419 = vmatprep.subr.mxu0 %v528
    %1420 = vmatpush1.msra.mxu0 %v527
    %1421 = vmatprep.subr.mxu0 %v524
    %1422 = vmatpush1.msra.mxu0 %v523
    %1423 = vmatprep.subr.mxu0 %v520
    %1424 = vmatpush1.msra.mxu0 %v519
    %1425 = vmatprep.subr.mxu0 %v516
    %1426 = vmatpush1.msra.mxu0 %v515
    %1427 = vmatprep.subr.mxu0 %v512
    %1428 = vmatpush1.msra.mxu0 %v511
    %1429 = vmatprep.subr.mxu0 %v508
    %1430 = vmatpush1.msra.mxu0 %v507
    %1431 = vmatprep.subr.mxu0 %v504
    %1432 = vmatpush1.msra.mxu0 %v503
    %1433 = vmatprep.subr.mxu0 %v500
    %1434 = vmatpush1.msra.mxu0 %v499
    %1435 = vmatprep.subr.mxu0 %v496
    %1436 = vmatpush1.msra.mxu0 %v495
    %1437 = vmatprep.subr.mxu0 %v492
    %1438 = vmatpush1.msra.mxu0 %v491
    %1439 = vmatprep.subr.mxu0 %v488
    %1440 = vmatpush1.msra.mxu0 %v487
    %1441 = vmatprep.subr.mxu0 %v484
    %1442 = vmatpush1.msra.mxu0 %v483
    %1443 = vmatprep.subr.mxu0 %v480
    %1444 = vmatpush1.msra.mxu0 %v479
    %1445 = vmatprep.subr.mxu0 %v476
    %1446 = vmatpush1.msra.mxu0 %v475
    %1447 = vmatprep.subr.mxu0 %v472
    %1448 = vmatpush1.msra.mxu0 %v471
    %1449 = vmatprep.subr.mxu0 %v468
    %1450 = vmatpush1.msra.mxu0 %v467
    %1451 = vmatprep.subr.mxu0 0.0
    %1452 = vmatpush2.msra.mxu0 0.0
    %1453 = vmatprep.subr.mxu0 0.0
    %1454 = vmatpush2.msra.mxu0 0.0
    %1455 = vmatprep.subr.mxu0 0.0
    %1456 = vmatpush2.msra.mxu0 0.0
    %1457 = vmatprep.subr.mxu0 0.0
    %1458 = vmatpush2.msra.mxu0 0.0
    %1459 = vmatprep.subr.mxu0 0.0
    %1460 = vmatpush2.msra.mxu0 0.0
    %1461 = vmatprep.subr.mxu0 0.0
    %1462 = vmatpush2.msra.mxu0 0.0
    %1463 = vmatprep.subr.mxu0 0.0
    %1464 = vmatpush2.msra.mxu0 0.0
    %1465 = vmatprep.subr.mxu0 0.0
    %1466 = vmatpush2.msra.mxu0 0.0
    %1467 = vmatprep.subr.mxu0 0.0
    %1468 = vmatpush2.msra.mxu0 0.0
    %1469 = vmatprep.subr.mxu0 0.0
    %1470 = vmatpush2.msra.mxu0 0.0
    %1471 = vmatprep.subr.mxu0 0.0
    %1472 = vmatpush2.msra.mxu0 0.0
    %1473 = vmatprep.subr.mxu0 0.0
    %1474 = vmatpush2.msra.mxu0 0.0
    %1475 = vmatprep.subr.mxu0 0.0
    %1476 = vmatpush2.msra.mxu0 0.0
    %1477 = vmatprep.subr.mxu0 0.0
    %1478 = vmatpush2.msra.mxu0 0.0
    %1479 = vmatprep.subr.mxu0 0.0
    %1480 = vmatpush2.msra.mxu0 0.0
    %1481 = vmatprep.subr.mxu0 0.0
    %1482 = vmatpush2.msra.mxu0 0.0
    %1483 = vmatprep.mubr.f32.mxu0 0.0
    %1484 = vmatmul.mubr.f32.gmra.mxu0 %v1411
    %v1485 = vpop.f32.mrf.mxu0
    %v1486 = vadd.f32 0.0, %v1485
    %v1487 = vpop.f32.mrf.mxu0
    %v1488 = vadd.f32 0.0, %v1487
    %1489 = vdwg.mxu0
    %1490 = vmatprep.subr.mxu0 %v530
    %1491 = vmatpush1.msra.mxu0 %v529
    %1492 = vmatprep.subr.mxu0 %v526
    %1493 = vmatpush1.msra.mxu0 %v525
    %1494 = vmatprep.subr.mxu0 %v522
    %1495 = vmatpush1.msra.mxu0 %v521
    %1496 = vmatprep.subr.mxu0 %v518
    %1497 = vmatpush1.msra.mxu0 %v517
    %1498 = vmatprep.subr.mxu0 %v514
    %1499 = vmatpush1.msra.mxu0 %v513
    %1500 = vmatprep.subr.mxu0 %v510
    %1501 = vmatpush1.msra.mxu0 %v509
    %1502 = vmatprep.subr.mxu0 %v506
    %1503 = vmatpush1.msra.mxu0 %v505
    %1504 = vmatprep.subr.mxu0 %v502
    %1505 = vmatpush1.msra.mxu0 %v501
    %1506 = vmatprep.subr.mxu0 %v498
    %1507 = vmatpush1.msra.mxu0 %v497
    %1508 = vmatprep.subr.mxu0 %v494
    %1509 = vmatpush1.msra.mxu0 %v493
    %1510 = vmatprep.subr.mxu0 %v490
    %1511 = vmatpush1.msra.mxu0 %v489
    %1512 = vmatprep.subr.mxu0 %v486
    %1513 = vmatpush1.msra.mxu0 %v485
    %1514 = vmatprep.subr.mxu0 %v482
    %1515 = vmatpush1.msra.mxu0 %v481
    %1516 = vmatprep.subr.mxu0 %v478
    %1517 = vmatpush1.msra.mxu0 %v477
    %1518 = vmatprep.subr.mxu0 %v474
    %1519 = vmatpush1.msra.mxu0 %v473
    %1520 = vmatprep.subr.mxu0 %v470
    %1521 = vmatpush1.msra.mxu0 %v469
    %1522 = vmatprep.subr.mxu0 0.0
    %1523 = vmatpush2.msra.mxu0 0.0
    %1524 = vmatprep.subr.mxu0 0.0
    %1525 = vmatpush2.msra.mxu0 0.0
    %1526 = vmatprep.subr.mxu0 0.0
    %1527 = vmatpush2.msra.mxu0 0.0
    %1528 = vmatprep.subr.mxu0 0.0
    %1529 = vmatpush2.msra.mxu0 0.0
    %1530 = vmatprep.subr.mxu0 0.0
    %1531 = vmatpush2.msra.mxu0 0.0
    %1532 = vmatprep.subr.mxu0 0.0
    %1533 = vmatpush2.msra.mxu0 0.0
    %1534 = vmatprep.subr.mxu0 0.0
    %1535 = vmatpush2.msra.mxu0 0.0
    %1536 = vmatprep.subr.mxu0 0.0
    %1537 = vmatpush2.msra.mxu0 0.0
    %1538 = vmatprep.subr.mxu0 0.0
    %1539 = vmatpush2.msra.mxu0 0.0
    %1540 = vmatprep.subr.mxu0 0.0
    %1541 = vmatpush2.msra.mxu0 0.0
    %1542 = vmatprep.subr.mxu0 0.0
    %1543 = vmatpush2.msra.mxu0 0.0
    %1544 = vmatprep.subr.mxu0 0.0
    %1545 = vmatpush2.msra.mxu0 0.0
    %1546 = vmatprep.subr.mxu0 0.0
    %1547 = vmatpush2.msra.mxu0 0.0
    %1548 = vmatprep.subr.mxu0 0.0
    %1549 = vmatpush2.msra.mxu0 0.0
    %1550 = vmatprep.subr.mxu0 0.0
    %1551 = vmatpush2.msra.mxu0 0.0
    %1552 = vmatprep.subr.mxu0 0.0
    %1553 = vmatpush2.msra.mxu0 0.0
    %1554 = vmatprep.mubr.f32.mxu0 0.0
    %1555 = vmatmul.mubr.f32.gmra.mxu0 %v1411
    %v1556 = vpop.f32.mrf.mxu0
    %v1557 = vadd.f32 0.0, %v1556
    %v1558 = vpop.f32.mrf.mxu0
    %v1559 = vadd.f32 0.0, %v1558
    %1560 = vdwg.mxu0
    %v1561 = vadd.f32 %v1415, %v1486
    %v1562 = vadd.f32 %v1416, %v1488
    %v1563 = vadd.f32 %v1417, %v1557
    %v1564 = vadd.f32 %v1418, %v1559
    %v1565 = vxor.u32 %v1561, 2147483648
    %v1566 = vmul.f32 %v1565, 1.442695
    %v1567 = vpow.pop %v1566
    %v1568 = vadd.f32 %v1567, 1.0
    %v1569 = vrcp.pop %v1568
    %v1570 = vmul.f32 1.0, %v1569
    %v1571 = vxor.u32 %v1562, 2147483648
    %v1572 = vmul.f32 %v1571, 1.442695
    %v1573 = vpow.pop %v1572
    %v1574 = vadd.f32 %v1573, 1.0
    %v1575 = vrcp.pop %v1574
    %v1576 = vmul.f32 1.0, %v1575
    %v1577 = vtanh.pop %v1563
    %v1578 = vxor.u32 %v1564, 2147483648
    %v1579 = vmul.f32 %v1578, 1.442695
    %v1580 = vpow.pop %v1579
    %v1581 = vadd.f32 %v1580, 1.0
    %v1582 = vrcp.pop %v1581
    %v1583 = vmul.f32 1.0, %v1582
    %v1584 = vmul.f32 %v1576, %v1409
    %v1585 = vmul.f32 %v1570, %v1577
    %v1586 = vadd.f32 %v1584, %v1585
    %v1587 = vtanh.pop %v1586
    %v1588 = vmul.f32 %v1583, %v1587
    %s1589 = scalar_lea.vmem [#allocation2], 40
    %1590 = vst [vmem:[%s1589] sm:$0xff] %v1588
    %s1591 = scalar_lea.vmem [#allocation3], 192
    %v1592 = vld [vmem:[%s1591] sm:$0xff]
    %v1593 = vld [vmem:[%s1591 + $0x8] sm:$0xff]
    %v1594 = vld [vmem:[%s1591 + $0x10] sm:$0xff]
    %v1595 = vld [vmem:[%s1591 + $0x18] sm:$0xff]
    %1596 = vmatprep.subr.mxu0 %v528
    %1597 = vmatpush1.msra.mxu0 %v527
    %1598 = vmatprep.subr.mxu0 %v524
    %1599 = vmatpush1.msra.mxu0 %v523
    %1600 = vmatprep.subr.mxu0 %v520
    %1601 = vmatpush1.msra.mxu0 %v519
    %1602 = vmatprep.subr.mxu0 %v516
    %1603 = vmatpush1.msra.mxu0 %v515
    %1604 = vmatprep.subr.mxu0 %v512
    %1605 = vmatpush1.msra.mxu0 %v511
    %1606 = vmatprep.subr.mxu0 %v508
    %1607 = vmatpush1.msra.mxu0 %v507
    %1608 = vmatprep.subr.mxu0 %v504
    %1609 = vmatpush1.msra.mxu0 %v503
    %1610 = vmatprep.subr.mxu0 %v500
    %1611 = vmatpush1.msra.mxu0 %v499
    %1612 = vmatprep.subr.mxu0 %v496
    %1613 = vmatpush1.msra.mxu0 %v495
    %1614 = vmatprep.subr.mxu0 %v492
    %1615 = vmatpush1.msra.mxu0 %v491
    %1616 = vmatprep.subr.mxu0 %v488
    %1617 = vmatpush1.msra.mxu0 %v487
    %1618 = vmatprep.subr.mxu0 %v484
    %1619 = vmatpush1.msra.mxu0 %v483
    %1620 = vmatprep.subr.mxu0 %v480
    %1621 = vmatpush1.msra.mxu0 %v479
    %1622 = vmatprep.subr.mxu0 %v476
    %1623 = vmatpush1.msra.mxu0 %v475
    %1624 = vmatprep.subr.mxu0 %v472
    %1625 = vmatpush1.msra.mxu0 %v471
    %1626 = vmatprep.subr.mxu0 %v468
    %1627 = vmatpush1.msra.mxu0 %v467
    %1628 = vmatprep.subr.mxu0 0.0
    %1629 = vmatpush2.msra.mxu0 0.0
    %1630 = vmatprep.subr.mxu0 0.0
    %1631 = vmatpush2.msra.mxu0 0.0
    %1632 = vmatprep.subr.mxu0 0.0
    %1633 = vmatpush2.msra.mxu0 0.0
    %1634 = vmatprep.subr.mxu0 0.0
    %1635 = vmatpush2.msra.mxu0 0.0
    %1636 = vmatprep.subr.mxu0 0.0
    %1637 = vmatpush2.msra.mxu0 0.0
    %1638 = vmatprep.subr.mxu0 0.0
    %1639 = vmatpush2.msra.mxu0 0.0
    %1640 = vmatprep.subr.mxu0 0.0
    %1641 = vmatpush2.msra.mxu0 0.0
    %1642 = vmatprep.subr.mxu0 0.0
    %1643 = vmatpush2.msra.mxu0 0.0
    %1644 = vmatprep.subr.mxu0 0.0
    %1645 = vmatpush2.msra.mxu0 0.0
    %1646 = vmatprep.subr.mxu0 0.0
    %1647 = vmatpush2.msra.mxu0 0.0
    %1648 = vmatprep.subr.mxu0 0.0
    %1649 = vmatpush2.msra.mxu0 0.0
    %1650 = vmatprep.subr.mxu0 0.0
    %1651 = vmatpush2.msra.mxu0 0.0
    %1652 = vmatprep.subr.mxu0 0.0
    %1653 = vmatpush2.msra.mxu0 0.0
    %1654 = vmatprep.subr.mxu0 0.0
    %1655 = vmatpush2.msra.mxu0 0.0
    %1656 = vmatprep.subr.mxu0 0.0
    %1657 = vmatpush2.msra.mxu0 0.0
    %1658 = vmatprep.subr.mxu0 0.0
    %1659 = vmatpush2.msra.mxu0 0.0
    %1660 = vmatprep.mubr.f32.mxu0 0.0
    %1661 = vmatmul.mubr.f32.gmra.mxu0 %v1588
    %v1662 = vpop.f32.mrf.mxu0
    %v1663 = vadd.f32 0.0, %v1662
    %v1664 = vpop.f32.mrf.mxu0
    %v1665 = vadd.f32 0.0, %v1664
    %1666 = vdwg.mxu0
    %1667 = vmatprep.subr.mxu0 %v530
    %1668 = vmatpush1.msra.mxu0 %v529
    %1669 = vmatprep.subr.mxu0 %v526
    %1670 = vmatpush1.msra.mxu0 %v525
    %1671 = vmatprep.subr.mxu0 %v522
    %1672 = vmatpush1.msra.mxu0 %v521
    %1673 = vmatprep.subr.mxu0 %v518
    %1674 = vmatpush1.msra.mxu0 %v517
    %1675 = vmatprep.subr.mxu0 %v514
    %1676 = vmatpush1.msra.mxu0 %v513
    %1677 = vmatprep.subr.mxu0 %v510
    %1678 = vmatpush1.msra.mxu0 %v509
    %1679 = vmatprep.subr.mxu0 %v506
    %1680 = vmatpush1.msra.mxu0 %v505
    %1681 = vmatprep.subr.mxu0 %v502
    %1682 = vmatpush1.msra.mxu0 %v501
    %1683 = vmatprep.subr.mxu0 %v498
    %1684 = vmatpush1.msra.mxu0 %v497
    %1685 = vmatprep.subr.mxu0 %v494
    %1686 = vmatpush1.msra.mxu0 %v493
    %1687 = vmatprep.subr.mxu0 %v490
    %1688 = vmatpush1.msra.mxu0 %v489
    %1689 = vmatprep.subr.mxu0 %v486
    %1690 = vmatpush1.msra.mxu0 %v485
    %1691 = vmatprep.subr.mxu0 %v482
    %1692 = vmatpush1.msra.mxu0 %v481
    %1693 = vmatprep.subr.mxu0 %v478
    %1694 = vmatpush1.msra.mxu0 %v477
    %1695 = vmatprep.subr.mxu0 %v474
    %1696 = vmatpush1.msra.mxu0 %v473
    %1697 = vmatprep.subr.mxu0 %v470
    %1698 = vmatpush1.msra.mxu0 %v469
    %1699 = vmatprep.subr.mxu0 0.0
    %1700 = vmatpush2.msra.mxu0 0.0
    %1701 = vmatprep.subr.mxu0 0.0
    %1702 = vmatpush2.msra.mxu0 0.0
    %1703 = vmatprep.subr.mxu0 0.0
    %1704 = vmatpush2.msra.mxu0 0.0
    %1705 = vmatprep.subr.mxu0 0.0
    %1706 = vmatpush2.msra.mxu0 0.0
    %1707 = vmatprep.subr.mxu0 0.0
    %1708 = vmatpush2.msra.mxu0 0.0
    %1709 = vmatprep.subr.mxu0 0.0
    %1710 = vmatpush2.msra.mxu0 0.0
    %1711 = vmatprep.subr.mxu0 0.0
    %1712 = vmatpush2.msra.mxu0 0.0
    %1713 = vmatprep.subr.mxu0 0.0
    %1714 = vmatpush2.msra.mxu0 0.0
    %1715 = vmatprep.subr.mxu0 0.0
    %1716 = vmatpush2.msra.mxu0 0.0
    %1717 = vmatprep.subr.mxu0 0.0
    %1718 = vmatpush2.msra.mxu0 0.0
    %1719 = vmatprep.subr.mxu0 0.0
    %1720 = vmatpush2.msra.mxu0 0.0
    %1721 = vmatprep.subr.mxu0 0.0
    %1722 = vmatpush2.msra.mxu0 0.0
    %1723 = vmatprep.subr.mxu0 0.0
    %1724 = vmatpush2.msra.mxu0 0.0
    %1725 = vmatprep.subr.mxu0 0.0
    %1726 = vmatpush2.msra.mxu0 0.0
    %1727 = vmatprep.subr.mxu0 0.0
    %1728 = vmatpush2.msra.mxu0 0.0
    %1729 = vmatprep.subr.mxu0 0.0
    %1730 = vmatpush2.msra.mxu0 0.0
    %1731 = vmatprep.mubr.f32.mxu0 0.0
    %1732 = vmatmul.mubr.f32.gmra.mxu0 %v1588
    %v1733 = vpop.f32.mrf.mxu0
    %v1734 = vadd.f32 0.0, %v1733
    %v1735 = vpop.f32.mrf.mxu0
    %v1736 = vadd.f32 0.0, %v1735
    %1737 = vdwg.mxu0
    %v1738 = vadd.f32 %v1592, %v1663
    %v1739 = vadd.f32 %v1593, %v1665
    %v1740 = vadd.f32 %v1594, %v1734
    %v1741 = vadd.f32 %v1595, %v1736
    %v1742 = vxor.u32 %v1738, 2147483648
    %v1743 = vmul.f32 %v1742, 1.442695
    %v1744 = vpow.pop %v1743
    %v1745 = vadd.f32 %v1744, 1.0
    %v1746 = vrcp.pop %v1745
    %v1747 = vmul.f32 1.0, %v1746
    %v1748 = vxor.u32 %v1739, 2147483648
    %v1749 = vmul.f32 %v1748, 1.442695
    %v1750 = vpow.pop %v1749
    %v1751 = vadd.f32 %v1750, 1.0
    %v1752 = vrcp.pop %v1751
    %v1753 = vmul.f32 1.0, %v1752
    %v1754 = vtanh.pop %v1740
    %v1755 = vxor.u32 %v1741, 2147483648
    %v1756 = vmul.f32 %v1755, 1.442695
    %v1757 = vpow.pop %v1756
    %v1758 = vadd.f32 %v1757, 1.0
    %v1759 = vrcp.pop %v1758
    %v1760 = vmul.f32 1.0, %v1759
    %v1761 = vmul.f32 %v1753, %v1586
    %v1762 = vmul.f32 %v1747, %v1754
    %v1763 = vadd.f32 %v1761, %v1762
    %v1764 = vtanh.pop %v1763
    %v1765 = vmul.f32 %v1760, %v1764
    %s1766 = scalar_lea.vmem [#allocation2], 48
    %1767 = vst [vmem:[%s1766] sm:$0xff] %v1765
    %s1768 = scalar_lea.vmem [#allocation3], 224
    %v1769 = vld [vmem:[%s1768] sm:$0xff]
    %v1770 = vld [vmem:[%s1768 + $0x8] sm:$0xff]
    %v1771 = vld [vmem:[%s1768 + $0x10] sm:$0xff]
    %v1772 = vld [vmem:[%s1768 + $0x18] sm:$0xff]
    %1773 = vmatprep.subr.mxu0 %v528
    %1774 = vmatpush1.msra.mxu0 %v527
    %1775 = vmatprep.subr.mxu0 %v524
    %1776 = vmatpush1.msra.mxu0 %v523
    %1777 = vmatprep.subr.mxu0 %v520
    %1778 = vmatpush1.msra.mxu0 %v519
    %1779 = vmatprep.subr.mxu0 %v516
    %1780 = vmatpush1.msra.mxu0 %v515
    %1781 = vmatprep.subr.mxu0 %v512
    %1782 = vmatpush1.msra.mxu0 %v511
    %1783 = vmatprep.subr.mxu0 %v508
    %1784 = vmatpush1.msra.mxu0 %v507
    %1785 = vmatprep.subr.mxu0 %v504
    %1786 = vmatpush1.msra.mxu0 %v503
    %1787 = vmatprep.subr.mxu0 %v500
    %1788 = vmatpush1.msra.mxu0 %v499
    %1789 = vmatprep.subr.mxu0 %v496
    %1790 = vmatpush1.msra.mxu0 %v495
    %1791 = vmatprep.subr.mxu0 %v492
    %1792 = vmatpush1.msra.mxu0 %v491
    %1793 = vmatprep.subr.mxu0 %v488
    %1794 = vmatpush1.msra.mxu0 %v487
    %1795 = vmatprep.subr.mxu0 %v484
    %1796 = vmatpush1.msra.mxu0 %v483
    %1797 = vmatprep.subr.mxu0 %v480
    %1798 = vmatpush1.msra.mxu0 %v479
    %1799 = vmatprep.subr.mxu0 %v476
    %1800 = vmatpush1.msra.mxu0 %v475
    %1801 = vmatprep.subr.mxu0 %v472
    %1802 = vmatpush1.msra.mxu0 %v471
    %1803 = vmatprep.subr.mxu0 %v468
    %1804 = vmatpush1.msra.mxu0 %v467
    %1805 = vmatprep.subr.mxu0 0.0
    %1806 = vmatpush2.msra.mxu0 0.0
    %1807 = vmatprep.subr.mxu0 0.0
    %1808 = vmatpush2.msra.mxu0 0.0
    %1809 = vmatprep.subr.mxu0 0.0
    %1810 = vmatpush2.msra.mxu0 0.0
    %1811 = vmatprep.subr.mxu0 0.0
    %1812 = vmatpush2.msra.mxu0 0.0
    %1813 = vmatprep.subr.mxu0 0.0
    %1814 = vmatpush2.msra.mxu0 0.0
    %1815 = vmatprep.subr.mxu0 0.0
    %1816 = vmatpush2.msra.mxu0 0.0
    %1817 = vmatprep.subr.mxu0 0.0
    %1818 = vmatpush2.msra.mxu0 0.0
    %1819 = vmatprep.subr.mxu0 0.0
    %1820 = vmatpush2.msra.mxu0 0.0
    %1821 = vmatprep.subr.mxu0 0.0
    %1822 = vmatpush2.msra.mxu0 0.0
    %1823 = vmatprep.subr.mxu0 0.0
    %1824 = vmatpush2.msra.mxu0 0.0
    %1825 = vmatprep.subr.mxu0 0.0
    %1826 = vmatpush2.msra.mxu0 0.0
    %1827 = vmatprep.subr.mxu0 0.0
    %1828 = vmatpush2.msra.mxu0 0.0
    %1829 = vmatprep.subr.mxu0 0.0
    %1830 = vmatpush2.msra.mxu0 0.0
    %1831 = vmatprep.subr.mxu0 0.0
    %1832 = vmatpush2.msra.mxu0 0.0
    %1833 = vmatprep.subr.mxu0 0.0
    %1834 = vmatpush2.msra.mxu0 0.0
    %1835 = vmatprep.subr.mxu0 0.0
    %1836 = vmatpush2.msra.mxu0 0.0
    %1837 = vmatprep.mubr.f32.mxu0 0.0
    %1838 = vmatmul.mubr.f32.gmra.mxu0 %v1765
    %v1839 = vpop.f32.mrf.mxu0
    %v1840 = vadd.f32 0.0, %v1839
    %v1841 = vpop.f32.mrf.mxu0
    %v1842 = vadd.f32 0.0, %v1841
    %1843 = vdwg.mxu0
    %1844 = vmatprep.subr.mxu0 %v530
    %1845 = vmatpush1.msra.mxu0 %v529
    %1846 = vmatprep.subr.mxu0 %v526
    %1847 = vmatpush1.msra.mxu0 %v525
    %1848 = vmatprep.subr.mxu0 %v522
    %1849 = vmatpush1.msra.mxu0 %v521
    %1850 = vmatprep.subr.mxu0 %v518
    %1851 = vmatpush1.msra.mxu0 %v517
    %1852 = vmatprep.subr.mxu0 %v514
    %1853 = vmatpush1.msra.mxu0 %v513
    %1854 = vmatprep.subr.mxu0 %v510
    %1855 = vmatpush1.msra.mxu0 %v509
    %1856 = vmatprep.subr.mxu0 %v506
    %1857 = vmatpush1.msra.mxu0 %v505
    %1858 = vmatprep.subr.mxu0 %v502
    %1859 = vmatpush1.msra.mxu0 %v501
    %1860 = vmatprep.subr.mxu0 %v498
    %1861 = vmatpush1.msra.mxu0 %v497
    %1862 = vmatprep.subr.mxu0 %v494
    %1863 = vmatpush1.msra.mxu0 %v493
    %1864 = vmatprep.subr.mxu0 %v490
    %1865 = vmatpush1.msra.mxu0 %v489
    %1866 = vmatprep.subr.mxu0 %v486
    %1867 = vmatpush1.msra.mxu0 %v485
    %1868 = vmatprep.subr.mxu0 %v482
    %1869 = vmatpush1.msra.mxu0 %v481
    %1870 = vmatprep.subr.mxu0 %v478
    %1871 = vmatpush1.msra.mxu0 %v477
    %1872 = vmatprep.subr.mxu0 %v474
    %1873 = vmatpush1.msra.mxu0 %v473
    %1874 = vmatprep.subr.mxu0 %v470
    %1875 = vmatpush1.msra.mxu0 %v469
    %1876 = vmatprep.subr.mxu0 0.0
    %1877 = vmatpush2.msra.mxu0 0.0
    %1878 = vmatprep.subr.mxu0 0.0
    %1879 = vmatpush2.msra.mxu0 0.0
    %1880 = vmatprep.subr.mxu0 0.0
    %1881 = vmatpush2.msra.mxu0 0.0
    %1882 = vmatprep.subr.mxu0 0.0
    %1883 = vmatpush2.msra.mxu0 0.0
    %1884 = vmatprep.subr.mxu0 0.0
    %1885 = vmatpush2.msra.mxu0 0.0
    %1886 = vmatprep.subr.mxu0 0.0
    %1887 = vmatpush2.msra.mxu0 0.0
    %1888 = vmatprep.subr.mxu0 0.0
    %1889 = vmatpush2.msra.mxu0 0.0
    %1890 = vmatprep.subr.mxu0 0.0
    %1891 = vmatpush2.msra.mxu0 0.0
    %1892 = vmatprep.subr.mxu0 0.0
    %1893 = vmatpush2.msra.mxu0 0.0
    %1894 = vmatprep.subr.mxu0 0.0
    %1895 = vmatpush2.msra.mxu0 0.0
    %1896 = vmatprep.subr.mxu0 0.0
    %1897 = vmatpush2.msra.mxu0 0.0
    %1898 = vmatprep.subr.mxu0 0.0
    %1899 = vmatpush2.msra.mxu0 0.0
    %1900 = vmatprep.subr.mxu0 0.0
    %1901 = vmatpush2.msra.mxu0 0.0
    %1902 = vmatprep.subr.mxu0 0.0
    %1903 = vmatpush2.msra.mxu0 0.0
    %1904 = vmatprep.subr.mxu0 0.0
    %1905 = vmatpush2.msra.mxu0 0.0
    %1906 = vmatprep.subr.mxu0 0.0
    %1907 = vmatpush2.msra.mxu0 0.0
    %1908 = vmatprep.mubr.f32.mxu0 0.0
    %1909 = vmatmul.mubr.f32.gmra.mxu0 %v1765
    %v1910 = vpop.f32.mrf.mxu0
    %v1911 = vadd.f32 0.0, %v1910
    %v1912 = vpop.f32.mrf.mxu0
    %v1913 = vadd.f32 0.0, %v1912
    %1914 = vdwg.mxu0
    %v1915 = vadd.f32 %v1769, %v1840
    %v1916 = vadd.f32 %v1770, %v1842
    %v1917 = vadd.f32 %v1771, %v1911
    %v1918 = vadd.f32 %v1772, %v1913
    %v1919 = vxor.u32 %v1915, 2147483648
    %v1920 = vmul.f32 %v1919, 1.442695
    %v1921 = vpow.pop %v1920
    %v1922 = vadd.f32 %v1921, 1.0
    %v1923 = vrcp.pop %v1922
    %v1924 = vmul.f32 1.0, %v1923
    %v1925 = vxor.u32 %v1916, 2147483648
    %v1926 = vmul.f32 %v1925, 1.442695
    %v1927 = vpow.pop %v1926
    %v1928 = vadd.f32 %v1927, 1.0
    %v1929 = vrcp.pop %v1928
    %v1930 = vmul.f32 1.0, %v1929
    %v1931 = vtanh.pop %v1917
    %v1932 = vxor.u32 %v1918, 2147483648
    %v1933 = vmul.f32 %v1932, 1.442695
    %v1934 = vpow.pop %v1933
    %v1935 = vadd.f32 %v1934, 1.0
    %v1936 = vrcp.pop %v1935
    %v1937 = vmul.f32 1.0, %v1936
    %v1938 = vmul.f32 %v1930, %v1763
    %v1939 = vmul.f32 %v1924, %v1931
    %v1940 = vadd.f32 %v1938, %v1939
    %v1941 = vtanh.pop %v1940
    %v1942 = vmul.f32 %v1937, %v1941
    %s1943 = scalar_lea.vmem [#allocation2], 56
    %1944 = vst [vmem:[%s1943] sm:$0xff] %v1942
    %v1945 = vld [vmem:[#allocation2] sm:$0xff]
    %v1946 = vld [vmem:[#allocation2 + $0x8] sm:$0xff]
    %v1947 = vld [vmem:[#allocation2 + $0x10] sm:$0xff]
    %v1948 = vld [vmem:[#allocation2 + $0x18] sm:$0xff]
    %v1949 = vld [vmem:[#allocation2 + $0x20] sm:$0xff]
    %v1950 = vld [vmem:[#allocation2 + $0x28] sm:$0xff]
    %v1951 = vld [vmem:[#allocation2 + $0x30] sm:$0xff]
    %v1952 = vld [vmem:[#allocation2 + $0x38] sm:$0xff]
    %v1953 = vld [vmem:[#allocation10] sm:$0xff]
    %v1954 = vld [vmem:[#allocation10 + $0x8] sm:$0xff]
    %v1955 = vld [vmem:[#allocation10 + $0x10] sm:$0xff]
    %v1956 = vld [vmem:[#allocation10 + $0x18] sm:$0xff]
    %v1957 = vld [vmem:[#allocation10 + $0x20] sm:$0xff]
    %v1958 = vld [vmem:[#allocation10 + $0x28] sm:$0xff]
    %v1959 = vld [vmem:[#allocation10 + $0x30] sm:$0xff]
    %v1960 = vld [vmem:[#allocation10 + $0x38] sm:$0xff]
    %v1961 = vld [vmem:[#allocation10 + $0x40] sm:$0xff]
    %v1962 = vld [vmem:[#allocation10 + $0x48] sm:$0xff]
    %v1963 = vld [vmem:[#allocation10 + $0x50] sm:$0xff]
    %v1964 = vld [vmem:[#allocation10 + $0x58] sm:$0xff]
    %v1965 = vld [vmem:[#allocation10 + $0x60] sm:$0xff]
    %v1966 = vld [vmem:[#allocation10 + $0x68] sm:$0xff]
    %v1967 = vld [vmem:[#allocation10 + $0x70] sm:$0xff]
    %v1968 = vld [vmem:[#allocation10 + $0x78] sm:$0xff]
    %v1969 = vld [vmem:[#allocation10 + $0x80] sm:$0xff]
    %v1970 = vld [vmem:[#allocation10 + $0x88] sm:$0xff]
    %v1971 = vld [vmem:[#allocation10 + $0x90] sm:$0xff]
    %v1972 = vld [vmem:[#allocation10 + $0x98] sm:$0xff]
    %v1973 = vld [vmem:[#allocation10 + $0xa0] sm:$0xff]
    %v1974 = vld [vmem:[#allocation10 + $0xa8] sm:$0xff]
    %v1975 = vld [vmem:[#allocation10 + $0xb0] sm:$0xff]
    %v1976 = vld [vmem:[#allocation10 + $0xb8] sm:$0xff]
    %v1977 = vld [vmem:[#allocation10 + $0xc0] sm:$0xff]
    %v1978 = vld [vmem:[#allocation10 + $0xc8] sm:$0xff]
    %v1979 = vld [vmem:[#allocation10 + $0xd0] sm:$0xff]
    %v1980 = vld [vmem:[#allocation10 + $0xd8] sm:$0xff]
    %v1981 = vld [vmem:[#allocation10 + $0xe0] sm:$0xff]
    %v1982 = vld [vmem:[#allocation10 + $0xe8] sm:$0xff]
    %v1983 = vld [vmem:[#allocation10 + $0xf0] sm:$0xff]
    %v1984 = vld [vmem:[#allocation10 + $0xf8] sm:$0xff]
    %v1985 = vld [vmem:[#allocation10 + $0x100] sm:$0xff]
    %v1986 = vld [vmem:[#allocation10 + $0x108] sm:$0xff]
    %v1987 = vld [vmem:[#allocation10 + $0x110] sm:$0xff]
    %v1988 = vld [vmem:[#allocation10 + $0x118] sm:$0xff]
    %v1989 = vld [vmem:[#allocation10 + $0x120] sm:$0xff]
    %v1990 = vld [vmem:[#allocation10 + $0x128] sm:$0xff]
    %v1991 = vld [vmem:[#allocation10 + $0x130] sm:$0xff]
    %v1992 = vld [vmem:[#allocation10 + $0x138] sm:$0xff]
    %v1993 = vld [vmem:[#allocation10 + $0x140] sm:$0xff]
    %v1994 = vld [vmem:[#allocation10 + $0x148] sm:$0xff]
    %v1995 = vld [vmem:[#allocation10 + $0x150] sm:$0xff]
    %v1996 = vld [vmem:[#allocation10 + $0x158] sm:$0xff]
    %v1997 = vld [vmem:[#allocation10 + $0x160] sm:$0xff]
    %v1998 = vld [vmem:[#allocation10 + $0x168] sm:$0xff]
    %v1999 = vld [vmem:[#allocation10 + $0x170] sm:$0xff]
    %v2000 = vld [vmem:[#allocation10 + $0x178] sm:$0xff]
    %v2001 = vld [vmem:[#allocation10 + $0x180] sm:$0xff]
    %v2002 = vld [vmem:[#allocation10 + $0x188] sm:$0xff]
    %v2003 = vld [vmem:[#allocation10 + $0x190] sm:$0xff]
    %v2004 = vld [vmem:[#allocation10 + $0x198] sm:$0xff]
    %v2005 = vld [vmem:[#allocation10 + $0x1a0] sm:$0xff]
    %v2006 = vld [vmem:[#allocation10 + $0x1a8] sm:$0xff]
    %v2007 = vld [vmem:[#allocation10 + $0x1b0] sm:$0xff]
    %v2008 = vld [vmem:[#allocation10 + $0x1b8] sm:$0xff]
    %v2009 = vld [vmem:[#allocation10 + $0x1c0] sm:$0xff]
    %v2010 = vld [vmem:[#allocation10 + $0x1c8] sm:$0xff]
    %v2011 = vld [vmem:[#allocation10 + $0x1d0] sm:$0xff]
    %v2012 = vld [vmem:[#allocation10 + $0x1d8] sm:$0xff]
    %v2013 = vld [vmem:[#allocation10 + $0x1e0] sm:$0xff]
    %v2014 = vld [vmem:[#allocation10 + $0x1e8] sm:$0xff]
    %v2015 = vld [vmem:[#allocation10 + $0x1f0] sm:$0xff]
    %v2016 = vld [vmem:[#allocation10 + $0x1f8] sm:$0xff]
    %v2017 = vld [vmem:[%s6] sm:$0xf]
    %v2019 = vlaneseq
    %v2020 = vshrl.u32 %v2019, 7
    %v2021 = vsub.s32 0, %v2020
    %v2022 = vrot.slane %v2017, %v2021
    %v2023 = vlaneseq
    %v2024 = vshrl.u32 %v2023, 7
    %v2025 = vsub.s32 1, %v2024
    %v2026 = vrot.slane %v2017, %v2025
    %v2027 = vlaneseq
    %v2028 = vshrl.u32 %v2027, 7
    %v2029 = vsub.s32 2, %v2028
    %v2030 = vrot.slane %v2017, %v2029
    %v2031 = vlaneseq
    %v2032 = vshrl.u32 %v2031, 7
    %v2033 = vsub.s32 3, %v2032
    %v2034 = vrot.slane %v2017, %v2033
    %2039 = vmatprep.subr.mxu0 %v2014
    %2040 = vmatpush1.msra.mxu0 %v2013
    %2041 = vmatprep.subr.mxu0 %v2010
    %2042 = vmatpush1.msra.mxu0 %v2009
    %2043 = vmatprep.subr.mxu0 %v2006
    %2044 = vmatpush1.msra.mxu0 %v2005
    %2045 = vmatprep.subr.mxu0 %v2002
    %2046 = vmatpush1.msra.mxu0 %v2001
    %2047 = vmatprep.subr.mxu0 %v1998
    %2048 = vmatpush1.msra.mxu0 %v1997
    %2049 = vmatprep.subr.mxu0 %v1994
    %2050 = vmatpush1.msra.mxu0 %v1993
    %2051 = vmatprep.subr.mxu0 %v1990
    %2052 = vmatpush1.msra.mxu0 %v1989
    %2053 = vmatprep.subr.mxu0 %v1986
    %2054 = vmatpush1.msra.mxu0 %v1985
    %2055 = vmatprep.subr.mxu0 %v1982
    %2056 = vmatpush1.msra.mxu0 %v1981
    %2057 = vmatprep.subr.mxu0 %v1978
    %2058 = vmatpush1.msra.mxu0 %v1977
    %2059 = vmatprep.subr.mxu0 %v1974
    %2060 = vmatpush1.msra.mxu0 %v1973
    %2061 = vmatprep.subr.mxu0 %v1970
    %2062 = vmatpush1.msra.mxu0 %v1969
    %2063 = vmatprep.subr.mxu0 %v1966
    %2064 = vmatpush1.msra.mxu0 %v1965
    %2065 = vmatprep.subr.mxu0 %v1962
    %2066 = vmatpush1.msra.mxu0 %v1961
    %2067 = vmatprep.subr.mxu0 %v1958
    %2068 = vmatpush1.msra.mxu0 %v1957
    %2069 = vmatprep.subr.mxu0 %v1954
    %2070 = vmatpush1.msra.mxu0 %v1953
    %2071 = vmatprep.subr.mxu0 0.0
    %2072 = vmatpush2.msra.mxu0 0.0
    %2073 = vmatprep.subr.mxu0 0.0
    %2074 = vmatpush2.msra.mxu0 0.0
    %2075 = vmatprep.subr.mxu0 0.0
    %2076 = vmatpush2.msra.mxu0 0.0
    %2077 = vmatprep.subr.mxu0 0.0
    %2078 = vmatpush2.msra.mxu0 0.0
    %2079 = vmatprep.subr.mxu0 0.0
    %2080 = vmatpush2.msra.mxu0 0.0
    %2081 = vmatprep.subr.mxu0 0.0
    %2082 = vmatpush2.msra.mxu0 0.0
    %2083 = vmatprep.subr.mxu0 0.0
    %2084 = vmatpush2.msra.mxu0 0.0
    %2085 = vmatprep.subr.mxu0 0.0
    %2086 = vmatpush2.msra.mxu0 0.0
    %2087 = vmatprep.subr.mxu0 0.0
    %2088 = vmatpush2.msra.mxu0 0.0
    %2089 = vmatprep.subr.mxu0 0.0
    %2090 = vmatpush2.msra.mxu0 0.0
    %2091 = vmatprep.subr.mxu0 0.0
    %2092 = vmatpush2.msra.mxu0 0.0
    %2093 = vmatprep.subr.mxu0 0.0
    %2094 = vmatpush2.msra.mxu0 0.0
    %2095 = vmatprep.subr.mxu0 0.0
    %2096 = vmatpush2.msra.mxu0 0.0
    %2097 = vmatprep.subr.mxu0 0.0
    %2098 = vmatpush2.msra.mxu0 0.0
    %2099 = vmatprep.subr.mxu0 0.0
    %2100 = vmatpush2.msra.mxu0 0.0
    %2101 = vmatprep.subr.mxu0 0.0
    %2102 = vmatpush2.msra.mxu0 0.0
    %2103 = vmatprep.mubr.f32.mxu0 0.0
    %2104 = vmatmul.mubr.f32.gmra.mxu0 %v1945
    %v2105 = vpop.f32.mrf.mxu0
    %v2106 = vadd.f32 %v2022, %v2105
    %v2107 = vpop.f32.mrf.mxu0
    %v2108 = vadd.f32 %v2026, %v2107
    %2109 = vmatprep.mubr.f32.mxu0 0.0
    %2110 = vmatmul.mubr.f32.gmra.mxu0 %v1946
    %v2111 = vpop.f32.mrf.mxu0
    %v2112 = vadd.f32 %v2022, %v2111
    %v2113 = vpop.f32.mrf.mxu0
    %v2114 = vadd.f32 %v2026, %v2113
    %2115 = vmatprep.mubr.f32.mxu0 0.0
    %2116 = vmatmul.mubr.f32.gmra.mxu0 %v1947
    %v2117 = vpop.f32.mrf.mxu0
    %v2118 = vadd.f32 %v2022, %v2117
    %v2119 = vpop.f32.mrf.mxu0
    %v2120 = vadd.f32 %v2026, %v2119
    %2121 = vmatprep.mubr.f32.mxu0 0.0
    %2122 = vmatmul.mubr.f32.gmra.mxu0 %v1948
    %v2123 = vpop.f32.mrf.mxu0
    %v2124 = vadd.f32 %v2022, %v2123
    %v2125 = vpop.f32.mrf.mxu0
    %v2126 = vadd.f32 %v2026, %v2125
    %2127 = vmatprep.mubr.f32.mxu0 0.0
    %2128 = vmatmul.mubr.f32.gmra.mxu0 %v1949
    %v2129 = vpop.f32.mrf.mxu0
    %v2130 = vadd.f32 %v2022, %v2129
    %v2131 = vpop.f32.mrf.mxu0
    %v2132 = vadd.f32 %v2026, %v2131
    %2133 = vmatprep.mubr.f32.mxu0 0.0
    %2134 = vmatmul.mubr.f32.gmra.mxu0 %v1950
    %v2135 = vpop.f32.mrf.mxu0
    %v2136 = vadd.f32 %v2022, %v2135
    %v2137 = vpop.f32.mrf.mxu0
    %v2138 = vadd.f32 %v2026, %v2137
    %2139 = vmatprep.mubr.f32.mxu0 0.0
    %2140 = vmatmul.mubr.f32.gmra.mxu0 %v1951
    %v2141 = vpop.f32.mrf.mxu0
    %v2142 = vadd.f32 %v2022, %v2141
    %v2143 = vpop.f32.mrf.mxu0
    %v2144 = vadd.f32 %v2026, %v2143
    %2145 = vmatprep.mubr.f32.mxu0 0.0
    %2146 = vmatmul.mubr.f32.gmra.mxu0 %v1952
    %v2147 = vpop.f32.mrf.mxu0
    %v2148 = vadd.f32 %v2022, %v2147
    %v2149 = vpop.f32.mrf.mxu0
    %v2150 = vadd.f32 %v2026, %v2149
    %2151 = vdwg.mxu0
    %2152 = vmatprep.subr.mxu0 %v2016
    %2153 = vmatpush1.msra.mxu0 %v2015
    %2154 = vmatprep.subr.mxu0 %v2012
    %2155 = vmatpush1.msra.mxu0 %v2011
    %2156 = vmatprep.subr.mxu0 %v2008
    %2157 = vmatpush1.msra.mxu0 %v2007
    %2158 = vmatprep.subr.mxu0 %v2004
    %2159 = vmatpush1.msra.mxu0 %v2003
    %2160 = vmatprep.subr.mxu0 %v2000
    %2161 = vmatpush1.msra.mxu0 %v1999
    %2162 = vmatprep.subr.mxu0 %v1996
    %2163 = vmatpush1.msra.mxu0 %v1995
    %2164 = vmatprep.subr.mxu0 %v1992
    %2165 = vmatpush1.msra.mxu0 %v1991
    %2166 = vmatprep.subr.mxu0 %v1988
    %2167 = vmatpush1.msra.mxu0 %v1987
    %2168 = vmatprep.subr.mxu0 %v1984
    %2169 = vmatpush1.msra.mxu0 %v1983
    %2170 = vmatprep.subr.mxu0 %v1980
    %2171 = vmatpush1.msra.mxu0 %v1979
    %2172 = vmatprep.subr.mxu0 %v1976
    %2173 = vmatpush1.msra.mxu0 %v1975
    %2174 = vmatprep.subr.mxu0 %v1972
    %2175 = vmatpush1.msra.mxu0 %v1971
    %2176 = vmatprep.subr.mxu0 %v1968
    %2177 = vmatpush1.msra.mxu0 %v1967
    %2178 = vmatprep.subr.mxu0 %v1964
    %2179 = vmatpush1.msra.mxu0 %v1963
    %2180 = vmatprep.subr.mxu0 %v1960
    %2181 = vmatpush1.msra.mxu0 %v1959
    %2182 = vmatprep.subr.mxu0 %v1956
    %2183 = vmatpush1.msra.mxu0 %v1955
    %2184 = vmatprep.subr.mxu0 0.0
    %2185 = vmatpush2.msra.mxu0 0.0
    %2186 = vmatprep.subr.mxu0 0.0
    %2187 = vmatpush2.msra.mxu0 0.0
    %2188 = vmatprep.subr.mxu0 0.0
    %2189 = vmatpush2.msra.mxu0 0.0
    %2190 = vmatprep.subr.mxu0 0.0
    %2191 = vmatpush2.msra.mxu0 0.0
    %2192 = vmatprep.subr.mxu0 0.0
    %2193 = vmatpush2.msra.mxu0 0.0
    %2194 = vmatprep.subr.mxu0 0.0
    %2195 = vmatpush2.msra.mxu0 0.0
    %2196 = vmatprep.subr.mxu0 0.0
    %2197 = vmatpush2.msra.mxu0 0.0
    %2198 = vmatprep.subr.mxu0 0.0
    %2199 = vmatpush2.msra.mxu0 0.0
    %2200 = vmatprep.subr.mxu0 0.0
    %2201 = vmatpush2.msra.mxu0 0.0
    %2202 = vmatprep.subr.mxu0 0.0
    %2203 = vmatpush2.msra.mxu0 0.0
    %2204 = vmatprep.subr.mxu0 0.0
    %2205 = vmatpush2.msra.mxu0 0.0
    %2206 = vmatprep.subr.mxu0 0.0
    %2207 = vmatpush2.msra.mxu0 0.0
    %2208 = vmatprep.subr.mxu0 0.0
    %2209 = vmatpush2.msra.mxu0 0.0
    %2210 = vmatprep.subr.mxu0 0.0
    %2211 = vmatpush2.msra.mxu0 0.0
    %2212 = vmatprep.subr.mxu0 0.0
    %2213 = vmatpush2.msra.mxu0 0.0
    %2214 = vmatprep.subr.mxu0 0.0
    %2215 = vmatpush2.msra.mxu0 0.0
    %2216 = vmatprep.mubr.f32.mxu0 0.0
    %2217 = vmatmul.mubr.f32.gmra.mxu0 %v1945
    %v2218 = vpop.f32.mrf.mxu0
    %v2219 = vadd.f32 %v2030, %v2218
    %v2220 = vpop.f32.mrf.mxu0
    %v2221 = vadd.f32 %v2034, %v2220
    %2222 = vmatprep.mubr.f32.mxu0 0.0
    %2223 = vmatmul.mubr.f32.gmra.mxu0 %v1946
    %v2224 = vpop.f32.mrf.mxu0
    %v2225 = vadd.f32 %v2030, %v2224
    %v2226 = vpop.f32.mrf.mxu0
    %v2227 = vadd.f32 %v2034, %v2226
    %2228 = vmatprep.mubr.f32.mxu0 0.0
    %2229 = vmatmul.mubr.f32.gmra.mxu0 %v1947
    %v2230 = vpop.f32.mrf.mxu0
    %v2231 = vadd.f32 %v2030, %v2230
    %v2232 = vpop.f32.mrf.mxu0
    %v2233 = vadd.f32 %v2034, %v2232
    %2234 = vmatprep.mubr.f32.mxu0 0.0
    %2235 = vmatmul.mubr.f32.gmra.mxu0 %v1948
    %v2236 = vpop.f32.mrf.mxu0
    %v2237 = vadd.f32 %v2030, %v2236
    %v2238 = vpop.f32.mrf.mxu0
    %v2239 = vadd.f32 %v2034, %v2238
    %2240 = vmatprep.mubr.f32.mxu0 0.0
    %2241 = vmatmul.mubr.f32.gmra.mxu0 %v1949
    %v2242 = vpop.f32.mrf.mxu0
    %v2243 = vadd.f32 %v2030, %v2242
    %v2244 = vpop.f32.mrf.mxu0
    %v2245 = vadd.f32 %v2034, %v2244
    %2246 = vmatprep.mubr.f32.mxu0 0.0
    %2247 = vmatmul.mubr.f32.gmra.mxu0 %v1950
    %v2248 = vpop.f32.mrf.mxu0
    %v2249 = vadd.f32 %v2030, %v2248
    %v2250 = vpop.f32.mrf.mxu0
    %v2251 = vadd.f32 %v2034, %v2250
    %2252 = vmatprep.mubr.f32.mxu0 0.0
    %2253 = vmatmul.mubr.f32.gmra.mxu0 %v1951
    %v2254 = vpop.f32.mrf.mxu0
    %v2255 = vadd.f32 %v2030, %v2254
    %v2256 = vpop.f32.mrf.mxu0
    %v2257 = vadd.f32 %v2034, %v2256
    %2258 = vmatprep.mubr.f32.mxu0 0.0
    %2259 = vmatmul.mubr.f32.gmra.mxu0 %v1952
    %v2260 = vpop.f32.mrf.mxu0
    %v2261 = vadd.f32 %v2030, %v2260
    %v2262 = vpop.f32.mrf.mxu0
    %v2263 = vadd.f32 %v2034, %v2262
    %2264 = vdwg.mxu0
    %2265 = vst [vmem:[#allocation3] sm:$0xff] %v2106
    %2266 = vst [vmem:[#allocation3 + $0x8] sm:$0xff] %v2108
    %2267 = vst [vmem:[#allocation3 + $0x10] sm:$0xff] %v2219
    %2268 = vst [vmem:[#allocation3 + $0x18] sm:$0xff] %v2221
    %2269 = vst [vmem:[#allocation3 + $0x20] sm:$0xff] %v2112
    %2270 = vst [vmem:[#allocation3 + $0x28] sm:$0xff] %v2114
    %2271 = vst [vmem:[#allocation3 + $0x30] sm:$0xff] %v2225
    %2272 = vst [vmem:[#allocation3 + $0x38] sm:$0xff] %v2227
    %2273 = vst [vmem:[#allocation3 + $0x40] sm:$0xff] %v2118
    %2274 = vst [vmem:[#allocation3 + $0x48] sm:$0xff] %v2120
    %2275 = vst [vmem:[#allocation3 + $0x50] sm:$0xff] %v2231
    %2276 = vst [vmem:[#allocation3 + $0x58] sm:$0xff] %v2233
    %2277 = vst [vmem:[#allocation3 + $0x60] sm:$0xff] %v2124
    %2278 = vst [vmem:[#allocation3 + $0x68] sm:$0xff] %v2126
    %2279 = vst [vmem:[#allocation3 + $0x70] sm:$0xff] %v2237
    %2280 = vst [vmem:[#allocation3 + $0x78] sm:$0xff] %v2239
    %2281 = vst [vmem:[#allocation3 + $0x80] sm:$0xff] %v2130
    %2282 = vst [vmem:[#allocation3 + $0x88] sm:$0xff] %v2132
    %2283 = vst [vmem:[#allocation3 + $0x90] sm:$0xff] %v2243
    %2284 = vst [vmem:[#allocation3 + $0x98] sm:$0xff] %v2245
    %2285 = vst [vmem:[#allocation3 + $0xa0] sm:$0xff] %v2136
    %2286 = vst [vmem:[#allocation3 + $0xa8] sm:$0xff] %v2138
    %2287 = vst [vmem:[#allocation3 + $0xb0] sm:$0xff] %v2249
    %2288 = vst [vmem:[#allocation3 + $0xb8] sm:$0xff] %v2251
    %2289 = vst [vmem:[#allocation3 + $0xc0] sm:$0xff] %v2142
    %2290 = vst [vmem:[#allocation3 + $0xc8] sm:$0xff] %v2144
    %2291 = vst [vmem:[#allocation3 + $0xd0] sm:$0xff] %v2255
    %2292 = vst [vmem:[#allocation3 + $0xd8] sm:$0xff] %v2257
    %2293 = vst [vmem:[#allocation3 + $0xe0] sm:$0xff] %v2148
    %2294 = vst [vmem:[#allocation3 + $0xe8] sm:$0xff] %v2150
    %2295 = vst [vmem:[#allocation3 + $0xf0] sm:$0xff] %v2261
    %2296 = vst [vmem:[#allocation3 + $0xf8] sm:$0xff] %v2263
    %v2297 = vld [vmem:[#allocation12] sm:$0xff]
    %v2298 = vld [vmem:[#allocation12 + $0x8] sm:$0xff]
    %v2299 = vld [vmem:[#allocation12 + $0x10] sm:$0xff]
    %v2300 = vld [vmem:[#allocation12 + $0x18] sm:$0xff]
    %v2301 = vld [vmem:[#allocation12 + $0x20] sm:$0xff]
    %v2302 = vld [vmem:[#allocation12 + $0x28] sm:$0xff]
    %v2303 = vld [vmem:[#allocation12 + $0x30] sm:$0xff]
    %v2304 = vld [vmem:[#allocation12 + $0x38] sm:$0xff]
    %v2305 = vld [vmem:[#allocation12 + $0x40] sm:$0xff]
    %v2306 = vld [vmem:[#allocation12 + $0x48] sm:$0xff]
    %v2307 = vld [vmem:[#allocation12 + $0x50] sm:$0xff]
    %v2308 = vld [vmem:[#allocation12 + $0x58] sm:$0xff]
    %v2309 = vld [vmem:[#allocation12 + $0x60] sm:$0xff]
    %v2310 = vld [vmem:[#allocation12 + $0x68] sm:$0xff]
    %v2311 = vld [vmem:[#allocation12 + $0x70] sm:$0xff]
    %v2312 = vld [vmem:[#allocation12 + $0x78] sm:$0xff]
    %v2313 = vld [vmem:[#allocation12 + $0x80] sm:$0xff]
    %v2314 = vld [vmem:[#allocation12 + $0x88] sm:$0xff]
    %v2315 = vld [vmem:[#allocation12 + $0x90] sm:$0xff]
    %v2316 = vld [vmem:[#allocation12 + $0x98] sm:$0xff]
    %v2317 = vld [vmem:[#allocation12 + $0xa0] sm:$0xff]
    %v2318 = vld [vmem:[#allocation12 + $0xa8] sm:$0xff]
    %v2319 = vld [vmem:[#allocation12 + $0xb0] sm:$0xff]
    %v2320 = vld [vmem:[#allocation12 + $0xb8] sm:$0xff]
    %v2321 = vld [vmem:[#allocation12 + $0xc0] sm:$0xff]
    %v2322 = vld [vmem:[#allocation12 + $0xc8] sm:$0xff]
    %v2323 = vld [vmem:[#allocation12 + $0xd0] sm:$0xff]
    %v2324 = vld [vmem:[#allocation12 + $0xd8] sm:$0xff]
    %v2325 = vld [vmem:[#allocation12 + $0xe0] sm:$0xff]
    %v2326 = vld [vmem:[#allocation12 + $0xe8] sm:$0xff]
    %v2327 = vld [vmem:[#allocation12 + $0xf0] sm:$0xff]
    %v2328 = vld [vmem:[#allocation12 + $0xf8] sm:$0xff]
    %v2329 = vld [vmem:[#allocation12 + $0x100] sm:$0xff]
    %v2330 = vld [vmem:[#allocation12 + $0x108] sm:$0xff]
    %v2331 = vld [vmem:[#allocation12 + $0x110] sm:$0xff]
    %v2332 = vld [vmem:[#allocation12 + $0x118] sm:$0xff]
    %v2333 = vld [vmem:[#allocation12 + $0x120] sm:$0xff]
    %v2334 = vld [vmem:[#allocation12 + $0x128] sm:$0xff]
    %v2335 = vld [vmem:[#allocation12 + $0x130] sm:$0xff]
    %v2336 = vld [vmem:[#allocation12 + $0x138] sm:$0xff]
    %v2337 = vld [vmem:[#allocation12 + $0x140] sm:$0xff]
    %v2338 = vld [vmem:[#allocation12 + $0x148] sm:$0xff]
    %v2339 = vld [vmem:[#allocation12 + $0x150] sm:$0xff]
    %v2340 = vld [vmem:[#allocation12 + $0x158] sm:$0xff]
    %v2341 = vld [vmem:[#allocation12 + $0x160] sm:$0xff]
    %v2342 = vld [vmem:[#allocation12 + $0x168] sm:$0xff]
    %v2343 = vld [vmem:[#allocation12 + $0x170] sm:$0xff]
    %v2344 = vld [vmem:[#allocation12 + $0x178] sm:$0xff]
    %v2345 = vld [vmem:[#allocation12 + $0x180] sm:$0xff]
    %v2346 = vld [vmem:[#allocation12 + $0x188] sm:$0xff]
    %v2347 = vld [vmem:[#allocation12 + $0x190] sm:$0xff]
    %v2348 = vld [vmem:[#allocation12 + $0x198] sm:$0xff]
    %v2349 = vld [vmem:[#allocation12 + $0x1a0] sm:$0xff]
    %v2350 = vld [vmem:[#allocation12 + $0x1a8] sm:$0xff]
    %v2351 = vld [vmem:[#allocation12 + $0x1b0] sm:$0xff]
    %v2352 = vld [vmem:[#allocation12 + $0x1b8] sm:$0xff]
    %v2353 = vld [vmem:[#allocation12 + $0x1c0] sm:$0xff]
    %v2354 = vld [vmem:[#allocation12 + $0x1c8] sm:$0xff]
    %v2355 = vld [vmem:[#allocation12 + $0x1d0] sm:$0xff]
    %v2356 = vld [vmem:[#allocation12 + $0x1d8] sm:$0xff]
    %v2357 = vld [vmem:[#allocation12 + $0x1e0] sm:$0xff]
    %v2358 = vld [vmem:[#allocation12 + $0x1e8] sm:$0xff]
    %v2359 = vld [vmem:[#allocation12 + $0x1f0] sm:$0xff]
    %v2360 = vld [vmem:[#allocation12 + $0x1f8] sm:$0xff]
    %v2361 = vld [vmem:[#allocation3] sm:$0xff]
    %v2362 = vld [vmem:[#allocation3 + $0x8] sm:$0xff]
    %v2363 = vld [vmem:[#allocation3 + $0x10] sm:$0xff]
    %v2364 = vld [vmem:[#allocation3 + $0x18] sm:$0xff]
    %2365 = vmatprep.subr.mxu0 %v2358
    %2366 = vmatpush1.msra.mxu0 %v2357
    %2367 = vmatprep.subr.mxu0 %v2354
    %2368 = vmatpush1.msra.mxu0 %v2353
    %2369 = vmatprep.subr.mxu0 %v2350
    %2370 = vmatpush1.msra.mxu0 %v2349
    %2371 = vmatprep.subr.mxu0 %v2346
    %2372 = vmatpush1.msra.mxu0 %v2345
    %2373 = vmatprep.subr.mxu0 %v2342
    %2374 = vmatpush1.msra.mxu0 %v2341
    %2375 = vmatprep.subr.mxu0 %v2338
    %2376 = vmatpush1.msra.mxu0 %v2337
    %2377 = vmatprep.subr.mxu0 %v2334
    %2378 = vmatpush1.msra.mxu0 %v2333
    %2379 = vmatprep.subr.mxu0 %v2330
    %2380 = vmatpush1.msra.mxu0 %v2329
    %2381 = vmatprep.subr.mxu0 %v2326
    %2382 = vmatpush1.msra.mxu0 %v2325
    %2383 = vmatprep.subr.mxu0 %v2322
    %2384 = vmatpush1.msra.mxu0 %v2321
    %2385 = vmatprep.subr.mxu0 %v2318
    %2386 = vmatpush1.msra.mxu0 %v2317
    %2387 = vmatprep.subr.mxu0 %v2314
    %2388 = vmatpush1.msra.mxu0 %v2313
    %2389 = vmatprep.subr.mxu0 %v2310
    %2390 = vmatpush1.msra.mxu0 %v2309
    %2391 = vmatprep.subr.mxu0 %v2306
    %2392 = vmatpush1.msra.mxu0 %v2305
    %2393 = vmatprep.subr.mxu0 %v2302
    %2394 = vmatpush1.msra.mxu0 %v2301
    %2395 = vmatprep.subr.mxu0 %v2298
    %2396 = vmatpush1.msra.mxu0 %v2297
    %2397 = vmatprep.subr.mxu0 0.0
    %2398 = vmatpush2.msra.mxu0 0.0
    %2399 = vmatprep.subr.mxu0 0.0
    %2400 = vmatpush2.msra.mxu0 0.0
    %2401 = vmatprep.subr.mxu0 0.0
    %2402 = vmatpush2.msra.mxu0 0.0
    %2403 = vmatprep.subr.mxu0 0.0
    %2404 = vmatpush2.msra.mxu0 0.0
    %2405 = vmatprep.subr.mxu0 0.0
    %2406 = vmatpush2.msra.mxu0 0.0
    %2407 = vmatprep.subr.mxu0 0.0
    %2408 = vmatpush2.msra.mxu0 0.0
    %2409 = vmatprep.subr.mxu0 0.0
    %2410 = vmatpush2.msra.mxu0 0.0
    %2411 = vmatprep.subr.mxu0 0.0
    %2412 = vmatpush2.msra.mxu0 0.0
    %2413 = vmatprep.subr.mxu0 0.0
    %2414 = vmatpush2.msra.mxu0 0.0
    %2415 = vmatprep.subr.mxu0 0.0
    %2416 = vmatpush2.msra.mxu0 0.0
    %2417 = vmatprep.subr.mxu0 0.0
    %2418 = vmatpush2.msra.mxu0 0.0
    %2419 = vmatprep.subr.mxu0 0.0
    %2420 = vmatpush2.msra.mxu0 0.0
    %2421 = vmatprep.subr.mxu0 0.0
    %2422 = vmatpush2.msra.mxu0 0.0
    %2423 = vmatprep.subr.mxu0 0.0
    %2424 = vmatpush2.msra.mxu0 0.0
    %2425 = vmatprep.subr.mxu0 0.0
    %2426 = vmatpush2.msra.mxu0 0.0
    %2427 = vmatprep.subr.mxu0 0.0
    %2428 = vmatpush2.msra.mxu0 0.0
    %2429 = vmatprep.mubr.f32.mxu0 0.0
    %2430 = vmatmul.mubr.f32.gmra.mxu0 0.0
    %v2431 = vpop.f32.mrf.mxu0
    %v2432 = vadd.f32 0.0, %v2431
    %v2433 = vpop.f32.mrf.mxu0
    %v2434 = vadd.f32 0.0, %v2433
    %2435 = vdwg.mxu0
    %2436 = vmatprep.subr.mxu0 %v2360
    %2437 = vmatpush1.msra.mxu0 %v2359
    %2438 = vmatprep.subr.mxu0 %v2356
    %2439 = vmatpush1.msra.mxu0 %v2355
    %2440 = vmatprep.subr.mxu0 %v2352
    %2441 = vmatpush1.msra.mxu0 %v2351
    %2442 = vmatprep.subr.mxu0 %v2348
    %2443 = vmatpush1.msra.mxu0 %v2347
    %2444 = vmatprep.subr.mxu0 %v2344
    %2445 = vmatpush1.msra.mxu0 %v2343
    %2446 = vmatprep.subr.mxu0 %v2340
    %2447 = vmatpush1.msra.mxu0 %v2339
    %2448 = vmatprep.subr.mxu0 %v2336
    %2449 = vmatpush1.msra.mxu0 %v2335
    %2450 = vmatprep.subr.mxu0 %v2332
    %2451 = vmatpush1.msra.mxu0 %v2331
    %2452 = vmatprep.subr.mxu0 %v2328
    %2453 = vmatpush1.msra.mxu0 %v2327
    %2454 = vmatprep.subr.mxu0 %v2324
    %2455 = vmatpush1.msra.mxu0 %v2323
    %2456 = vmatprep.subr.mxu0 %v2320
    %2457 = vmatpush1.msra.mxu0 %v2319
    %2458 = vmatprep.subr.mxu0 %v2316
    %2459 = vmatpush1.msra.mxu0 %v2315
    %2460 = vmatprep.subr.mxu0 %v2312
    %2461 = vmatpush1.msra.mxu0 %v2311
    %2462 = vmatprep.subr.mxu0 %v2308
    %2463 = vmatpush1.msra.mxu0 %v2307
    %2464 = vmatprep.subr.mxu0 %v2304
    %2465 = vmatpush1.msra.mxu0 %v2303
    %2466 = vmatprep.subr.mxu0 %v2300
    %2467 = vmatpush1.msra.mxu0 %v2299
    %2468 = vmatprep.subr.mxu0 0.0
    %2469 = vmatpush2.msra.mxu0 0.0
    %2470 = vmatprep.subr.mxu0 0.0
    %2471 = vmatpush2.msra.mxu0 0.0
    %2472 = vmatprep.subr.mxu0 0.0
    %2473 = vmatpush2.msra.mxu0 0.0
    %2474 = vmatprep.subr.mxu0 0.0
    %2475 = vmatpush2.msra.mxu0 0.0
    %2476 = vmatprep.subr.mxu0 0.0
    %2477 = vmatpush2.msra.mxu0 0.0
    %2478 = vmatprep.subr.mxu0 0.0
    %2479 = vmatpush2.msra.mxu0 0.0
    %2480 = vmatprep.subr.mxu0 0.0
    %2481 = vmatpush2.msra.mxu0 0.0
    %2482 = vmatprep.subr.mxu0 0.0
    %2483 = vmatpush2.msra.mxu0 0.0
    %2484 = vmatprep.subr.mxu0 0.0
    %2485 = vmatpush2.msra.mxu0 0.0
    %2486 = vmatprep.subr.mxu0 0.0
    %2487 = vmatpush2.msra.mxu0 0.0
    %2488 = vmatprep.subr.mxu0 0.0
    %2489 = vmatpush2.msra.mxu0 0.0
    %2490 = vmatprep.subr.mxu0 0.0
    %2491 = vmatpush2.msra.mxu0 0.0
    %2492 = vmatprep.subr.mxu0 0.0
    %2493 = vmatpush2.msra.mxu0 0.0
    %2494 = vmatprep.subr.mxu0 0.0
    %2495 = vmatpush2.msra.mxu0 0.0
    %2496 = vmatprep.subr.mxu0 0.0
    %2497 = vmatpush2.msra.mxu0 0.0
    %2498 = vmatprep.subr.mxu0 0.0
    %2499 = vmatpush2.msra.mxu0 0.0
    %2500 = vmatprep.mubr.f32.mxu0 0.0
    %2501 = vmatmul.mubr.f32.gmra.mxu0 0.0
    %v2502 = vpop.f32.mrf.mxu0
    %v2503 = vadd.f32 0.0, %v2502
    %v2504 = vpop.f32.mrf.mxu0
    %v2505 = vadd.f32 0.0, %v2504
    %2506 = vdwg.mxu0
    %v2507 = vadd.f32 %v2361, %v2432
    %v2508 = vadd.f32 %v2362, %v2434
    %v2509 = vadd.f32 %v2363, %v2503
    %v2510 = vadd.f32 %v2364, %v2505
    %v2511 = vxor.u32 %v2507, 2147483648
    %v2512 = vmul.f32 %v2511, 1.442695
    %v2513 = vpow.pop %v2512
    %v2514 = vadd.f32 %v2513, 1.0
    %v2515 = vrcp.pop %v2514
    %v2516 = vmul.f32 1.0, %v2515
    %v2517 = vxor.u32 %v2508, 2147483648
    %v2518 = vmul.f32 %v2517, 1.442695
    %v2519 = vpow.pop %v2518
    %v2520 = vadd.f32 %v2519, 1.0
    %v2521 = vrcp.pop %v2520
    %v2522 = vmul.f32 1.0, %v2521
    %v2523 = vtanh.pop %v2509
    %v2524 = vxor.u32 %v2510, 2147483648
    %v2525 = vmul.f32 %v2524, 1.442695
    %v2526 = vpow.pop %v2525
    %v2527 = vadd.f32 %v2526, 1.0
    %v2528 = vrcp.pop %v2527
    %v2529 = vmul.f32 1.0, %v2528
    %v2530 = vmul.f32 %v2522, 0.0
    %v2531 = vmul.f32 %v2516, %v2523
    %v2532 = vadd.f32 %v2530, %v2531
    %v2533 = vtanh.pop %v2532
    %v2534 = vmul.f32 %v2529, %v2533
    %v2535 = vld [vmem:[%s706] sm:$0xff]
    %v2536 = vld [vmem:[%s706 + $0x8] sm:$0xff]
    %v2537 = vld [vmem:[%s706 + $0x10] sm:$0xff]
    %v2538 = vld [vmem:[%s706 + $0x18] sm:$0xff]
    %2539 = vmatprep.subr.mxu0 %v2358
    %2540 = vmatpush1.msra.mxu0 %v2357
    %2541 = vmatprep.subr.mxu0 %v2354
    %2542 = vmatpush1.msra.mxu0 %v2353
    %2543 = vmatprep.subr.mxu0 %v2350
    %2544 = vmatpush1.msra.mxu0 %v2349
    %2545 = vmatprep.subr.mxu0 %v2346
    %2546 = vmatpush1.msra.mxu0 %v2345
    %2547 = vmatprep.subr.mxu0 %v2342
    %2548 = vmatpush1.msra.mxu0 %v2341
    %2549 = vmatprep.subr.mxu0 %v2338
    %2550 = vmatpush1.msra.mxu0 %v2337
    %2551 = vmatprep.subr.mxu0 %v2334
    %2552 = vmatpush1.msra.mxu0 %v2333
    %2553 = vmatprep.subr.mxu0 %v2330
    %2554 = vmatpush1.msra.mxu0 %v2329
    %2555 = vmatprep.subr.mxu0 %v2326
    %2556 = vmatpush1.msra.mxu0 %v2325
    %2557 = vmatprep.subr.mxu0 %v2322
    %2558 = vmatpush1.msra.mxu0 %v2321
    %2559 = vmatprep.subr.mxu0 %v2318
    %2560 = vmatpush1.msra.mxu0 %v2317
    %2561 = vmatprep.subr.mxu0 %v2314
    %2562 = vmatpush1.msra.mxu0 %v2313
    %2563 = vmatprep.subr.mxu0 %v2310
    %2564 = vmatpush1.msra.mxu0 %v2309
    %2565 = vmatprep.subr.mxu0 %v2306
    %2566 = vmatpush1.msra.mxu0 %v2305
    %2567 = vmatprep.subr.mxu0 %v2302
    %2568 = vmatpush1.msra.mxu0 %v2301
    %2569 = vmatprep.subr.mxu0 %v2298
    %2570 = vmatpush1.msra.mxu0 %v2297
    %2571 = vmatprep.subr.mxu0 0.0
    %2572 = vmatpush2.msra.mxu0 0.0
    %2573 = vmatprep.subr.mxu0 0.0
    %2574 = vmatpush2.msra.mxu0 0.0
    %2575 = vmatprep.subr.mxu0 0.0
    %2576 = vmatpush2.msra.mxu0 0.0
    %2577 = vmatprep.subr.mxu0 0.0
    %2578 = vmatpush2.msra.mxu0 0.0
    %2579 = vmatprep.subr.mxu0 0.0
    %2580 = vmatpush2.msra.mxu0 0.0
    %2581 = vmatprep.subr.mxu0 0.0
    %2582 = vmatpush2.msra.mxu0 0.0
    %2583 = vmatprep.subr.mxu0 0.0
    %2584 = vmatpush2.msra.mxu0 0.0
    %2585 = vmatprep.subr.mxu0 0.0
    %2586 = vmatpush2.msra.mxu0 0.0
    %2587 = vmatprep.subr.mxu0 0.0
    %2588 = vmatpush2.msra.mxu0 0.0
    %2589 = vmatprep.subr.mxu0 0.0
    %2590 = vmatpush2.msra.mxu0 0.0
    %2591 = vmatprep.subr.mxu0 0.0
    %2592 = vmatpush2.msra.mxu0 0.0
    %2593 = vmatprep.subr.mxu0 0.0
    %2594 = vmatpush2.msra.mxu0 0.0
    %2595 = vmatprep.subr.mxu0 0.0
    %2596 = vmatpush2.msra.mxu0 0.0
    %2597 = vmatprep.subr.mxu0 0.0
    %2598 = vmatpush2.msra.mxu0 0.0
    %2599 = vmatprep.subr.mxu0 0.0
    %2600 = vmatpush2.msra.mxu0 0.0
    %2601 = vmatprep.subr.mxu0 0.0
    %2602 = vmatpush2.msra.mxu0 0.0
    %2603 = vmatprep.mubr.f32.mxu0 0.0
    %2604 = vmatmul.mubr.f32.gmra.mxu0 %v2534
    %v2605 = vpop.f32.mrf.mxu0
    %v2606 = vadd.f32 0.0, %v2605
    %v2607 = vpop.f32.mrf.mxu0
    %v2608 = vadd.f32 0.0, %v2607
    %2609 = vdwg.mxu0
    %2610 = vmatprep.subr.mxu0 %v2360
    %2611 = vmatpush1.msra.mxu0 %v2359
    %2612 = vmatprep.subr.mxu0 %v2356
    %2613 = vmatpush1.msra.mxu0 %v2355
    %2614 = vmatprep.subr.mxu0 %v2352
    %2615 = vmatpush1.msra.mxu0 %v2351
    %2616 = vmatprep.subr.mxu0 %v2348
    %2617 = vmatpush1.msra.mxu0 %v2347
    %2618 = vmatprep.subr.mxu0 %v2344
    %2619 = vmatpush1.msra.mxu0 %v2343
    %2620 = vmatprep.subr.mxu0 %v2340
    %2621 = vmatpush1.msra.mxu0 %v2339
    %2622 = vmatprep.subr.mxu0 %v2336
    %2623 = vmatpush1.msra.mxu0 %v2335
    %2624 = vmatprep.subr.mxu0 %v2332
    %2625 = vmatpush1.msra.mxu0 %v2331
    %2626 = vmatprep.subr.mxu0 %v2328
    %2627 = vmatpush1.msra.mxu0 %v2327
    %2628 = vmatprep.subr.mxu0 %v2324
    %2629 = vmatpush1.msra.mxu0 %v2323
    %2630 = vmatprep.subr.mxu0 %v2320
    %2631 = vmatpush1.msra.mxu0 %v2319
    %2632 = vmatprep.subr.mxu0 %v2316
    %2633 = vmatpush1.msra.mxu0 %v2315
    %2634 = vmatprep.subr.mxu0 %v2312
    %2635 = vmatpush1.msra.mxu0 %v2311
    %2636 = vmatprep.subr.mxu0 %v2308
    %2637 = vmatpush1.msra.mxu0 %v2307
    %2638 = vmatprep.subr.mxu0 %v2304
    %2639 = vmatpush1.msra.mxu0 %v2303
    %2640 = vmatprep.subr.mxu0 %v2300
    %2641 = vmatpush1.msra.mxu0 %v2299
    %2642 = vmatprep.subr.mxu0 0.0
    %2643 = vmatpush2.msra.mxu0 0.0
    %2644 = vmatprep.subr.mxu0 0.0
    %2645 = vmatpush2.msra.mxu0 0.0
    %2646 = vmatprep.subr.mxu0 0.0
    %2647 = vmatpush2.msra.mxu0 0.0
    %2648 = vmatprep.subr.mxu0 0.0
    %2649 = vmatpush2.msra.mxu0 0.0
    %2650 = vmatprep.subr.mxu0 0.0
    %2651 = vmatpush2.msra.mxu0 0.0
    %2652 = vmatprep.subr.mxu0 0.0
    %2653 = vmatpush2.msra.mxu0 0.0
    %2654 = vmatprep.subr.mxu0 0.0
    %2655 = vmatpush2.msra.mxu0 0.0
    %2656 = vmatprep.subr.mxu0 0.0
    %2657 = vmatpush2.msra.mxu0 0.0
    %2658 = vmatprep.subr.mxu0 0.0
    %2659 = vmatpush2.msra.mxu0 0.0
    %2660 = vmatprep.subr.mxu0 0.0
    %2661 = vmatpush2.msra.mxu0 0.0
    %2662 = vmatprep.subr.mxu0 0.0
    %2663 = vmatpush2.msra.mxu0 0.0
    %2664 = vmatprep.subr.mxu0 0.0
    %2665 = vmatpush2.msra.mxu0 0.0
    %2666 = vmatprep.subr.mxu0 0.0
    %2667 = vmatpush2.msra.mxu0 0.0
    %2668 = vmatprep.subr.mxu0 0.0
    %2669 = vmatpush2.msra.mxu0 0.0
    %2670 = vmatprep.subr.mxu0 0.0
    %2671 = vmatpush2.msra.mxu0 0.0
    %2672 = vmatprep.subr.mxu0 0.0
    %2673 = vmatpush2.msra.mxu0 0.0
    %2674 = vmatprep.mubr.f32.mxu0 0.0
    %2675 = vmatmul.mubr.f32.gmra.mxu0 %v2534
    %v2676 = vpop.f32.mrf.mxu0
    %v2677 = vadd.f32 0.0, %v2676
    %v2678 = vpop.f32.mrf.mxu0
    %v2679 = vadd.f32 0.0, %v2678
    %2680 = vdwg.mxu0
    %v2681 = vadd.f32 %v2535, %v2606
    %v2682 = vadd.f32 %v2536, %v2608
    %v2683 = vadd.f32 %v2537, %v2677
    %v2684 = vadd.f32 %v2538, %v2679
    %v2685 = vxor.u32 %v2681, 2147483648
    %v2686 = vmul.f32 %v2685, 1.442695
    %v2687 = vpow.pop %v2686
    %v2688 = vadd.f32 %v2687, 1.0
    %v2689 = vrcp.pop %v2688
    %v2690 = vmul.f32 1.0, %v2689
    %v2691 = vxor.u32 %v2682, 2147483648
    %v2692 = vmul.f32 %v2691, 1.442695
    %v2693 = vpow.pop %v2692
    %v2694 = vadd.f32 %v2693, 1.0
    %v2695 = vrcp.pop %v2694
    %v2696 = vmul.f32 1.0, %v2695
    %v2697 = vtanh.pop %v2683
    %v2698 = vxor.u32 %v2684, 2147483648
    %v2699 = vmul.f32 %v2698, 1.442695
    %v2700 = vpow.pop %v2699
    %v2701 = vadd.f32 %v2700, 1.0
    %v2702 = vrcp.pop %v2701
    %v2703 = vmul.f32 1.0, %v2702
    %v2704 = vmul.f32 %v2696, %v2532
    %v2705 = vmul.f32 %v2690, %v2697
    %v2706 = vadd.f32 %v2704, %v2705
    %v2707 = vtanh.pop %v2706
    %v2708 = vmul.f32 %v2703, %v2707
    %v2709 = vld [vmem:[%s883] sm:$0xff]
    %v2710 = vld [vmem:[%s883 + $0x8] sm:$0xff]
    %v2711 = vld [vmem:[%s883 + $0x10] sm:$0xff]
    %v2712 = vld [vmem:[%s883 + $0x18] sm:$0xff]
    %2713 = vmatprep.subr.mxu0 %v2358
    %2714 = vmatpush1.msra.mxu0 %v2357
    %2715 = vmatprep.subr.mxu0 %v2354
    %2716 = vmatpush1.msra.mxu0 %v2353
    %2717 = vmatprep.subr.mxu0 %v2350
    %2718 = vmatpush1.msra.mxu0 %v2349
    %2719 = vmatprep.subr.mxu0 %v2346
    %2720 = vmatpush1.msra.mxu0 %v2345
    %2721 = vmatprep.subr.mxu0 %v2342
    %2722 = vmatpush1.msra.mxu0 %v2341
    %2723 = vmatprep.subr.mxu0 %v2338
    %2724 = vmatpush1.msra.mxu0 %v2337
    %2725 = vmatprep.subr.mxu0 %v2334
    %2726 = vmatpush1.msra.mxu0 %v2333
    %2727 = vmatprep.subr.mxu0 %v2330
    %2728 = vmatpush1.msra.mxu0 %v2329
    %2729 = vmatprep.subr.mxu0 %v2326
    %2730 = vmatpush1.msra.mxu0 %v2325
    %2731 = vmatprep.subr.mxu0 %v2322
    %2732 = vmatpush1.msra.mxu0 %v2321
    %2733 = vmatprep.subr.mxu0 %v2318
    %2734 = vmatpush1.msra.mxu0 %v2317
    %2735 = vmatprep.subr.mxu0 %v2314
    %2736 = vmatpush1.msra.mxu0 %v2313
    %2737 = vmatprep.subr.mxu0 %v2310
    %2738 = vmatpush1.msra.mxu0 %v2309
    %2739 = vmatprep.subr.mxu0 %v2306
    %2740 = vmatpush1.msra.mxu0 %v2305
    %2741 = vmatprep.subr.mxu0 %v2302
    %2742 = vmatpush1.msra.mxu0 %v2301
    %2743 = vmatprep.subr.mxu0 %v2298
    %2744 = vmatpush1.msra.mxu0 %v2297
    %2745 = vmatprep.subr.mxu0 0.0
    %2746 = vmatpush2.msra.mxu0 0.0
    %2747 = vmatprep.subr.mxu0 0.0
    %2748 = vmatpush2.msra.mxu0 0.0
    %2749 = vmatprep.subr.mxu0 0.0
    %2750 = vmatpush2.msra.mxu0 0.0
    %2751 = vmatprep.subr.mxu0 0.0
    %2752 = vmatpush2.msra.mxu0 0.0
    %2753 = vmatprep.subr.mxu0 0.0
    %2754 = vmatpush2.msra.mxu0 0.0
    %2755 = vmatprep.subr.mxu0 0.0
    %2756 = vmatpush2.msra.mxu0 0.0
    %2757 = vmatprep.subr.mxu0 0.0
    %2758 = vmatpush2.msra.mxu0 0.0
    %2759 = vmatprep.subr.mxu0 0.0
    %2760 = vmatpush2.msra.mxu0 0.0
    %2761 = vmatprep.subr.mxu0 0.0
    %2762 = vmatpush2.msra.mxu0 0.0
    %2763 = vmatprep.subr.mxu0 0.0
    %2764 = vmatpush2.msra.mxu0 0.0
    %2765 = vmatprep.subr.mxu0 0.0
    %2766 = vmatpush2.msra.mxu0 0.0
    %2767 = vmatprep.subr.mxu0 0.0
    %2768 = vmatpush2.msra.mxu0 0.0
    %2769 = vmatprep.subr.mxu0 0.0
    %2770 = vmatpush2.msra.mxu0 0.0
    %2771 = vmatprep.subr.mxu0 0.0
    %2772 = vmatpush2.msra.mxu0 0.0
    %2773 = vmatprep.subr.mxu0 0.0
    %2774 = vmatpush2.msra.mxu0 0.0
    %2775 = vmatprep.subr.mxu0 0.0
    %2776 = vmatpush2.msra.mxu0 0.0
    %2777 = vmatprep.mubr.f32.mxu0 0.0
    %2778 = vmatmul.mubr.f32.gmra.mxu0 %v2708
    %v2779 = vpop.f32.mrf.mxu0
    %v2780 = vadd.f32 0.0, %v2779
    %v2781 = vpop.f32.mrf.mxu0
    %v2782 = vadd.f32 0.0, %v2781
    %2783 = vdwg.mxu0
    %2784 = vmatprep.subr.mxu0 %v2360
    %2785 = vmatpush1.msra.mxu0 %v2359
    %2786 = vmatprep.subr.mxu0 %v2356
    %2787 = vmatpush1.msra.mxu0 %v2355
    %2788 = vmatprep.subr.mxu0 %v2352
    %2789 = vmatpush1.msra.mxu0 %v2351
    %2790 = vmatprep.subr.mxu0 %v2348
    %2791 = vmatpush1.msra.mxu0 %v2347
    %2792 = vmatprep.subr.mxu0 %v2344
    %2793 = vmatpush1.msra.mxu0 %v2343
    %2794 = vmatprep.subr.mxu0 %v2340
    %2795 = vmatpush1.msra.mxu0 %v2339
    %2796 = vmatprep.subr.mxu0 %v2336
    %2797 = vmatpush1.msra.mxu0 %v2335
    %2798 = vmatprep.subr.mxu0 %v2332
    %2799 = vmatpush1.msra.mxu0 %v2331
    %2800 = vmatprep.subr.mxu0 %v2328
    %2801 = vmatpush1.msra.mxu0 %v2327
    %2802 = vmatprep.subr.mxu0 %v2324
    %2803 = vmatpush1.msra.mxu0 %v2323
    %2804 = vmatprep.subr.mxu0 %v2320
    %2805 = vmatpush1.msra.mxu0 %v2319
    %2806 = vmatprep.subr.mxu0 %v2316
    %2807 = vmatpush1.msra.mxu0 %v2315
    %2808 = vmatprep.subr.mxu0 %v2312
    %2809 = vmatpush1.msra.mxu0 %v2311
    %2810 = vmatprep.subr.mxu0 %v2308
    %2811 = vmatpush1.msra.mxu0 %v2307
    %2812 = vmatprep.subr.mxu0 %v2304
    %2813 = vmatpush1.msra.mxu0 %v2303
    %2814 = vmatprep.subr.mxu0 %v2300
    %2815 = vmatpush1.msra.mxu0 %v2299
    %2816 = vmatprep.subr.mxu0 0.0
    %2817 = vmatpush2.msra.mxu0 0.0
    %2818 = vmatprep.subr.mxu0 0.0
    %2819 = vmatpush2.msra.mxu0 0.0
    %2820 = vmatprep.subr.mxu0 0.0
    %2821 = vmatpush2.msra.mxu0 0.0
    %2822 = vmatprep.subr.mxu0 0.0
    %2823 = vmatpush2.msra.mxu0 0.0
    %2824 = vmatprep.subr.mxu0 0.0
    %2825 = vmatpush2.msra.mxu0 0.0
    %2826 = vmatprep.subr.mxu0 0.0
    %2827 = vmatpush2.msra.mxu0 0.0
    %2828 = vmatprep.subr.mxu0 0.0
    %2829 = vmatpush2.msra.mxu0 0.0
    %2830 = vmatprep.subr.mxu0 0.0
    %2831 = vmatpush2.msra.mxu0 0.0
    %2832 = vmatprep.subr.mxu0 0.0
    %2833 = vmatpush2.msra.mxu0 0.0
    %2834 = vmatprep.subr.mxu0 0.0
    %2835 = vmatpush2.msra.mxu0 0.0
    %2836 = vmatprep.subr.mxu0 0.0
    %2837 = vmatpush2.msra.mxu0 0.0
    %2838 = vmatprep.subr.mxu0 0.0
    %2839 = vmatpush2.msra.mxu0 0.0
    %2840 = vmatprep.subr.mxu0 0.0
    %2841 = vmatpush2.msra.mxu0 0.0
    %2842 = vmatprep.subr.mxu0 0.0
    %2843 = vmatpush2.msra.mxu0 0.0
    %2844 = vmatprep.subr.mxu0 0.0
    %2845 = vmatpush2.msra.mxu0 0.0
    %2846 = vmatprep.subr.mxu0 0.0
    %2847 = vmatpush2.msra.mxu0 0.0
    %2848 = vmatprep.mubr.f32.mxu0 0.0
    %2849 = vmatmul.mubr.f32.gmra.mxu0 %v2708
    %v2850 = vpop.f32.mrf.mxu0
    %v2851 = vadd.f32 0.0, %v2850
    %v2852 = vpop.f32.mrf.mxu0
    %v2853 = vadd.f32 0.0, %v2852
    %2854 = vdwg.mxu0
    %v2855 = vadd.f32 %v2709, %v2780
    %v2856 = vadd.f32 %v2710, %v2782
    %v2857 = vadd.f32 %v2711, %v2851
    %v2858 = vadd.f32 %v2712, %v2853
    %v2859 = vxor.u32 %v2855, 2147483648
    %v2860 = vmul.f32 %v2859, 1.442695
    %v2861 = vpow.pop %v2860
    %v2862 = vadd.f32 %v2861, 1.0
    %v2863 = vrcp.pop %v2862
    %v2864 = vmul.f32 1.0, %v2863
    %v2865 = vxor.u32 %v2856, 2147483648
    %v2866 = vmul.f32 %v2865, 1.442695
    %v2867 = vpow.pop %v2866
    %v2868 = vadd.f32 %v2867, 1.0
    %v2869 = vrcp.pop %v2868
    %v2870 = vmul.f32 1.0, %v2869
    %v2871 = vtanh.pop %v2857
    %v2872 = vxor.u32 %v2858, 2147483648
    %v2873 = vmul.f32 %v2872, 1.442695
    %v2874 = vpow.pop %v2873
    %v2875 = vadd.f32 %v2874, 1.0
    %v2876 = vrcp.pop %v2875
    %v2877 = vmul.f32 1.0, %v2876
    %v2878 = vmul.f32 %v2870, %v2706
    %v2879 = vmul.f32 %v2864, %v2871
    %v2880 = vadd.f32 %v2878, %v2879
    %v2881 = vtanh.pop %v2880
    %v2882 = vmul.f32 %v2877, %v2881
    %v2883 = vld [vmem:[%s1060] sm:$0xff]
    %v2884 = vld [vmem:[%s1060 + $0x8] sm:$0xff]
    %v2885 = vld [vmem:[%s1060 + $0x10] sm:$0xff]
    %v2886 = vld [vmem:[%s1060 + $0x18] sm:$0xff]
    %2887 = vmatprep.subr.mxu0 %v2358
    %2888 = vmatpush1.msra.mxu0 %v2357
    %2889 = vmatprep.subr.mxu0 %v2354
    %2890 = vmatpush1.msra.mxu0 %v2353
    %2891 = vmatprep.subr.mxu0 %v2350
    %2892 = vmatpush1.msra.mxu0 %v2349
    %2893 = vmatprep.subr.mxu0 %v2346
    %2894 = vmatpush1.msra.mxu0 %v2345
    %2895 = vmatprep.subr.mxu0 %v2342
    %2896 = vmatpush1.msra.mxu0 %v2341
    %2897 = vmatprep.subr.mxu0 %v2338
    %2898 = vmatpush1.msra.mxu0 %v2337
    %2899 = vmatprep.subr.mxu0 %v2334
    %2900 = vmatpush1.msra.mxu0 %v2333
    %2901 = vmatprep.subr.mxu0 %v2330
    %2902 = vmatpush1.msra.mxu0 %v2329
    %2903 = vmatprep.subr.mxu0 %v2326
    %2904 = vmatpush1.msra.mxu0 %v2325
    %2905 = vmatprep.subr.mxu0 %v2322
    %2906 = vmatpush1.msra.mxu0 %v2321
    %2907 = vmatprep.subr.mxu0 %v2318
    %2908 = vmatpush1.msra.mxu0 %v2317
    %2909 = vmatprep.subr.mxu0 %v2314
    %2910 = vmatpush1.msra.mxu0 %v2313
    %2911 = vmatprep.subr.mxu0 %v2310
    %2912 = vmatpush1.msra.mxu0 %v2309
    %2913 = vmatprep.subr.mxu0 %v2306
    %2914 = vmatpush1.msra.mxu0 %v2305
    %2915 = vmatprep.subr.mxu0 %v2302
    %2916 = vmatpush1.msra.mxu0 %v2301
    %2917 = vmatprep.subr.mxu0 %v2298
    %2918 = vmatpush1.msra.mxu0 %v2297
    %2919 = vmatprep.subr.mxu0 0.0
    %2920 = vmatpush2.msra.mxu0 0.0
    %2921 = vmatprep.subr.mxu0 0.0
    %2922 = vmatpush2.msra.mxu0 0.0
    %2923 = vmatprep.subr.mxu0 0.0
    %2924 = vmatpush2.msra.mxu0 0.0
    %2925 = vmatprep.subr.mxu0 0.0
    %2926 = vmatpush2.msra.mxu0 0.0
    %2927 = vmatprep.subr.mxu0 0.0
    %2928 = vmatpush2.msra.mxu0 0.0
    %2929 = vmatprep.subr.mxu0 0.0
    %2930 = vmatpush2.msra.mxu0 0.0
    %2931 = vmatprep.subr.mxu0 0.0
    %2932 = vmatpush2.msra.mxu0 0.0
    %2933 = vmatprep.subr.mxu0 0.0
    %2934 = vmatpush2.msra.mxu0 0.0
    %2935 = vmatprep.subr.mxu0 0.0
    %2936 = vmatpush2.msra.mxu0 0.0
    %2937 = vmatprep.subr.mxu0 0.0
    %2938 = vmatpush2.msra.mxu0 0.0
    %2939 = vmatprep.subr.mxu0 0.0
    %2940 = vmatpush2.msra.mxu0 0.0
    %2941 = vmatprep.subr.mxu0 0.0
    %2942 = vmatpush2.msra.mxu0 0.0
    %2943 = vmatprep.subr.mxu0 0.0
    %2944 = vmatpush2.msra.mxu0 0.0
    %2945 = vmatprep.subr.mxu0 0.0
    %2946 = vmatpush2.msra.mxu0 0.0
    %2947 = vmatprep.subr.mxu0 0.0
    %2948 = vmatpush2.msra.mxu0 0.0
    %2949 = vmatprep.subr.mxu0 0.0
    %2950 = vmatpush2.msra.mxu0 0.0
    %2951 = vmatprep.mubr.f32.mxu0 0.0
    %2952 = vmatmul.mubr.f32.gmra.mxu0 %v2882
    %v2953 = vpop.f32.mrf.mxu0
    %v2954 = vadd.f32 0.0, %v2953
    %v2955 = vpop.f32.mrf.mxu0
    %v2956 = vadd.f32 0.0, %v2955
    %2957 = vdwg.mxu0
    %2958 = vmatprep.subr.mxu0 %v2360
    %2959 = vmatpush1.msra.mxu0 %v2359
    %2960 = vmatprep.subr.mxu0 %v2356
    %2961 = vmatpush1.msra.mxu0 %v2355
    %2962 = vmatprep.subr.mxu0 %v2352
    %2963 = vmatpush1.msra.mxu0 %v2351
    %2964 = vmatprep.subr.mxu0 %v2348
    %2965 = vmatpush1.msra.mxu0 %v2347
    %2966 = vmatprep.subr.mxu0 %v2344
    %2967 = vmatpush1.msra.mxu0 %v2343
    %2968 = vmatprep.subr.mxu0 %v2340
    %2969 = vmatpush1.msra.mxu0 %v2339
    %2970 = vmatprep.subr.mxu0 %v2336
    %2971 = vmatpush1.msra.mxu0 %v2335
    %2972 = vmatprep.subr.mxu0 %v2332
    %2973 = vmatpush1.msra.mxu0 %v2331
    %2974 = vmatprep.subr.mxu0 %v2328
    %2975 = vmatpush1.msra.mxu0 %v2327
    %2976 = vmatprep.subr.mxu0 %v2324
    %2977 = vmatpush1.msra.mxu0 %v2323
    %2978 = vmatprep.subr.mxu0 %v2320
    %2979 = vmatpush1.msra.mxu0 %v2319
    %2980 = vmatprep.subr.mxu0 %v2316
    %2981 = vmatpush1.msra.mxu0 %v2315
    %2982 = vmatprep.subr.mxu0 %v2312
    %2983 = vmatpush1.msra.mxu0 %v2311
    %2984 = vmatprep.subr.mxu0 %v2308
    %2985 = vmatpush1.msra.mxu0 %v2307
    %2986 = vmatprep.subr.mxu0 %v2304
    %2987 = vmatpush1.msra.mxu0 %v2303
    %2988 = vmatprep.subr.mxu0 %v2300
    %2989 = vmatpush1.msra.mxu0 %v2299
    %2990 = vmatprep.subr.mxu0 0.0
    %2991 = vmatpush2.msra.mxu0 0.0
    %2992 = vmatprep.subr.mxu0 0.0
    %2993 = vmatpush2.msra.mxu0 0.0
    %2994 = vmatprep.subr.mxu0 0.0
    %2995 = vmatpush2.msra.mxu0 0.0
    %2996 = vmatprep.subr.mxu0 0.0
    %2997 = vmatpush2.msra.mxu0 0.0
    %2998 = vmatprep.subr.mxu0 0.0
    %2999 = vmatpush2.msra.mxu0 0.0
    %3000 = vmatprep.subr.mxu0 0.0
    %3001 = vmatpush2.msra.mxu0 0.0
    %3002 = vmatprep.subr.mxu0 0.0
    %3003 = vmatpush2.msra.mxu0 0.0
    %3004 = vmatprep.subr.mxu0 0.0
    %3005 = vmatpush2.msra.mxu0 0.0
    %3006 = vmatprep.subr.mxu0 0.0
    %3007 = vmatpush2.msra.mxu0 0.0
    %3008 = vmatprep.subr.mxu0 0.0
    %3009 = vmatpush2.msra.mxu0 0.0
    %3010 = vmatprep.subr.mxu0 0.0
    %3011 = vmatpush2.msra.mxu0 0.0
    %3012 = vmatprep.subr.mxu0 0.0
    %3013 = vmatpush2.msra.mxu0 0.0
    %3014 = vmatprep.subr.mxu0 0.0
    %3015 = vmatpush2.msra.mxu0 0.0
    %3016 = vmatprep.subr.mxu0 0.0
    %3017 = vmatpush2.msra.mxu0 0.0
    %3018 = vmatprep.subr.mxu0 0.0
    %3019 = vmatpush2.msra.mxu0 0.0
    %3020 = vmatprep.subr.mxu0 0.0
    %3021 = vmatpush2.msra.mxu0 0.0
    %3022 = vmatprep.mubr.f32.mxu0 0.0
    %3023 = vmatmul.mubr.f32.gmra.mxu0 %v2882
    %v3024 = vpop.f32.mrf.mxu0
    %v3025 = vadd.f32 0.0, %v3024
    %v3026 = vpop.f32.mrf.mxu0
    %v3027 = vadd.f32 0.0, %v3026
    %3028 = vdwg.mxu0
    %v3029 = vadd.f32 %v2883, %v2954
    %v3030 = vadd.f32 %v2884, %v2956
    %v3031 = vadd.f32 %v2885, %v3025
    %v3032 = vadd.f32 %v2886, %v3027
    %v3033 = vxor.u32 %v3029, 2147483648
    %v3034 = vmul.f32 %v3033, 1.442695
    %v3035 = vpow.pop %v3034
    %v3036 = vadd.f32 %v3035, 1.0
    %v3037 = vrcp.pop %v3036
    %v3038 = vmul.f32 1.0, %v3037
    %v3039 = vxor.u32 %v3030, 2147483648
    %v3040 = vmul.f32 %v3039, 1.442695
    %v3041 = vpow.pop %v3040
    %v3042 = vadd.f32 %v3041, 1.0
    %v3043 = vrcp.pop %v3042
    %v3044 = vmul.f32 1.0, %v3043
    %v3045 = vtanh.pop %v3031
    %v3046 = vxor.u32 %v3032, 2147483648
    %v3047 = vmul.f32 %v3046, 1.442695
    %v3048 = vpow.pop %v3047
    %v3049 = vadd.f32 %v3048, 1.0
    %v3050 = vrcp.pop %v3049
    %v3051 = vmul.f32 1.0, %v3050
    %v3052 = vmul.f32 %v3044, %v2880
    %v3053 = vmul.f32 %v3038, %v3045
    %v3054 = vadd.f32 %v3052, %v3053
    %v3055 = vtanh.pop %v3054
    %v3056 = vmul.f32 %v3051, %v3055
    %v3057 = vld [vmem:[%s1237] sm:$0xff]
    %v3058 = vld [vmem:[%s1237 + $0x8] sm:$0xff]
    %v3059 = vld [vmem:[%s1237 + $0x10] sm:$0xff]
    %v3060 = vld [vmem:[%s1237 + $0x18] sm:$0xff]
    %3061 = vmatprep.subr.mxu0 %v2358
    %3062 = vmatpush1.msra.mxu0 %v2357
    %3063 = vmatprep.subr.mxu0 %v2354
    %3064 = vmatpush1.msra.mxu0 %v2353
    %3065 = vmatprep.subr.mxu0 %v2350
    %3066 = vmatpush1.msra.mxu0 %v2349
    %3067 = vmatprep.subr.mxu0 %v2346
    %3068 = vmatpush1.msra.mxu0 %v2345
    %3069 = vmatprep.subr.mxu0 %v2342
    %3070 = vmatpush1.msra.mxu0 %v2341
    %3071 = vmatprep.subr.mxu0 %v2338
    %3072 = vmatpush1.msra.mxu0 %v2337
    %3073 = vmatprep.subr.mxu0 %v2334
    %3074 = vmatpush1.msra.mxu0 %v2333
    %3075 = vmatprep.subr.mxu0 %v2330
    %3076 = vmatpush1.msra.mxu0 %v2329
    %3077 = vmatprep.subr.mxu0 %v2326
    %3078 = vmatpush1.msra.mxu0 %v2325
    %3079 = vmatprep.subr.mxu0 %v2322
    %3080 = vmatpush1.msra.mxu0 %v2321
    %3081 = vmatprep.subr.mxu0 %v2318
    %3082 = vmatpush1.msra.mxu0 %v2317
    %3083 = vmatprep.subr.mxu0 %v2314
    %3084 = vmatpush1.msra.mxu0 %v2313
    %3085 = vmatprep.subr.mxu0 %v2310
    %3086 = vmatpush1.msra.mxu0 %v2309
    %3087 = vmatprep.subr.mxu0 %v2306
    %3088 = vmatpush1.msra.mxu0 %v2305
    %3089 = vmatprep.subr.mxu0 %v2302
    %3090 = vmatpush1.msra.mxu0 %v2301
    %3091 = vmatprep.subr.mxu0 %v2298
    %3092 = vmatpush1.msra.mxu0 %v2297
    %3093 = vmatprep.subr.mxu0 0.0
    %3094 = vmatpush2.msra.mxu0 0.0
    %3095 = vmatprep.subr.mxu0 0.0
    %3096 = vmatpush2.msra.mxu0 0.0
    %3097 = vmatprep.subr.mxu0 0.0
    %3098 = vmatpush2.msra.mxu0 0.0
    %3099 = vmatprep.subr.mxu0 0.0
    %3100 = vmatpush2.msra.mxu0 0.0
    %3101 = vmatprep.subr.mxu0 0.0
    %3102 = vmatpush2.msra.mxu0 0.0
    %3103 = vmatprep.subr.mxu0 0.0
    %3104 = vmatpush2.msra.mxu0 0.0
    %3105 = vmatprep.subr.mxu0 0.0
    %3106 = vmatpush2.msra.mxu0 0.0
    %3107 = vmatprep.subr.mxu0 0.0
    %3108 = vmatpush2.msra.mxu0 0.0
    %3109 = vmatprep.subr.mxu0 0.0
    %3110 = vmatpush2.msra.mxu0 0.0
    %3111 = vmatprep.subr.mxu0 0.0
    %3112 = vmatpush2.msra.mxu0 0.0
    %3113 = vmatprep.subr.mxu0 0.0
    %3114 = vmatpush2.msra.mxu0 0.0
    %3115 = vmatprep.subr.mxu0 0.0
    %3116 = vmatpush2.msra.mxu0 0.0
    %3117 = vmatprep.subr.mxu0 0.0
    %3118 = vmatpush2.msra.mxu0 0.0
    %3119 = vmatprep.subr.mxu0 0.0
    %3120 = vmatpush2.msra.mxu0 0.0
    %3121 = vmatprep.subr.mxu0 0.0
    %3122 = vmatpush2.msra.mxu0 0.0
    %3123 = vmatprep.subr.mxu0 0.0
    %3124 = vmatpush2.msra.mxu0 0.0
    %3125 = vmatprep.mubr.f32.mxu0 0.0
    %3126 = vmatmul.mubr.f32.gmra.mxu0 %v3056
    %v3127 = vpop.f32.mrf.mxu0
    %v3128 = vadd.f32 0.0, %v3127
    %v3129 = vpop.f32.mrf.mxu0
    %v3130 = vadd.f32 0.0, %v3129
    %3131 = vdwg.mxu0
    %3132 = vmatprep.subr.mxu0 %v2360
    %3133 = vmatpush1.msra.mxu0 %v2359
    %3134 = vmatprep.subr.mxu0 %v2356
    %3135 = vmatpush1.msra.mxu0 %v2355
    %3136 = vmatprep.subr.mxu0 %v2352
    %3137 = vmatpush1.msra.mxu0 %v2351
    %3138 = vmatprep.subr.mxu0 %v2348
    %3139 = vmatpush1.msra.mxu0 %v2347
    %3140 = vmatprep.subr.mxu0 %v2344
    %3141 = vmatpush1.msra.mxu0 %v2343
    %3142 = vmatprep.subr.mxu0 %v2340
    %3143 = vmatpush1.msra.mxu0 %v2339
    %3144 = vmatprep.subr.mxu0 %v2336
    %3145 = vmatpush1.msra.mxu0 %v2335
    %3146 = vmatprep.subr.mxu0 %v2332
    %3147 = vmatpush1.msra.mxu0 %v2331
    %3148 = vmatprep.subr.mxu0 %v2328
    %3149 = vmatpush1.msra.mxu0 %v2327
    %3150 = vmatprep.subr.mxu0 %v2324
    %3151 = vmatpush1.msra.mxu0 %v2323
    %3152 = vmatprep.subr.mxu0 %v2320
    %3153 = vmatpush1.msra.mxu0 %v2319
    %3154 = vmatprep.subr.mxu0 %v2316
    %3155 = vmatpush1.msra.mxu0 %v2315
    %3156 = vmatprep.subr.mxu0 %v2312
    %3157 = vmatpush1.msra.mxu0 %v2311
    %3158 = vmatprep.subr.mxu0 %v2308
    %3159 = vmatpush1.msra.mxu0 %v2307
    %3160 = vmatprep.subr.mxu0 %v2304
    %3161 = vmatpush1.msra.mxu0 %v2303
    %3162 = vmatprep.subr.mxu0 %v2300
    %3163 = vmatpush1.msra.mxu0 %v2299
    %3164 = vmatprep.subr.mxu0 0.0
    %3165 = vmatpush2.msra.mxu0 0.0
    %3166 = vmatprep.subr.mxu0 0.0
    %3167 = vmatpush2.msra.mxu0 0.0
    %3168 = vmatprep.subr.mxu0 0.0
    %3169 = vmatpush2.msra.mxu0 0.0
    %3170 = vmatprep.subr.mxu0 0.0
    %3171 = vmatpush2.msra.mxu0 0.0
    %3172 = vmatprep.subr.mxu0 0.0
    %3173 = vmatpush2.msra.mxu0 0.0
    %3174 = vmatprep.subr.mxu0 0.0
    %3175 = vmatpush2.msra.mxu0 0.0
    %3176 = vmatprep.subr.mxu0 0.0
    %3177 = vmatpush2.msra.mxu0 0.0
    %3178 = vmatprep.subr.mxu0 0.0
    %3179 = vmatpush2.msra.mxu0 0.0
    %3180 = vmatprep.subr.mxu0 0.0
    %3181 = vmatpush2.msra.mxu0 0.0
    %3182 = vmatprep.subr.mxu0 0.0
    %3183 = vmatpush2.msra.mxu0 0.0
    %3184 = vmatprep.subr.mxu0 0.0
    %3185 = vmatpush2.msra.mxu0 0.0
    %3186 = vmatprep.subr.mxu0 0.0
    %3187 = vmatpush2.msra.mxu0 0.0
    %3188 = vmatprep.subr.mxu0 0.0
    %3189 = vmatpush2.msra.mxu0 0.0
    %3190 = vmatprep.subr.mxu0 0.0
    %3191 = vmatpush2.msra.mxu0 0.0
    %3192 = vmatprep.subr.mxu0 0.0
    %3193 = vmatpush2.msra.mxu0 0.0
    %3194 = vmatprep.subr.mxu0 0.0
    %3195 = vmatpush2.msra.mxu0 0.0
    %3196 = vmatprep.mubr.f32.mxu0 0.0
    %3197 = vmatmul.mubr.f32.gmra.mxu0 %v3056
    %v3198 = vpop.f32.mrf.mxu0
    %v3199 = vadd.f32 0.0, %v3198
    %v3200 = vpop.f32.mrf.mxu0
    %v3201 = vadd.f32 0.0, %v3200
    %3202 = vdwg.mxu0
    %v3203 = vadd.f32 %v3057, %v3128
    %v3204 = vadd.f32 %v3058, %v3130
    %v3205 = vadd.f32 %v3059, %v3199
    %v3206 = vadd.f32 %v3060, %v3201
    %v3207 = vxor.u32 %v3203, 2147483648
    %v3208 = vmul.f32 %v3207, 1.442695
    %v3209 = vpow.pop %v3208
    %v3210 = vadd.f32 %v3209, 1.0
    %v3211 = vrcp.pop %v3210
    %v3212 = vmul.f32 1.0, %v3211
    %v3213 = vxor.u32 %v3204, 2147483648
    %v3214 = vmul.f32 %v3213, 1.442695
    %v3215 = vpow.pop %v3214
    %v3216 = vadd.f32 %v3215, 1.0
    %v3217 = vrcp.pop %v3216
    %v3218 = vmul.f32 1.0, %v3217
    %v3219 = vtanh.pop %v3205
    %v3220 = vxor.u32 %v3206, 2147483648
    %v3221 = vmul.f32 %v3220, 1.442695
    %v3222 = vpow.pop %v3221
    %v3223 = vadd.f32 %v3222, 1.0
    %v3224 = vrcp.pop %v3223
    %v3225 = vmul.f32 1.0, %v3224
    %v3226 = vmul.f32 %v3218, %v3054
    %v3227 = vmul.f32 %v3212, %v3219
    %v3228 = vadd.f32 %v3226, %v3227
    %v3229 = vtanh.pop %v3228
    %v3230 = vmul.f32 %v3225, %v3229
    %v3231 = vld [vmem:[%s1414] sm:$0xff]
    %v3232 = vld [vmem:[%s1414 + $0x8] sm:$0xff]
    %v3233 = vld [vmem:[%s1414 + $0x10] sm:$0xff]
    %v3234 = vld [vmem:[%s1414 + $0x18] sm:$0xff]
    %3235 = vmatprep.subr.mxu0 %v2358
    %3236 = vmatpush1.msra.mxu0 %v2357
    %3237 = vmatprep.subr.mxu0 %v2354
    %3238 = vmatpush1.msra.mxu0 %v2353
    %3239 = vmatprep.subr.mxu0 %v2350
    %3240 = vmatpush1.msra.mxu0 %v2349
    %3241 = vmatprep.subr.mxu0 %v2346
    %3242 = vmatpush1.msra.mxu0 %v2345
    %3243 = vmatprep.subr.mxu0 %v2342
    %3244 = vmatpush1.msra.mxu0 %v2341
    %3245 = vmatprep.subr.mxu0 %v2338
    %3246 = vmatpush1.msra.mxu0 %v2337
    %3247 = vmatprep.subr.mxu0 %v2334
    %3248 = vmatpush1.msra.mxu0 %v2333
    %3249 = vmatprep.subr.mxu0 %v2330
    %3250 = vmatpush1.msra.mxu0 %v2329
    %3251 = vmatprep.subr.mxu0 %v2326
    %3252 = vmatpush1.msra.mxu0 %v2325
    %3253 = vmatprep.subr.mxu0 %v2322
    %3254 = vmatpush1.msra.mxu0 %v2321
    %3255 = vmatprep.subr.mxu0 %v2318
    %3256 = vmatpush1.msra.mxu0 %v2317
    %3257 = vmatprep.subr.mxu0 %v2314
    %3258 = vmatpush1.msra.mxu0 %v2313
    %3259 = vmatprep.subr.mxu0 %v2310
    %3260 = vmatpush1.msra.mxu0 %v2309
    %3261 = vmatprep.subr.mxu0 %v2306
    %3262 = vmatpush1.msra.mxu0 %v2305
    %3263 = vmatprep.subr.mxu0 %v2302
    %3264 = vmatpush1.msra.mxu0 %v2301
    %3265 = vmatprep.subr.mxu0 %v2298
    %3266 = vmatpush1.msra.mxu0 %v2297
    %3267 = vmatprep.subr.mxu0 0.0
    %3268 = vmatpush2.msra.mxu0 0.0
    %3269 = vmatprep.subr.mxu0 0.0
    %3270 = vmatpush2.msra.mxu0 0.0
    %3271 = vmatprep.subr.mxu0 0.0
    %3272 = vmatpush2.msra.mxu0 0.0
    %3273 = vmatprep.subr.mxu0 0.0
    %3274 = vmatpush2.msra.mxu0 0.0
    %3275 = vmatprep.subr.mxu0 0.0
    %3276 = vmatpush2.msra.mxu0 0.0
    %3277 = vmatprep.subr.mxu0 0.0
    %3278 = vmatpush2.msra.mxu0 0.0
    %3279 = vmatprep.subr.mxu0 0.0
    %3280 = vmatpush2.msra.mxu0 0.0
    %3281 = vmatprep.subr.mxu0 0.0
    %3282 = vmatpush2.msra.mxu0 0.0
    %3283 = vmatprep.subr.mxu0 0.0
    %3284 = vmatpush2.msra.mxu0 0.0
    %3285 = vmatprep.subr.mxu0 0.0
    %3286 = vmatpush2.msra.mxu0 0.0
    %3287 = vmatprep.subr.mxu0 0.0
    %3288 = vmatpush2.msra.mxu0 0.0
    %3289 = vmatprep.subr.mxu0 0.0
    %3290 = vmatpush2.msra.mxu0 0.0
    %3291 = vmatprep.subr.mxu0 0.0
    %3292 = vmatpush2.msra.mxu0 0.0
    %3293 = vmatprep.subr.mxu0 0.0
    %3294 = vmatpush2.msra.mxu0 0.0
    %3295 = vmatprep.subr.mxu0 0.0
    %3296 = vmatpush2.msra.mxu0 0.0
    %3297 = vmatprep.subr.mxu0 0.0
    %3298 = vmatpush2.msra.mxu0 0.0
    %3299 = vmatprep.mubr.f32.mxu0 0.0
    %3300 = vmatmul.mubr.f32.gmra.mxu0 %v3230
    %v3301 = vpop.f32.mrf.mxu0
    %v3302 = vadd.f32 0.0, %v3301
    %v3303 = vpop.f32.mrf.mxu0
    %v3304 = vadd.f32 0.0, %v3303
    %3305 = vdwg.mxu0
    %3306 = vmatprep.subr.mxu0 %v2360
    %3307 = vmatpush1.msra.mxu0 %v2359
    %3308 = vmatprep.subr.mxu0 %v2356
    %3309 = vmatpush1.msra.mxu0 %v2355
    %3310 = vmatprep.subr.mxu0 %v2352
    %3311 = vmatpush1.msra.mxu0 %v2351
    %3312 = vmatprep.subr.mxu0 %v2348
    %3313 = vmatpush1.msra.mxu0 %v2347
    %3314 = vmatprep.subr.mxu0 %v2344
    %3315 = vmatpush1.msra.mxu0 %v2343
    %3316 = vmatprep.subr.mxu0 %v2340
    %3317 = vmatpush1.msra.mxu0 %v2339
    %3318 = vmatprep.subr.mxu0 %v2336
    %3319 = vmatpush1.msra.mxu0 %v2335
    %3320 = vmatprep.subr.mxu0 %v2332
    %3321 = vmatpush1.msra.mxu0 %v2331
    %3322 = vmatprep.subr.mxu0 %v2328
    %3323 = vmatpush1.msra.mxu0 %v2327
    %3324 = vmatprep.subr.mxu0 %v2324
    %3325 = vmatpush1.msra.mxu0 %v2323
    %3326 = vmatprep.subr.mxu0 %v2320
    %3327 = vmatpush1.msra.mxu0 %v2319
    %3328 = vmatprep.subr.mxu0 %v2316
    %3329 = vmatpush1.msra.mxu0 %v2315
    %3330 = vmatprep.subr.mxu0 %v2312
    %3331 = vmatpush1.msra.mxu0 %v2311
    %3332 = vmatprep.subr.mxu0 %v2308
    %3333 = vmatpush1.msra.mxu0 %v2307
    %3334 = vmatprep.subr.mxu0 %v2304
    %3335 = vmatpush1.msra.mxu0 %v2303
    %3336 = vmatprep.subr.mxu0 %v2300
    %3337 = vmatpush1.msra.mxu0 %v2299
    %3338 = vmatprep.subr.mxu0 0.0
    %3339 = vmatpush2.msra.mxu0 0.0
    %3340 = vmatprep.subr.mxu0 0.0
    %3341 = vmatpush2.msra.mxu0 0.0
    %3342 = vmatprep.subr.mxu0 0.0
    %3343 = vmatpush2.msra.mxu0 0.0
    %3344 = vmatprep.subr.mxu0 0.0
    %3345 = vmatpush2.msra.mxu0 0.0
    %3346 = vmatprep.subr.mxu0 0.0
    %3347 = vmatpush2.msra.mxu0 0.0
    %3348 = vmatprep.subr.mxu0 0.0
    %3349 = vmatpush2.msra.mxu0 0.0
    %3350 = vmatprep.subr.mxu0 0.0
    %3351 = vmatpush2.msra.mxu0 0.0
    %3352 = vmatprep.subr.mxu0 0.0
    %3353 = vmatpush2.msra.mxu0 0.0
    %3354 = vmatprep.subr.mxu0 0.0
    %3355 = vmatpush2.msra.mxu0 0.0
    %3356 = vmatprep.subr.mxu0 0.0
    %3357 = vmatpush2.msra.mxu0 0.0
    %3358 = vmatprep.subr.mxu0 0.0
    %3359 = vmatpush2.msra.mxu0 0.0
    %3360 = vmatprep.subr.mxu0 0.0
    %3361 = vmatpush2.msra.mxu0 0.0
    %3362 = vmatprep.subr.mxu0 0.0
    %3363 = vmatpush2.msra.mxu0 0.0
    %3364 = vmatprep.subr.mxu0 0.0
    %3365 = vmatpush2.msra.mxu0 0.0
    %3366 = vmatprep.subr.mxu0 0.0
    %3367 = vmatpush2.msra.mxu0 0.0
    %3368 = vmatprep.subr.mxu0 0.0
    %3369 = vmatpush2.msra.mxu0 0.0
    %3370 = vmatprep.mubr.f32.mxu0 0.0
    %3371 = vmatmul.mubr.f32.gmra.mxu0 %v3230
    %v3372 = vpop.f32.mrf.mxu0
    %v3373 = vadd.f32 0.0, %v3372
    %v3374 = vpop.f32.mrf.mxu0
    %v3375 = vadd.f32 0.0, %v3374
    %3376 = vdwg.mxu0
    %v3377 = vadd.f32 %v3231, %v3302
    %v3378 = vadd.f32 %v3232, %v3304
    %v3379 = vadd.f32 %v3233, %v3373
    %v3380 = vadd.f32 %v3234, %v3375
    %v3381 = vxor.u32 %v3377, 2147483648
    %v3382 = vmul.f32 %v3381, 1.442695
    %v3383 = vpow.pop %v3382
    %v3384 = vadd.f32 %v3383, 1.0
    %v3385 = vrcp.pop %v3384
    %v3386 = vmul.f32 1.0, %v3385
    %v3387 = vxor.u32 %v3378, 2147483648
    %v3388 = vmul.f32 %v3387, 1.442695
    %v3389 = vpow.pop %v3388
    %v3390 = vadd.f32 %v3389, 1.0
    %v3391 = vrcp.pop %v3390
    %v3392 = vmul.f32 1.0, %v3391
    %v3393 = vtanh.pop %v3379
    %v3394 = vxor.u32 %v3380, 2147483648
    %v3395 = vmul.f32 %v3394, 1.442695
    %v3396 = vpow.pop %v3395
    %v3397 = vadd.f32 %v3396, 1.0
    %v3398 = vrcp.pop %v3397
    %v3399 = vmul.f32 1.0, %v3398
    %v3400 = vmul.f32 %v3392, %v3228
    %v3401 = vmul.f32 %v3386, %v3393
    %v3402 = vadd.f32 %v3400, %v3401
    %v3403 = vtanh.pop %v3402
    %v3404 = vmul.f32 %v3399, %v3403
    %v3405 = vld [vmem:[%s1591] sm:$0xff]
    %v3406 = vld [vmem:[%s1591 + $0x8] sm:$0xff]
    %v3407 = vld [vmem:[%s1591 + $0x10] sm:$0xff]
    %v3408 = vld [vmem:[%s1591 + $0x18] sm:$0xff]
    %3409 = vmatprep.subr.mxu0 %v2358
    %3410 = vmatpush1.msra.mxu0 %v2357
    %3411 = vmatprep.subr.mxu0 %v2354
    %3412 = vmatpush1.msra.mxu0 %v2353
    %3413 = vmatprep.subr.mxu0 %v2350
    %3414 = vmatpush1.msra.mxu0 %v2349
    %3415 = vmatprep.subr.mxu0 %v2346
    %3416 = vmatpush1.msra.mxu0 %v2345
    %3417 = vmatprep.subr.mxu0 %v2342
    %3418 = vmatpush1.msra.mxu0 %v2341
    %3419 = vmatprep.subr.mxu0 %v2338
    %3420 = vmatpush1.msra.mxu0 %v2337
    %3421 = vmatprep.subr.mxu0 %v2334
    %3422 = vmatpush1.msra.mxu0 %v2333
    %3423 = vmatprep.subr.mxu0 %v2330
    %3424 = vmatpush1.msra.mxu0 %v2329
    %3425 = vmatprep.subr.mxu0 %v2326
    %3426 = vmatpush1.msra.mxu0 %v2325
    %3427 = vmatprep.subr.mxu0 %v2322
    %3428 = vmatpush1.msra.mxu0 %v2321
    %3429 = vmatprep.subr.mxu0 %v2318
    %3430 = vmatpush1.msra.mxu0 %v2317
    %3431 = vmatprep.subr.mxu0 %v2314
    %3432 = vmatpush1.msra.mxu0 %v2313
    %3433 = vmatprep.subr.mxu0 %v2310
    %3434 = vmatpush1.msra.mxu0 %v2309
    %3435 = vmatprep.subr.mxu0 %v2306
    %3436 = vmatpush1.msra.mxu0 %v2305
    %3437 = vmatprep.subr.mxu0 %v2302
    %3438 = vmatpush1.msra.mxu0 %v2301
    %3439 = vmatprep.subr.mxu0 %v2298
    %3440 = vmatpush1.msra.mxu0 %v2297
    %3441 = vmatprep.subr.mxu0 0.0
    %3442 = vmatpush2.msra.mxu0 0.0
    %3443 = vmatprep.subr.mxu0 0.0
    %3444 = vmatpush2.msra.mxu0 0.0
    %3445 = vmatprep.subr.mxu0 0.0
    %3446 = vmatpush2.msra.mxu0 0.0
    %3447 = vmatprep.subr.mxu0 0.0
    %3448 = vmatpush2.msra.mxu0 0.0
    %3449 = vmatprep.subr.mxu0 0.0
    %3450 = vmatpush2.msra.mxu0 0.0
    %3451 = vmatprep.subr.mxu0 0.0
    %3452 = vmatpush2.msra.mxu0 0.0
    %3453 = vmatprep.subr.mxu0 0.0
    %3454 = vmatpush2.msra.mxu0 0.0
    %3455 = vmatprep.subr.mxu0 0.0
    %3456 = vmatpush2.msra.mxu0 0.0
    %3457 = vmatprep.subr.mxu0 0.0
    %3458 = vmatpush2.msra.mxu0 0.0
    %3459 = vmatprep.subr.mxu0 0.0
    %3460 = vmatpush2.msra.mxu0 0.0
    %3461 = vmatprep.subr.mxu0 0.0
    %3462 = vmatpush2.msra.mxu0 0.0
    %3463 = vmatprep.subr.mxu0 0.0
    %3464 = vmatpush2.msra.mxu0 0.0
    %3465 = vmatprep.subr.mxu0 0.0
    %3466 = vmatpush2.msra.mxu0 0.0
    %3467 = vmatprep.subr.mxu0 0.0
    %3468 = vmatpush2.msra.mxu0 0.0
    %3469 = vmatprep.subr.mxu0 0.0
    %3470 = vmatpush2.msra.mxu0 0.0
    %3471 = vmatprep.subr.mxu0 0.0
    %3472 = vmatpush2.msra.mxu0 0.0
    %3473 = vmatprep.mubr.f32.mxu0 0.0
    %3474 = vmatmul.mubr.f32.gmra.mxu0 %v3404
    %v3475 = vpop.f32.mrf.mxu0
    %v3476 = vadd.f32 0.0, %v3475
    %v3477 = vpop.f32.mrf.mxu0
    %v3478 = vadd.f32 0.0, %v3477
    %3479 = vdwg.mxu0
    %3480 = vmatprep.subr.mxu0 %v2360
    %3481 = vmatpush1.msra.mxu0 %v2359
    %3482 = vmatprep.subr.mxu0 %v2356
    %3483 = vmatpush1.msra.mxu0 %v2355
    %3484 = vmatprep.subr.mxu0 %v2352
    %3485 = vmatpush1.msra.mxu0 %v2351
    %3486 = vmatprep.subr.mxu0 %v2348
    %3487 = vmatpush1.msra.mxu0 %v2347
    %3488 = vmatprep.subr.mxu0 %v2344
    %3489 = vmatpush1.msra.mxu0 %v2343
    %3490 = vmatprep.subr.mxu0 %v2340
    %3491 = vmatpush1.msra.mxu0 %v2339
    %3492 = vmatprep.subr.mxu0 %v2336
    %3493 = vmatpush1.msra.mxu0 %v2335
    %3494 = vmatprep.subr.mxu0 %v2332
    %3495 = vmatpush1.msra.mxu0 %v2331
    %3496 = vmatprep.subr.mxu0 %v2328
    %3497 = vmatpush1.msra.mxu0 %v2327
    %3498 = vmatprep.subr.mxu0 %v2324
    %3499 = vmatpush1.msra.mxu0 %v2323
    %3500 = vmatprep.subr.mxu0 %v2320
    %3501 = vmatpush1.msra.mxu0 %v2319
    %3502 = vmatprep.subr.mxu0 %v2316
    %3503 = vmatpush1.msra.mxu0 %v2315
    %3504 = vmatprep.subr.mxu0 %v2312
    %3505 = vmatpush1.msra.mxu0 %v2311
    %3506 = vmatprep.subr.mxu0 %v2308
    %3507 = vmatpush1.msra.mxu0 %v2307
    %3508 = vmatprep.subr.mxu0 %v2304
    %3509 = vmatpush1.msra.mxu0 %v2303
    %3510 = vmatprep.subr.mxu0 %v2300
    %3511 = vmatpush1.msra.mxu0 %v2299
    %3512 = vmatprep.subr.mxu0 0.0
    %3513 = vmatpush2.msra.mxu0 0.0
    %3514 = vmatprep.subr.mxu0 0.0
    %3515 = vmatpush2.msra.mxu0 0.0
    %3516 = vmatprep.subr.mxu0 0.0
    %3517 = vmatpush2.msra.mxu0 0.0
    %3518 = vmatprep.subr.mxu0 0.0
    %3519 = vmatpush2.msra.mxu0 0.0
    %3520 = vmatprep.subr.mxu0 0.0
    %3521 = vmatpush2.msra.mxu0 0.0
    %3522 = vmatprep.subr.mxu0 0.0
    %3523 = vmatpush2.msra.mxu0 0.0
    %3524 = vmatprep.subr.mxu0 0.0
    %3525 = vmatpush2.msra.mxu0 0.0
    %3526 = vmatprep.subr.mxu0 0.0
    %3527 = vmatpush2.msra.mxu0 0.0
    %3528 = vmatprep.subr.mxu0 0.0
    %3529 = vmatpush2.msra.mxu0 0.0
    %3530 = vmatprep.subr.mxu0 0.0
    %3531 = vmatpush2.msra.mxu0 0.0
    %3532 = vmatprep.subr.mxu0 0.0
    %3533 = vmatpush2.msra.mxu0 0.0
    %3534 = vmatprep.subr.mxu0 0.0
    %3535 = vmatpush2.msra.mxu0 0.0
    %3536 = vmatprep.subr.mxu0 0.0
    %3537 = vmatpush2.msra.mxu0 0.0
    %3538 = vmatprep.subr.mxu0 0.0
    %3539 = vmatpush2.msra.mxu0 0.0
    %3540 = vmatprep.subr.mxu0 0.0
    %3541 = vmatpush2.msra.mxu0 0.0
    %3542 = vmatprep.subr.mxu0 0.0
    %3543 = vmatpush2.msra.mxu0 0.0
    %3544 = vmatprep.mubr.f32.mxu0 0.0
    %3545 = vmatmul.mubr.f32.gmra.mxu0 %v3404
    %v3546 = vpop.f32.mrf.mxu0
    %v3547 = vadd.f32 0.0, %v3546
    %v3548 = vpop.f32.mrf.mxu0
    %v3549 = vadd.f32 0.0, %v3548
    %3550 = vdwg.mxu0
    %v3551 = vadd.f32 %v3405, %v3476
    %v3552 = vadd.f32 %v3406, %v3478
    %v3553 = vadd.f32 %v3407, %v3547
    %v3554 = vadd.f32 %v3408, %v3549
    %v3555 = vxor.u32 %v3551, 2147483648
    %v3556 = vmul.f32 %v3555, 1.442695
    %v3557 = vpow.pop %v3556
    %v3558 = vadd.f32 %v3557, 1.0
    %v3559 = vrcp.pop %v3558
    %v3560 = vmul.f32 1.0, %v3559
    %v3561 = vxor.u32 %v3552, 2147483648
    %v3562 = vmul.f32 %v3561, 1.442695
    %v3563 = vpow.pop %v3562
    %v3564 = vadd.f32 %v3563, 1.0
    %v3565 = vrcp.pop %v3564
    %v3566 = vmul.f32 1.0, %v3565
    %v3567 = vtanh.pop %v3553
    %v3568 = vxor.u32 %v3554, 2147483648
    %v3569 = vmul.f32 %v3568, 1.442695
    %v3570 = vpow.pop %v3569
    %v3571 = vadd.f32 %v3570, 1.0
    %v3572 = vrcp.pop %v3571
    %v3573 = vmul.f32 1.0, %v3572
    %v3574 = vmul.f32 %v3566, %v3402
    %v3575 = vmul.f32 %v3560, %v3567
    %v3576 = vadd.f32 %v3574, %v3575
    %v3577 = vtanh.pop %v3576
    %v3578 = vmul.f32 %v3573, %v3577
    %v3579 = vld [vmem:[%s1768] sm:$0xff]
    %v3580 = vld [vmem:[%s1768 + $0x8] sm:$0xff]
    %v3581 = vld [vmem:[%s1768 + $0x10] sm:$0xff]
    %v3582 = vld [vmem:[%s1768 + $0x18] sm:$0xff]
    %3583 = vmatprep.subr.mxu0 %v2358
    %3584 = vmatpush1.msra.mxu0 %v2357
    %3585 = vmatprep.subr.mxu0 %v2354
    %3586 = vmatpush1.msra.mxu0 %v2353
    %3587 = vmatprep.subr.mxu0 %v2350
    %3588 = vmatpush1.msra.mxu0 %v2349
    %3589 = vmatprep.subr.mxu0 %v2346
    %3590 = vmatpush1.msra.mxu0 %v2345
    %3591 = vmatprep.subr.mxu0 %v2342
    %3592 = vmatpush1.msra.mxu0 %v2341
    %3593 = vmatprep.subr.mxu0 %v2338
    %3594 = vmatpush1.msra.mxu0 %v2337
    %3595 = vmatprep.subr.mxu0 %v2334
    %3596 = vmatpush1.msra.mxu0 %v2333
    %3597 = vmatprep.subr.mxu0 %v2330
    %3598 = vmatpush1.msra.mxu0 %v2329
    %3599 = vmatprep.subr.mxu0 %v2326
    %3600 = vmatpush1.msra.mxu0 %v2325
    %3601 = vmatprep.subr.mxu0 %v2322
    %3602 = vmatpush1.msra.mxu0 %v2321
    %3603 = vmatprep.subr.mxu0 %v2318
    %3604 = vmatpush1.msra.mxu0 %v2317
    %3605 = vmatprep.subr.mxu0 %v2314
    %3606 = vmatpush1.msra.mxu0 %v2313
    %3607 = vmatprep.subr.mxu0 %v2310
    %3608 = vmatpush1.msra.mxu0 %v2309
    %3609 = vmatprep.subr.mxu0 %v2306
    %3610 = vmatpush1.msra.mxu0 %v2305
    %3611 = vmatprep.subr.mxu0 %v2302
    %3612 = vmatpush1.msra.mxu0 %v2301
    %3613 = vmatprep.subr.mxu0 %v2298
    %3614 = vmatpush1.msra.mxu0 %v2297
    %3615 = vmatprep.subr.mxu0 0.0
    %3616 = vmatpush2.msra.mxu0 0.0
    %3617 = vmatprep.subr.mxu0 0.0
    %3618 = vmatpush2.msra.mxu0 0.0
    %3619 = vmatprep.subr.mxu0 0.0
    %3620 = vmatpush2.msra.mxu0 0.0
    %3621 = vmatprep.subr.mxu0 0.0
    %3622 = vmatpush2.msra.mxu0 0.0
    %3623 = vmatprep.subr.mxu0 0.0
    %3624 = vmatpush2.msra.mxu0 0.0
    %3625 = vmatprep.subr.mxu0 0.0
    %3626 = vmatpush2.msra.mxu0 0.0
    %3627 = vmatprep.subr.mxu0 0.0
    %3628 = vmatpush2.msra.mxu0 0.0
    %3629 = vmatprep.subr.mxu0 0.0
    %3630 = vmatpush2.msra.mxu0 0.0
    %3631 = vmatprep.subr.mxu0 0.0
    %3632 = vmatpush2.msra.mxu0 0.0
    %3633 = vmatprep.subr.mxu0 0.0
    %3634 = vmatpush2.msra.mxu0 0.0
    %3635 = vmatprep.subr.mxu0 0.0
    %3636 = vmatpush2.msra.mxu0 0.0
    %3637 = vmatprep.subr.mxu0 0.0
    %3638 = vmatpush2.msra.mxu0 0.0
    %3639 = vmatprep.subr.mxu0 0.0
    %3640 = vmatpush2.msra.mxu0 0.0
    %3641 = vmatprep.subr.mxu0 0.0
    %3642 = vmatpush2.msra.mxu0 0.0
    %3643 = vmatprep.subr.mxu0 0.0
    %3644 = vmatpush2.msra.mxu0 0.0
    %3645 = vmatprep.subr.mxu0 0.0
    %3646 = vmatpush2.msra.mxu0 0.0
    %3647 = vmatprep.mubr.f32.mxu0 0.0
    %3648 = vmatmul.mubr.f32.gmra.mxu0 %v3578
    %v3649 = vpop.f32.mrf.mxu0
    %v3650 = vadd.f32 0.0, %v3649
    %v3651 = vpop.f32.mrf.mxu0
    %v3652 = vadd.f32 0.0, %v3651
    %3653 = vdwg.mxu0
    %3654 = vmatprep.subr.mxu0 %v2360
    %3655 = vmatpush1.msra.mxu0 %v2359
    %3656 = vmatprep.subr.mxu0 %v2356
    %3657 = vmatpush1.msra.mxu0 %v2355
    %3658 = vmatprep.subr.mxu0 %v2352
    %3659 = vmatpush1.msra.mxu0 %v2351
    %3660 = vmatprep.subr.mxu0 %v2348
    %3661 = vmatpush1.msra.mxu0 %v2347
    %3662 = vmatprep.subr.mxu0 %v2344
    %3663 = vmatpush1.msra.mxu0 %v2343
    %3664 = vmatprep.subr.mxu0 %v2340
    %3665 = vmatpush1.msra.mxu0 %v2339
    %3666 = vmatprep.subr.mxu0 %v2336
    %3667 = vmatpush1.msra.mxu0 %v2335
    %3668 = vmatprep.subr.mxu0 %v2332
    %3669 = vmatpush1.msra.mxu0 %v2331
    %3670 = vmatprep.subr.mxu0 %v2328
    %3671 = vmatpush1.msra.mxu0 %v2327
    %3672 = vmatprep.subr.mxu0 %v2324
    %3673 = vmatpush1.msra.mxu0 %v2323
    %3674 = vmatprep.subr.mxu0 %v2320
    %3675 = vmatpush1.msra.mxu0 %v2319
    %3676 = vmatprep.subr.mxu0 %v2316
    %3677 = vmatpush1.msra.mxu0 %v2315
    %3678 = vmatprep.subr.mxu0 %v2312
    %3679 = vmatpush1.msra.mxu0 %v2311
    %3680 = vmatprep.subr.mxu0 %v2308
    %3681 = vmatpush1.msra.mxu0 %v2307
    %3682 = vmatprep.subr.mxu0 %v2304
    %3683 = vmatpush1.msra.mxu0 %v2303
    %3684 = vmatprep.subr.mxu0 %v2300
    %3685 = vmatpush1.msra.mxu0 %v2299
    %3686 = vmatprep.subr.mxu0 0.0
    %3687 = vmatpush2.msra.mxu0 0.0
    %3688 = vmatprep.subr.mxu0 0.0
    %3689 = vmatpush2.msra.mxu0 0.0
    %3690 = vmatprep.subr.mxu0 0.0
    %3691 = vmatpush2.msra.mxu0 0.0
    %3692 = vmatprep.subr.mxu0 0.0
    %3693 = vmatpush2.msra.mxu0 0.0
    %3694 = vmatprep.subr.mxu0 0.0
    %3695 = vmatpush2.msra.mxu0 0.0
    %3696 = vmatprep.subr.mxu0 0.0
    %3697 = vmatpush2.msra.mxu0 0.0
    %3698 = vmatprep.subr.mxu0 0.0
    %3699 = vmatpush2.msra.mxu0 0.0
    %3700 = vmatprep.subr.mxu0 0.0
    %3701 = vmatpush2.msra.mxu0 0.0
    %3702 = vmatprep.subr.mxu0 0.0
    %3703 = vmatpush2.msra.mxu0 0.0
    %3704 = vmatprep.subr.mxu0 0.0
    %3705 = vmatpush2.msra.mxu0 0.0
    %3706 = vmatprep.subr.mxu0 0.0
    %3707 = vmatpush2.msra.mxu0 0.0
    %3708 = vmatprep.subr.mxu0 0.0
    %3709 = vmatpush2.msra.mxu0 0.0
    %3710 = vmatprep.subr.mxu0 0.0
    %3711 = vmatpush2.msra.mxu0 0.0
    %3712 = vmatprep.subr.mxu0 0.0
    %3713 = vmatpush2.msra.mxu0 0.0
    %3714 = vmatprep.subr.mxu0 0.0
    %3715 = vmatpush2.msra.mxu0 0.0
    %3716 = vmatprep.subr.mxu0 0.0
    %3717 = vmatpush2.msra.mxu0 0.0
    %3718 = vmatprep.mubr.f32.mxu0 0.0
    %3719 = vmatmul.mubr.f32.gmra.mxu0 %v3578
    %v3720 = vpop.f32.mrf.mxu0
    %v3721 = vadd.f32 0.0, %v3720
    %v3722 = vpop.f32.mrf.mxu0
    %v3723 = vadd.f32 0.0, %v3722
    %3724 = vdwg.mxu0
    %v3725 = vadd.f32 %v3579, %v3650
    %v3726 = vadd.f32 %v3580, %v3652
    %v3727 = vadd.f32 %v3581, %v3721
    %v3728 = vadd.f32 %v3582, %v3723
    %v3729 = vxor.u32 %v3725, 2147483648
    %v3730 = vmul.f32 %v3729, 1.442695
    %v3731 = vpow.pop %v3730
    %v3732 = vadd.f32 %v3731, 1.0
    %v3733 = vrcp.pop %v3732
    %v3734 = vmul.f32 1.0, %v3733
    %v3735 = vxor.u32 %v3726, 2147483648
    %v3736 = vmul.f32 %v3735, 1.442695
    %v3737 = vpow.pop %v3736
    %v3738 = vadd.f32 %v3737, 1.0
    %v3739 = vrcp.pop %v3738
    %v3740 = vmul.f32 1.0, %v3739
    %v3741 = vtanh.pop %v3727
    %v3742 = vxor.u32 %v3728, 2147483648
    %v3743 = vmul.f32 %v3742, 1.442695
    %v3744 = vpow.pop %v3743
    %v3745 = vadd.f32 %v3744, 1.0
    %v3746 = vrcp.pop %v3745
    %v3747 = vmul.f32 1.0, %v3746
    %v3748 = vmul.f32 %v3740, %v3576
    %v3749 = vmul.f32 %v3734, %v3741
    %v3750 = vadd.f32 %v3748, %v3749
    %v3751 = vtanh.pop %v3750
    %v3752 = vmul.f32 %v3747, %v3751
    %v3753 = vmax.f32 %v3752, 0.0
    %v3754 = vld [vmem:[#allocation13] sm:$0xff]
    %v3755 = vld [vmem:[#allocation13 + $0x8] sm:$0xff]
    %v3756 = vld [vmem:[#allocation13 + $0x10] sm:$0xff]
    %v3757 = vld [vmem:[#allocation13 + $0x18] sm:$0xff]
    %v3758 = vld [vmem:[#allocation13 + $0x20] sm:$0xff]
    %v3759 = vld [vmem:[#allocation13 + $0x28] sm:$0xff]
    %v3760 = vld [vmem:[#allocation13 + $0x30] sm:$0xff]
    %v3761 = vld [vmem:[#allocation13 + $0x38] sm:$0xff]
    %v3762 = vld [vmem:[#allocation13 + $0x40] sm:$0xff]
    %v3763 = vld [vmem:[#allocation13 + $0x48] sm:$0xff]
    %v3764 = vld [vmem:[#allocation13 + $0x50] sm:$0xff]
    %v3765 = vld [vmem:[#allocation13 + $0x58] sm:$0xff]
    %v3766 = vld [vmem:[#allocation13 + $0x60] sm:$0xff]
    %v3767 = vld [vmem:[#allocation13 + $0x68] sm:$0xff]
    %v3768 = vld [vmem:[#allocation13 + $0x70] sm:$0xff]
    %v3769 = vld [vmem:[#allocation13 + $0x78] sm:$0xff]
    %v3770 = vld [vmem:[%s8] sm:$0x1]
    %v3772 = vlaneseq
    %v3773 = vshrl.u32 %v3772, 7
    %v3774 = vsub.s32 0, %v3773
    %v3775 = vrot.slane %v3770, %v3774
    %3777 = vmatprep.subr.mxu0 0.0
    %3778 = vmatpush1.msra.mxu0 %v3769
    %3779 = vmatprep.subr.mxu0 0.0
    %3780 = vmatpush1.msra.mxu0 %v3768
    %3781 = vmatprep.subr.mxu0 0.0
    %3782 = vmatpush1.msra.mxu0 %v3767
    %3783 = vmatprep.subr.mxu0 0.0
    %3784 = vmatpush1.msra.mxu0 %v3766
    %3785 = vmatprep.subr.mxu0 0.0
    %3786 = vmatpush1.msra.mxu0 %v3765
    %3787 = vmatprep.subr.mxu0 0.0
    %3788 = vmatpush1.msra.mxu0 %v3764
    %3789 = vmatprep.subr.mxu0 0.0
    %3790 = vmatpush1.msra.mxu0 %v3763
    %3791 = vmatprep.subr.mxu0 0.0
    %3792 = vmatpush1.msra.mxu0 %v3762
    %3793 = vmatprep.subr.mxu0 0.0
    %3794 = vmatpush1.msra.mxu0 %v3761
    %3795 = vmatprep.subr.mxu0 0.0
    %3796 = vmatpush1.msra.mxu0 %v3760
    %3797 = vmatprep.subr.mxu0 0.0
    %3798 = vmatpush1.msra.mxu0 %v3759
    %3799 = vmatprep.subr.mxu0 0.0
    %3800 = vmatpush1.msra.mxu0 %v3758
    %3801 = vmatprep.subr.mxu0 0.0
    %3802 = vmatpush1.msra.mxu0 %v3757
    %3803 = vmatprep.subr.mxu0 0.0
    %3804 = vmatpush1.msra.mxu0 %v3756
    %3805 = vmatprep.subr.mxu0 0.0
    %3806 = vmatpush1.msra.mxu0 %v3755
    %3807 = vmatprep.subr.mxu0 0.0
    %3808 = vmatpush1.msra.mxu0 %v3754
    %3809 = vmatprep.subr.mxu0 0.0
    %3810 = vmatpush2.msra.mxu0 0.0
    %3811 = vmatprep.subr.mxu0 0.0
    %3812 = vmatpush2.msra.mxu0 0.0
    %3813 = vmatprep.subr.mxu0 0.0
    %3814 = vmatpush2.msra.mxu0 0.0
    %3815 = vmatprep.subr.mxu0 0.0
    %3816 = vmatpush2.msra.mxu0 0.0
    %3817 = vmatprep.subr.mxu0 0.0
    %3818 = vmatpush2.msra.mxu0 0.0
    %3819 = vmatprep.subr.mxu0 0.0
    %3820 = vmatpush2.msra.mxu0 0.0
    %3821 = vmatprep.subr.mxu0 0.0
    %3822 = vmatpush2.msra.mxu0 0.0
    %3823 = vmatprep.subr.mxu0 0.0
    %3824 = vmatpush2.msra.mxu0 0.0
    %3825 = vmatprep.subr.mxu0 0.0
    %3826 = vmatpush2.msra.mxu0 0.0
    %3827 = vmatprep.subr.mxu0 0.0
    %3828 = vmatpush2.msra.mxu0 0.0
    %3829 = vmatprep.subr.mxu0 0.0
    %3830 = vmatpush2.msra.mxu0 0.0
    %3831 = vmatprep.subr.mxu0 0.0
    %3832 = vmatpush2.msra.mxu0 0.0
    %3833 = vmatprep.subr.mxu0 0.0
    %3834 = vmatpush2.msra.mxu0 0.0
    %3835 = vmatprep.subr.mxu0 0.0
    %3836 = vmatpush2.msra.mxu0 0.0
    %3837 = vmatprep.subr.mxu0 0.0
    %3838 = vmatpush2.msra.mxu0 0.0
    %3839 = vmatprep.subr.mxu0 0.0
    %3840 = vmatpush2.msra.mxu0 0.0
    %3841 = vmatprep.mubr.f32.mxu0 0.0
    %3842 = vmatmul.mubr.f32.gmra.mxu0 %v3753
    %v3843 = vpop.f32.mrf.mxu0
    %v3844 = vadd.f32 %v3775, %v3843
    %v3845 = vpop.f32.mrf.mxu0
    %3846 = vdwg.mxu0
    %3847 = vst [vmem:[#allocation15] sm:$0xff] %v3844
    // Predicated region
    $region62: #{tpu_custom_call.1} parent=1 // pred_check
      _
    $region63: #{tpu_custom_call.1} parent=1 // pred_check_branch
      %3849 = sbr.rel (0) target = $region65
    $region64: #{tpu_custom_call.1} parent=1 // pred_region
      %s3851 = ssub.s32 128, 128
      %3852 = vsyncadd [#allocation6], %s3851
      %s3854 = sshll.u32 [#allocation15], 4
      %s3855 = int_to_ptr.vmem [resolvable:$true] %s3854
      %3857 = dma.vmem_to_hbm [thread:$0]  %s3855, 128, %s9, [#allocation6]
    $region65: #{tpu_custom_call.1} parent=1 // pred_fallthru
      _
    // Predicated region
    $region66: #{tpu_custom_call.1} parent=1 // pred_check
      _
    $region67: #{tpu_custom_call.1} parent=1 // pred_check_branch
      %3859 = sbr.rel (0) target = $region69
    $region68: #{tpu_custom_call.1} parent=1 // pred_region
      %3860 = dma.done [#allocation6], 128
    $region69: #{tpu_custom_call.1} parent=1 // pred_fallthru
      _
    %3861 = vsyncpa [#allocation5], 1
    %3862 = vsyncpa [#allocation8], 1
    %3863 = vsyncpa [#allocation11], 1
    %3864 = vsyncpa [#allocation14], 1
    %3865 = vsyncpa [#allocation6], 1

</llo_original>
